<compile_context>
chip_gen: v5e
topology: v5e:2x2
jax: 0.10.0
libtpu: 0.0.40
codegen_flags: <defaults>
</compile_context>

<pallas_src>
import jax
import jax.numpy as jnp
from jax.experimental import pallas as pl
from jax.experimental.pallas import tpu as pltpu

EPS = 1e-5            # PyTorch BatchNorm1d default eps
K_IN = 784            # 28*28, streamed unpadded (full-array-dim exception)
H1, H2 = 512, 256
N_OUT = 10
N_OUT_PAD = 128       # 10-class head padded to a full lane width


def _round_up(x, m):
    return (x + m - 1) // m * m


def _net_kernel(x_ref, w1_ref, b1_ref, w2_ref, b2_ref, w3_ref, b3_ref, o_ref):
    # x arrives as f32 straight from HBM (no padded copy); cast to bf16 here
    # so the MXU runs bf16 inputs with f32 accumulation.
    x = x_ref[...].astype(jnp.bfloat16)                               # (TB, 784)

    # fc1 (+ folded BN1) + relu            (dropout = identity in eval)
    h = jnp.dot(x, w1_ref[...], preferred_element_type=jnp.float32) + b1_ref[...]
    h = jnp.maximum(h, 0.0).astype(jnp.bfloat16)                      # (TB, 512)

    # fc2 (+ folded BN2) + relu            (dropout = identity in eval)
    h = jnp.dot(h, w2_ref[...], preferred_element_type=jnp.float32) + b2_ref[...]
    h = jnp.maximum(h, 0.0).astype(jnp.bfloat16)                      # (TB, 256)

    # fc3 + log_softmax(dim=1).  Pad logits carry a -1e30 bias so exp()==0.
    logits = jnp.dot(h, w3_ref[...], preferred_element_type=jnp.float32) + b3_ref[...]
    m = jnp.max(logits, axis=-1, keepdims=True)
    shifted = logits - m
    lse = jnp.log(jnp.sum(jnp.exp(shifted), axis=-1, keepdims=True))
    o_ref[...] = (shifted - lse).astype(o_ref.dtype)                  # (TB, 128)


def prepare_params(params):
    """One-time parameter prep (hoisted off the per-call latency path):
    fold eval-mode BatchNorm into fc1/fc2 (exact algebra), pad the 10-class
    head to 128 lanes, cast weights to bf16 (biases stay f32)."""
    (w1, b1, g1, be1, m1, v1,
     w2, b2, g2, be2, m2, v2,
     w3, b3) = params

    s1 = g1 * jax.lax.rsqrt(v1 + EPS)
    w1f = w1 * s1[None, :]
    b1f = (b1 - m1) * s1 + be1
    s2 = g2 * jax.lax.rsqrt(v2 + EPS)
    w2f = w2 * s2[None, :]
    b2f = (b2 - m2) * s2 + be2

    w3p = jnp.zeros((H2, N_OUT_PAD), jnp.float32).at[:, :N_OUT].set(w3)
    b3p = jnp.full((1, N_OUT_PAD), -1e30, jnp.float32).at[:, :N_OUT].set(b3)

    return (w1f.astype(jnp.bfloat16), b1f.reshape(1, H1).astype(jnp.float32),
            w2f.astype(jnp.bfloat16), b2f.reshape(1, H2).astype(jnp.float32),
            w3p.astype(jnp.bfloat16), b3p)


def net_forward(x, prepared, *, tile_b=1024):
    """x: (N, 1, 28, 28) or (N, 784) float32.
    prepared: output of prepare_params().  Returns (N, 10) log-probs (f32)."""
    w1b, b1r, w2b, b2r, w3b, b3p = prepared

    x2 = x.reshape(-1, K_IN).astype(jnp.float32)      # no padding, no bf16 copy
    B = x2.shape[0]

    # Batch tile: lane/sublane aligned (multiple of 128), big enough to hide
    # per-grid-step overhead, and small enough that the grid has >= 2 steps
    # whenever B allows it (keeps both v7x TensorCores busy on the "parallel"
    # axis; no-op for single-core v5e/v6e).
    tile_b = _round_up(max(int(tile_b), 128), 128)    # guard bad user values
    tb = max(128, min(tile_b, _round_up(-(-B // 2), 128)))
    grid = (pl.cdiv(B, tb),)                          # boundary block is masked

    # Approximate footprint at tb=1024: 2x3.1 MiB f32 x tiles + 2x0.5 MiB out
    # tiles + ~2.3 MiB resident weights + intermediates  ->  well under 32 MiB.
    vmem_limit = (32 << 20) if tb <= 1024 else (64 << 20)

    out = pl.pallas_call(
        _net_kernel,
        out_shape=jax.ShapeDtypeStruct((B, N_OUT_PAD), jnp.float32),
        grid=grid,
        in_specs=[
            pl.BlockSpec((tb, K_IN), lambda i: (i, 0)),        # x tile (streamed f32)
            pl.BlockSpec((K_IN, H1), lambda i: (0, 0)),        # resident weights
            pl.BlockSpec((1, H1), lambda i: (0, 0)),
            pl.BlockSpec((H1, H2), lambda i: (0, 0)),
            pl.BlockSpec((1, H2), lambda i: (0, 0)),
            pl.BlockSpec((H2, N_OUT_PAD), lambda i: (0, 0)),
            pl.BlockSpec((1, N_OUT_PAD), lambda i: (0, 0)),
        ],
        out_specs=pl.BlockSpec((tb, N_OUT_PAD), lambda i: (i, 0)),
        compiler_params=pltpu.CompilerParams(
            dimension_semantics=("parallel",),
            vmem_limit_bytes=vmem_limit,
        ),
    )(x2, w1b, b1r, w2b, b2r, w3b, b3p)

    return out[:B, :N_OUT]


def init_params(key):
    """Deterministic parameter init mirroring the PyTorch module shapes."""
    ks = jax.random.split(key, 6)

    def linear(kw, kb, fan_in, fan_out):
        bound = 1.0 / jnp.sqrt(fan_in)
        w = jax.random.uniform(kw, (fan_in, fan_out), jnp.float32, -bound, bound)
        b = jax.random.uniform(kb, (fan_out,), jnp.float32, -bound, bound)
        return w, b

    w1, b1 = linear(ks[0], ks[1], 784, 512)
    w2, b2 = linear(ks[2], ks[3], 512, 256)
    w3, b3 = linear(ks[4], ks[5], 256, 10)

    # BatchNorm1d defaults: weight=1, bias=0, running_mean=0, running_var=1
    g1, be1 = jnp.ones((512,), jnp.float32), jnp.zeros((512,), jnp.float32)
    m1, v1 = jnp.zeros((512,), jnp.float32), jnp.ones((512,), jnp.float32)
    g2, be2 = jnp.ones((256,), jnp.float32), jnp.zeros((256,), jnp.float32)
    m2, v2 = jnp.zeros((256,), jnp.float32), jnp.ones((256,), jnp.float32)

    return (w1, b1, g1, be1, m1, v1,
            w2, b2, g2, be2, m2, v2,
            w3, b3)


def _reference(x, params):
    """Pure-JAX f32 reference of the eval-mode forward pass."""
    (w1, b1, g1, be1, m1, v1,
     w2, b2, g2, be2, m2, v2,
     w3, b3) = params
    h = x.reshape(-1, 784) @ w1 + b1
    h = (h - m1) / jnp.sqrt(v1 + EPS) * g1 + be1
    h = jnp.maximum(h, 0.0)
    h = h @ w2 + b2
    h = (h - m2) / jnp.sqrt(v2 + EPS) * g2 + be2
    h = jnp.maximum(h, 0.0)
    logits = h @ w3 + b3
    return jax.nn.log_softmax(logits, axis=1)


if __name__ == "__main__":
    key = jax.random.PRNGKey(0)
    k_x1, k_x2, k_p = jax.random.split(key, 3)

    params = init_params(k_p)
    prepared = prepare_params(params)          # one-time weight prep

    # Small MNIST-like batch: (N, 1, 28, 28) -> single (partial) grid step.
    x = jax.random.normal(k_x1, (8, 1, 28, 28), jnp.float32)
    out = jax.block_until_ready(net_forward(x, prepared))
    ref = _reference(x.astype(jnp.float32), params)
    assert out.shape == (8, 10)
    assert bool(jnp.all(jnp.isfinite(out)))
    # bf16 inputs/weights with f32 accumulation -> modest tolerance
    assert jnp.allclose(out, ref, atol=2e-2, rtol=2e-2)

    # Non-multiple batch: exercises a 2-step grid with a masked boundary block.
    x2 = jax.random.normal(k_x2, (300, 1, 28, 28), jnp.float32)
    out2 = jax.block_until_ready(net_forward(x2, prepared))
    ref2 = _reference(x2.astype(jnp.float32), params)
    assert out2.shape == (300, 10)
    assert bool(jnp.all(jnp.isfinite(out2)))
    assert jnp.allclose(out2, ref2, atol=2e-2, rtol=2e-2)

    print("KERNEL_OK")
</pallas_src>

<mosaic_0001>
module attributes {stable_mosaic.version = 11 : i64} {
  func.func @_net_kernel(%arg0: i32, %arg1: memref<128x784xf32, #tpu.memory_space<vmem>>, %arg2: memref<784x512xbf16, #tpu.memory_space<vmem>>, %arg3: memref<1x512xf32, #tpu.memory_space<vmem>>, %arg4: memref<512x256xbf16, #tpu.memory_space<vmem>>, %arg5: memref<1x256xf32, #tpu.memory_space<vmem>>, %arg6: memref<256x128xbf16, #tpu.memory_space<vmem>>, %arg7: memref<1x128xf32, #tpu.memory_space<vmem>>, %arg8: memref<128x128xf32, #tpu.memory_space<vmem>>) attributes {dimension_semantics = [#tpu.dimension_semantics<parallel>], iteration_bounds = array<i64: 1>, scalar_prefetch = 0 : i64, scratch_operands = 0 : i64, tpu.core_type = #tpu.core_type<tc>, window_params = [{transform_indices = @transform_0, window_bounds = array<i64: 128, 784>}, {pipeline_mode = #tpu.pipeline_mode<synchronous>, transform_indices = @transform_1, window_bounds = array<i64: 784, 512>}, {pipeline_mode = #tpu.pipeline_mode<synchronous>, transform_indices = @transform_2, window_bounds = array<i64: 1, 512>}, {pipeline_mode = #tpu.pipeline_mode<synchronous>, transform_indices = @transform_3, window_bounds = array<i64: 512, 256>}, {pipeline_mode = #tpu.pipeline_mode<synchronous>, transform_indices = @transform_4, window_bounds = array<i64: 1, 256>}, {pipeline_mode = #tpu.pipeline_mode<synchronous>, transform_indices = @transform_5, window_bounds = array<i64: 256, 128>}, {pipeline_mode = #tpu.pipeline_mode<synchronous>, transform_indices = @transform_6, window_bounds = array<i64: 1, 128>}, {transform_indices = @transform_7, window_bounds = array<i64: 128, 128>}]} {
    %c0 = arith.constant 0 : index
    %c0_0 = arith.constant 0 : index
    %0 = vector.load %arg1[%c0, %c0_0] : memref<128x784xf32, #tpu.memory_space<vmem>>, vector<128x784xf32>
    %1 = arith.truncf %0 : vector<128x784xf32> to vector<128x784xbf16>
    %c0_1 = arith.constant 0 : index
    %c0_2 = arith.constant 0 : index
    %2 = vector.load %arg2[%c0_1, %c0_2] : memref<784x512xbf16, #tpu.memory_space<vmem>>, vector<784x512xbf16>
    %cst = arith.constant dense<0.000000e+00> : vector<128x512xf32>
    %3 = tpu.matmul %1, %2, %cst {dimension_numbers = #tpu.dot_dimension_numbers<[1], [0], [0], [1], [0, 0, 1, 1], [], []>} : vector<128x784xbf16>, vector<784x512xbf16>, vector<128x512xf32> -> vector<128x512xf32>
    %c0_3 = arith.constant 0 : index
    %c0_4 = arith.constant 0 : index
    %4 = vector.load %arg3[%c0_3, %c0_4] : memref<1x512xf32, #tpu.memory_space<vmem>>, vector<1x512xf32>
    %5 = vector.broadcast %4 : vector<1x512xf32> to vector<128x512xf32>
    %6 = arith.addf %3, %5 : vector<128x512xf32>
    %cst_5 = arith.constant 0.000000e+00 : f32
    %7 = vector.broadcast %cst_5 : f32 to vector<128x512xf32>
    %8 = arith.maximumf %6, %7 : vector<128x512xf32>
    %9 = arith.truncf %8 : vector<128x512xf32> to vector<128x512xbf16>
    %c0_6 = arith.constant 0 : index
    %c0_7 = arith.constant 0 : index
    %10 = vector.load %arg4[%c0_6, %c0_7] : memref<512x256xbf16, #tpu.memory_space<vmem>>, vector<512x256xbf16>
    %cst_8 = arith.constant dense<0.000000e+00> : vector<128x256xf32>
    %11 = tpu.matmul %9, %10, %cst_8 {dimension_numbers = #tpu.dot_dimension_numbers<[1], [0], [0], [1], [0, 0, 1, 1], [], []>} : vector<128x512xbf16>, vector<512x256xbf16>, vector<128x256xf32> -> vector<128x256xf32>
    %c0_9 = arith.constant 0 : index
    %c0_10 = arith.constant 0 : index
    %12 = vector.load %arg5[%c0_9, %c0_10] : memref<1x256xf32, #tpu.memory_space<vmem>>, vector<1x256xf32>
    %13 = vector.broadcast %12 : vector<1x256xf32> to vector<128x256xf32>
    %14 = arith.addf %11, %13 : vector<128x256xf32>
    %cst_11 = arith.constant 0.000000e+00 : f32
    %15 = vector.broadcast %cst_11 : f32 to vector<128x256xf32>
    %16 = arith.maximumf %14, %15 : vector<128x256xf32>
    %17 = arith.truncf %16 : vector<128x256xf32> to vector<128x256xbf16>
    %c0_12 = arith.constant 0 : index
    %c0_13 = arith.constant 0 : index
    %18 = vector.load %arg6[%c0_12, %c0_13] : memref<256x128xbf16, #tpu.memory_space<vmem>>, vector<256x128xbf16>
    %cst_14 = arith.constant dense<0.000000e+00> : vector<128x128xf32>
    %19 = tpu.matmul %17, %18, %cst_14 {dimension_numbers = #tpu.dot_dimension_numbers<[1], [0], [0], [1], [0, 0, 1, 1], [], []>} : vector<128x256xbf16>, vector<256x128xbf16>, vector<128x128xf32> -> vector<128x128xf32>
    %c0_15 = arith.constant 0 : index
    %c0_16 = arith.constant 0 : index
    %20 = vector.load %arg7[%c0_15, %c0_16] : memref<1x128xf32, #tpu.memory_space<vmem>>, vector<1x128xf32>
    %21 = vector.broadcast %20 : vector<1x128xf32> to vector<128x128xf32>
    %22 = arith.addf %19, %21 : vector<128x128xf32>
    %cst_17 = arith.constant dense<0xFF800000> : vector<128xf32>
    %23 = vector.multi_reduction <maximumf>, %22, %cst_17 [1] : vector<128x128xf32> to vector<128xf32>
    %24 = vector.shape_cast %23 : vector<128xf32> to vector<128x1xf32>
    %25 = vector.broadcast %24 : vector<128x1xf32> to vector<128x128xf32>
    %26 = arith.subf %22, %25 : vector<128x128xf32>
    %27 = math.exp %26 : vector<128x128xf32>
    %cst_18 = arith.constant dense<0.000000e+00> : vector<128xf32>
    %28 = vector.multi_reduction <add>, %27, %cst_18 [1] : vector<128x128xf32> to vector<128xf32>
    %29 = vector.shape_cast %28 : vector<128xf32> to vector<128x1xf32>
    %30 = math.log %29 : vector<128x1xf32>
    %31 = vector.broadcast %30 : vector<128x1xf32> to vector<128x128xf32>
    %32 = arith.subf %26, %31 : vector<128x128xf32>
    %c0_19 = arith.constant 0 : index
    %c0_20 = arith.constant 0 : index
    %33 = vector.load %arg8[%c0_19, %c0_20] : memref<128x128xf32, #tpu.memory_space<vmem>>, vector<128x128xf32>
    tpu.vector_store %arg8[%c0_19, %c0_20], %32 {strides = array<i32>} : memref<128x128xf32, #tpu.memory_space<vmem>>, vector<128x128xf32>,
    return
  }
  func.func @transform_0(%arg0: i32) -> (i32, i32) {
    %c0_i32 = arith.constant 0 : i32
    %c0_i32_0 = arith.constant 0 : i32
    return %arg0, %c0_i32 : i32, i32
  }
  func.func @transform_1(%arg0: i32) -> (i32, i32) {
    %c0_i32 = arith.constant 0 : i32
    %c0_i32_0 = arith.constant 0 : i32
    %c0_i32_1 = arith.constant 0 : i32
    return %c0_i32, %c0_i32_0 : i32, i32
  }
  func.func @transform_2(%arg0: i32) -> (i32, i32) {
    %c0_i32 = arith.constant 0 : i32
    %c0_i32_0 = arith.constant 0 : i32
    %c0_i32_1 = arith.constant 0 : i32
    return %c0_i32, %c0_i32_0 : i32, i32
  }
  func.func @transform_3(%arg0: i32) -> (i32, i32) {
    %c0_i32 = arith.constant 0 : i32
    %c0_i32_0 = arith.constant 0 : i32
    %c0_i32_1 = arith.constant 0 : i32
    return %c0_i32, %c0_i32_0 : i32, i32
  }
  func.func @transform_4(%arg0: i32) -> (i32, i32) {
    %c0_i32 = arith.constant 0 : i32
    %c0_i32_0 = arith.constant 0 : i32
    %c0_i32_1 = arith.constant 0 : i32
    return %c0_i32, %c0_i32_0 : i32, i32
  }
  func.func @transform_5(%arg0: i32) -> (i32, i32) {
    %c0_i32 = arith.constant 0 : i32
    %c0_i32_0 = arith.constant 0 : i32
    %c0_i32_1 = arith.constant 0 : i32
    return %c0_i32, %c0_i32_0 : i32, i32
  }
  func.func @transform_6(%arg0: i32) -> (i32, i32) {
    %c0_i32 = arith.constant 0 : i32
    %c0_i32_0 = arith.constant 0 : i32
    %c0_i32_1 = arith.constant 0 : i32
    return %c0_i32, %c0_i32_0 : i32, i32
  }
  func.func @transform_7(%arg0: i32) -> (i32, i32) {
    %c0_i32 = arith.constant 0 : i32
    %c0_i32_0 = arith.constant 0 : i32
    return %arg0, %c0_i32 : i32, i32
  }
}

</mosaic_0001>

<llo_original>
// kernel: tpu_custom_call.1
$region0: #{tpu_custom_call.1}
  #allocation0 [shape = 'u32[]', space=smem, size = 0x4, offset = 0x4, fixed_abs, tag = 'smem constant byte address 0x4 - core index']
  #allocation1 [shape = 'u32[72,128]{1,0:T(1,128)}', space=vmem, size = 0x9000, scoped, tag = 'internal scratch']
  %s0 = inlined_call_operand.hbm [shape: f32[8,784], index: 0, kind: input, shape index: {}]
  %s1 = inlined_call_operand.hbm [shape: bf16[784,512], index: 1, kind: input, shape index: {}]
  %s2 = inlined_call_operand.hbm [shape: f32[1,512], index: 2, kind: input, shape index: {}]
  %s3 = inlined_call_operand.hbm [shape: bf16[512,256], index: 3, kind: input, shape index: {}]
  %s4 = inlined_call_operand.vmem [shape: f32[1,256], index: 4, kind: input, shape index: {}]
  %s5 = inlined_call_operand.hbm [shape: bf16[256,128], index: 5, kind: input, shape index: {}]
  %s6 = inlined_call_operand.vmem [shape: f32[1,128], index: 6, kind: input, shape index: {}]
  %s7 = inlined_call_operand.hbm [shape: f32[8,128], index: 7, kind: output, shape index: {}]
  %s8 = sld [smem:[#allocation0]]
  $region58: #{tpu_custom_call.1} parent=0
    _
  %s10 = ssub.s32 1, %s8
  %s11 = scalar_select 0, %s10, %s8
  $region1: #{tpu_custom_call.1} parent=0
    #allocation2 [shape = 'u8[458752]{0}', space=vmem, size = 0x70000, scoped, tag = 'input window, operand 0, single buffered']
    #allocation3 [shape = 's32[1]{0}', space=sflag, size = 0x4, scoped, tag = 'scoped memory for tpu_custom_call.1']
    #allocation4 [shape = 's32[1]{0}', space=sflag, size = 0x4, scoped, tag = 'scoped memory for tpu_custom_call.1']
    #allocation5 [shape = 'u8[802816]{0}', space=vmem, size = 0xc4000, scoped, tag = 'input window, operand 1, single buffered']
    #allocation6 [shape = 's32[1]{0}', space=sflag, size = 0x4, scoped, tag = 'scoped memory for tpu_custom_call.1']
    #allocation7 [shape = 'u8[2048]{0}', space=vmem, size = 0x800, scoped, tag = 'input window, operand 2, single buffered']
    #allocation8 [shape = 'u8[262144]{0}', space=vmem, size = 0x40000, scoped, tag = 'input window, operand 3, single buffered']
    #allocation9 [shape = 's32[1]{0}', space=sflag, size = 0x4, scoped, tag = 'scoped memory for tpu_custom_call.1']
    #allocation10 [shape = 'u8[65536]{0}', space=vmem, size = 0x10000, scoped, tag = 'input window, operand 5, single buffered']
    #allocation11 [shape = 'u8[65536]{0}', space=vmem, size = 0x10000, scoped, tag = 'output window, operand 0, single buffered']
    %12 = vsyncpa [#allocation3], 0
    %13 = vsyncpa [#allocation6], 0
    %14 = vsyncpa [#allocation9], 0
    %15 = vsyncpa [#allocation4], 0
    // Predicated region
    $region2: #{tpu_custom_call.1} parent=1 // pred_check
      _
    $region3: #{tpu_custom_call.1} parent=1 // pred_check_branch
      %17 = sbr.rel (0) target = $region5
    $region4: #{tpu_custom_call.1} parent=1 // pred_region
      %19 = vsyncadd [#allocation3], 13440
      %s20 = sshll.u32 %s0, 4
      %s21 = int_to_ptr.hbm [resolvable:$true] %s20
      %s22 = sshll.u32 [#allocation2], 4
      %s23 = int_to_ptr.vmem [resolvable:$true] %s22
      %28 = dma.hbm_to_vmem [thread:$0]  %s21, 896, %s23, [#allocation3], 896, 896, 56
    $region5: #{tpu_custom_call.1} parent=1 // pred_fallthru
      _
    // Predicated region
    $region6: #{tpu_custom_call.1} parent=1 // pred_check
      _
    $region7: #{tpu_custom_call.1} parent=1 // pred_check_branch
      %30 = sbr.rel (0) target = $region9
    $region8: #{tpu_custom_call.1} parent=1 // pred_region
      %32 = vsyncadd [#allocation6], 0
      %s33 = sshll.u32 %s1, 4
      %s34 = int_to_ptr.hbm [resolvable:$true] %s33
      %s35 = sshll.u32 [#allocation5], 4
      %s36 = int_to_ptr.vmem [resolvable:$true] %s35
      %41 = dma.hbm_to_vmem [thread:$0]  %s34, 25088, %s36, [#allocation6], 256, 256, 16
    $region9: #{tpu_custom_call.1} parent=1 // pred_fallthru
      _
    // Predicated region
    $region10: #{tpu_custom_call.1} parent=1 // pred_check
      _
    $region11: #{tpu_custom_call.1} parent=1 // pred_check_branch
      %43 = sbr.rel (0) target = $region13
    $region12: #{tpu_custom_call.1} parent=1 // pred_region
      %45 = vsyncadd [#allocation6], 0
      %s47 = sshll.u32 %s2, 4
      %s48 = int_to_ptr.hbm [resolvable:$true] %s47
      %s49 = sshll.u32 [#allocation7], 4
      %s50 = int_to_ptr.vmem [resolvable:$true] %s49
      %52 = dma.hbm_to_vmem [thread:$0]  %s48, 64, %s50, [#allocation6]
    $region13: #{tpu_custom_call.1} parent=1 // pred_fallthru
      _
    // Predicated region
    $region14: #{tpu_custom_call.1} parent=1 // pred_check
      _
    $region15: #{tpu_custom_call.1} parent=1 // pred_check_branch
      %54 = sbr.rel (0) target = $region17
    $region16: #{tpu_custom_call.1} parent=1 // pred_region
      %56 = vsyncadd [#allocation9], 0
      %s57 = sshll.u32 %s3, 4
      %s58 = int_to_ptr.hbm [resolvable:$true] %s57
      %s59 = sshll.u32 [#allocation8], 4
      %s60 = int_to_ptr.vmem [resolvable:$true] %s59
      %65 = dma.hbm_to_vmem [thread:$0]  %s58, 8192, %s60, [#allocation9], 128, 128, 8
    $region17: #{tpu_custom_call.1} parent=1 // pred_fallthru
      _
    // Predicated region
    $region18: #{tpu_custom_call.1} parent=1 // pred_check
      _
    $region19: #{tpu_custom_call.1} parent=1 // pred_check_branch
      %67 = sbr.rel (0) target = $region21
    $region20: #{tpu_custom_call.1} parent=1 // pred_region
      _
    $region21: #{tpu_custom_call.1} parent=1 // pred_fallthru
      _
    // Predicated region
    $region22: #{tpu_custom_call.1} parent=1 // pred_check
      _
    $region23: #{tpu_custom_call.1} parent=1 // pred_check_branch
      %69 = sbr.rel (0) target = $region25
    $region24: #{tpu_custom_call.1} parent=1 // pred_region
      %71 = vsyncadd [#allocation9], 0
      %s72 = sshll.u32 %s5, 4
      %s73 = int_to_ptr.hbm [resolvable:$true] %s72
      %s74 = sshll.u32 [#allocation10], 4
      %s75 = int_to_ptr.vmem [resolvable:$true] %s74
      %80 = dma.hbm_to_vmem [thread:$0]  %s73, 2048, %s75, [#allocation9], 64, 64, 4
    $region25: #{tpu_custom_call.1} parent=1 // pred_fallthru
      _
    // Predicated region
    $region26: #{tpu_custom_call.1} parent=1 // pred_check
      _
    $region27: #{tpu_custom_call.1} parent=1 // pred_check_branch
      %82 = sbr.rel (0) target = $region29
    $region28: #{tpu_custom_call.1} parent=1 // pred_region
      _
    $region29: #{tpu_custom_call.1} parent=1 // pred_fallthru
      _
    // Predicated region
    $region30: #{tpu_custom_call.1} parent=1 // pred_check
      _
    $region31: #{tpu_custom_call.1} parent=1 // pred_check_branch
      %84 = sbr.rel (0) target = $region33
    $region32: #{tpu_custom_call.1} parent=1 // pred_region
      %86 = dma.done [#allocation3], 14336
    $region33: #{tpu_custom_call.1} parent=1 // pred_fallthru
      _
    // Predicated region
    $region34: #{tpu_custom_call.1} parent=1 // pred_check
      _
    $region35: #{tpu_custom_call.1} parent=1 // pred_check_branch
      %88 = sbr.rel (0) target = $region37
    $region36: #{tpu_custom_call.1} parent=1 // pred_region
      %90 = dma.done [#allocation6], 25088
    $region37: #{tpu_custom_call.1} parent=1 // pred_fallthru
      _
    // Predicated region
    $region38: #{tpu_custom_call.1} parent=1 // pred_check
      _
    $region39: #{tpu_custom_call.1} parent=1 // pred_check_branch
      %92 = sbr.rel (0) target = $region41
    $region40: #{tpu_custom_call.1} parent=1 // pred_region
      %94 = dma.done [#allocation6], 64
    $region41: #{tpu_custom_call.1} parent=1 // pred_fallthru
      _
    // Predicated region
    $region42: #{tpu_custom_call.1} parent=1 // pred_check
      _
    $region43: #{tpu_custom_call.1} parent=1 // pred_check_branch
      %96 = sbr.rel (0) target = $region45
    $region44: #{tpu_custom_call.1} parent=1 // pred_region
      %98 = dma.done [#allocation9], 8192
    $region45: #{tpu_custom_call.1} parent=1 // pred_fallthru
      _
    // Predicated region
    $region46: #{tpu_custom_call.1} parent=1 // pred_check
      _
    $region47: #{tpu_custom_call.1} parent=1 // pred_check_branch
      %100 = sbr.rel (0) target = $region49
    $region48: #{tpu_custom_call.1} parent=1 // pred_region
      %102 = dma.done [#allocation9], 2048
    $region49: #{tpu_custom_call.1} parent=1 // pred_fallthru
      _
    %v104 = vld [vmem:[#allocation2] sm:$0xff]
    %v105 = vld [vmem:[#allocation2 + $0x8] sm:$0xff]
    %v106 = vld [vmem:[#allocation2 + $0x10] sm:$0xff]
    %v107 = vld [vmem:[#allocation2 + $0x18] sm:$0xff]
    %v108 = vld [vmem:[#allocation2 + $0x20] sm:$0xff]
    %v109 = vld [vmem:[#allocation2 + $0x28] sm:$0xff]
    %v110 = vld [vmem:[#allocation2 + $0x30] sm:$0xff]
    %v111 = vld [vmem:[#allocation2 + $0x38] sm:$0xff]
    %v112 = vld [vmem:[#allocation2 + $0x40] sm:$0xff]
    %v113 = vld [vmem:[#allocation2 + $0x48] sm:$0xff]
    %v114 = vld [vmem:[#allocation2 + $0x50] sm:$0xff]
    %v115 = vld [vmem:[#allocation2 + $0x58] sm:$0xff]
    %v116 = vld [vmem:[#allocation2 + $0x60] sm:$0xff]
    %v117 = vld [vmem:[#allocation2 + $0x68] sm:$0xff]
    %v118 = vld [vmem:[#allocation2 + $0x70] sm:$0xff]
    %v119 = vld [vmem:[#allocation2 + $0x78] sm:$0xff]
    %v120 = vld [vmem:[#allocation2 + $0x80] sm:$0xff]
    %v121 = vld [vmem:[#allocation2 + $0x88] sm:$0xff]
    %v122 = vld [vmem:[#allocation2 + $0x90] sm:$0xff]
    %v123 = vld [vmem:[#allocation2 + $0x98] sm:$0xff]
    %v124 = vld [vmem:[#allocation2 + $0xa0] sm:$0xff]
    %v125 = vld [vmem:[#allocation2 + $0xa8] sm:$0xff]
    %v126 = vld [vmem:[#allocation2 + $0xb0] sm:$0xff]
    %v127 = vld [vmem:[#allocation2 + $0xb8] sm:$0xff]
    %v128 = vld [vmem:[#allocation2 + $0xc0] sm:$0xff]
    %v129 = vld [vmem:[#allocation2 + $0xc8] sm:$0xff]
    %v130 = vld [vmem:[#allocation2 + $0xd0] sm:$0xff]
    %v131 = vld [vmem:[#allocation2 + $0xd8] sm:$0xff]
    %v132 = vld [vmem:[#allocation2 + $0xe0] sm:$0xff]
    %v133 = vld [vmem:[#allocation2 + $0xe8] sm:$0xff]
    %v134 = vld [vmem:[#allocation2 + $0xf0] sm:$0xff]
    %v135 = vld [vmem:[#allocation2 + $0xf8] sm:$0xff]
    %v136 = vld [vmem:[#allocation2 + $0x100] sm:$0xff]
    %v137 = vld [vmem:[#allocation2 + $0x108] sm:$0xff]
    %v138 = vld [vmem:[#allocation2 + $0x110] sm:$0xff]
    %v139 = vld [vmem:[#allocation2 + $0x118] sm:$0xff]
    %v140 = vld [vmem:[#allocation2 + $0x120] sm:$0xff]
    %v141 = vld [vmem:[#allocation2 + $0x128] sm:$0xff]
    %v142 = vld [vmem:[#allocation2 + $0x130] sm:$0xff]
    %v143 = vld [vmem:[#allocation2 + $0x138] sm:$0xff]
    %v144 = vld [vmem:[#allocation2 + $0x140] sm:$0xff]
    %v145 = vld [vmem:[#allocation2 + $0x148] sm:$0xff]
    %v146 = vld [vmem:[#allocation2 + $0x150] sm:$0xff]
    %v147 = vld [vmem:[#allocation2 + $0x158] sm:$0xff]
    %v148 = vld [vmem:[#allocation2 + $0x160] sm:$0xff]
    %v149 = vld [vmem:[#allocation2 + $0x168] sm:$0xff]
    %v150 = vld [vmem:[#allocation2 + $0x170] sm:$0xff]
    %v151 = vld [vmem:[#allocation2 + $0x178] sm:$0xff]
    %v152 = vld [vmem:[#allocation2 + $0x180] sm:$0xff]
    %v153 = vld [vmem:[#allocation2 + $0x188] sm:$0xff]
    %v154 = vld [vmem:[#allocation2 + $0x190] sm:$0xff]
    %v155 = vld [vmem:[#allocation2 + $0x198] sm:$0xff]
    %v156 = vld [vmem:[#allocation2 + $0x1a0] sm:$0xff]
    %v157 = vld [vmem:[#allocation2 + $0x1a8] sm:$0xff]
    %v158 = vld [vmem:[#allocation2 + $0x1b0] sm:$0xff]
    %v159 = vld [vmem:[#allocation2 + $0x1b8] sm:$0xff]
    %v160 = vld [vmem:[#allocation2 + $0x1c0] sm:$0xff]
    %v161 = vld [vmem:[#allocation2 + $0x1c8] sm:$0xff]
    %v162 = vld [vmem:[#allocation2 + $0x1d0] sm:$0xff]
    %v163 = vld [vmem:[#allocation2 + $0x1d8] sm:$0xff]
    %v164 = vld [vmem:[#allocation2 + $0x1e0] sm:$0xff]
    %v165 = vld [vmem:[#allocation2 + $0x1e8] sm:$0xff]
    %v166 = vld [vmem:[#allocation2 + $0x1f0] sm:$0xff]
    %v167 = vld [vmem:[#allocation2 + $0x1f8] sm:$0xff]
    %v168 = vld [vmem:[#allocation2 + $0x200] sm:$0xff]
    %v169 = vld [vmem:[#allocation2 + $0x208] sm:$0xff]
    %v170 = vld [vmem:[#allocation2 + $0x210] sm:$0xff]
    %v171 = vld [vmem:[#allocation2 + $0x218] sm:$0xff]
    %v172 = vld [vmem:[#allocation2 + $0x220] sm:$0xff]
    %v173 = vld [vmem:[#allocation2 + $0x228] sm:$0xff]
    %v174 = vld [vmem:[#allocation2 + $0x230] sm:$0xff]
    %v175 = vld [vmem:[#allocation2 + $0x238] sm:$0xff]
    %v176 = vld [vmem:[#allocation2 + $0x240] sm:$0xff]
    %v177 = vld [vmem:[#allocation2 + $0x248] sm:$0xff]
    %v178 = vld [vmem:[#allocation2 + $0x250] sm:$0xff]
    %v179 = vld [vmem:[#allocation2 + $0x258] sm:$0xff]
    %v180 = vld [vmem:[#allocation2 + $0x260] sm:$0xff]
    %v181 = vld [vmem:[#allocation2 + $0x268] sm:$0xff]
    %v182 = vld [vmem:[#allocation2 + $0x270] sm:$0xff]
    %v183 = vld [vmem:[#allocation2 + $0x278] sm:$0xff]
    %v184 = vld [vmem:[#allocation2 + $0x280] sm:$0xff]
    %v185 = vld [vmem:[#allocation2 + $0x288] sm:$0xff]
    %v186 = vld [vmem:[#allocation2 + $0x290] sm:$0xff]
    %v187 = vld [vmem:[#allocation2 + $0x298] sm:$0xff]
    %v188 = vld [vmem:[#allocation2 + $0x2a0] sm:$0xff]
    %v189 = vld [vmem:[#allocation2 + $0x2a8] sm:$0xff]
    %v190 = vld [vmem:[#allocation2 + $0x2b0] sm:$0xff]
    %v191 = vld [vmem:[#allocation2 + $0x2b8] sm:$0xff]
    %v192 = vld [vmem:[#allocation2 + $0x2c0] sm:$0xff]
    %v193 = vld [vmem:[#allocation2 + $0x2c8] sm:$0xff]
    %v194 = vld [vmem:[#allocation2 + $0x2d0] sm:$0xff]
    %v195 = vld [vmem:[#allocation2 + $0x2d8] sm:$0xff]
    %v196 = vld [vmem:[#allocation2 + $0x2e0] sm:$0xff]
    %v197 = vld [vmem:[#allocation2 + $0x2e8] sm:$0xff]
    %v198 = vld [vmem:[#allocation2 + $0x2f0] sm:$0xff]
    %v199 = vld [vmem:[#allocation2 + $0x2f8] sm:$0xff]
    %v200 = vld [vmem:[#allocation2 + $0x300] sm:$0xff]
    %v201 = vld [vmem:[#allocation2 + $0x308] sm:$0xff]
    %v202 = vld [vmem:[#allocation2 + $0x310] sm:$0xff]
    %v203 = vld [vmem:[#allocation2 + $0x318] sm:$0xff]
    %v204 = vld [vmem:[#allocation2 + $0x320] sm:$0xff]
    %v205 = vld [vmem:[#allocation2 + $0x328] sm:$0xff]
    %v206 = vld [vmem:[#allocation2 + $0x330] sm:$0xff]
    %v207 = vld [vmem:[#allocation2 + $0x338] sm:$0xff]
    %v208 = vld [vmem:[#allocation2 + $0x340] sm:$0xff]
    %v209 = vld [vmem:[#allocation2 + $0x348] sm:$0xff]
    %v210 = vld [vmem:[#allocation2 + $0x350] sm:$0xff]
    %v211 = vld [vmem:[#allocation2 + $0x358] sm:$0xff]
    %v212 = vld [vmem:[#allocation2 + $0x360] sm:$0xff]
    %v213 = vld [vmem:[#allocation2 + $0x368] sm:$0xff]
    %v214 = vld [vmem:[#allocation2 + $0x370] sm:$0xff]
    %v215 = vld [vmem:[#allocation2 + $0x378] sm:$0xff]
    %v216 = vpack.c.bf16 %v111, %v104
    %v217 = vpack.c.bf16 %v112, %v105
    %v218 = vpack.c.bf16 %v113, %v106
    %v219 = vpack.c.bf16 %v114, %v107
    %v220 = vpack.c.bf16 %v115, %v108
    %v221 = vpack.c.bf16 %v116, %v109
    %v222 = vpack.c.bf16 %v117, %v110
    %v223 = vpack.c.bf16 %v125, %v118
    %v224 = vpack.c.bf16 %v126, %v119
    %v225 = vpack.c.bf16 %v127, %v120
    %v226 = vpack.c.bf16 %v128, %v121
    %v227 = vpack.c.bf16 %v129, %v122
    %v228 = vpack.c.bf16 %v130, %v123
    %v229 = vpack.c.bf16 %v131, %v124
    %v230 = vpack.c.bf16 %v139, %v132
    %v231 = vpack.c.bf16 %v140, %v133
    %v232 = vpack.c.bf16 %v141, %v134
    %v233 = vpack.c.bf16 %v142, %v135
    %v234 = vpack.c.bf16 %v143, %v136
    %v235 = vpack.c.bf16 %v144, %v137
    %v236 = vpack.c.bf16 %v145, %v138
    %v237 = vpack.c.bf16 %v153, %v146
    %v238 = vpack.c.bf16 %v154, %v147
    %v239 = vpack.c.bf16 %v155, %v148
    %v240 = vpack.c.bf16 %v156, %v149
    %v241 = vpack.c.bf16 %v157, %v150
    %v242 = vpack.c.bf16 %v158, %v151
    %v243 = vpack.c.bf16 %v159, %v152
    %v244 = vpack.c.bf16 %v167, %v160
    %v245 = vpack.c.bf16 %v168, %v161
    %v246 = vpack.c.bf16 %v169, %v162
    %v247 = vpack.c.bf16 %v170, %v163
    %v248 = vpack.c.bf16 %v171, %v164
    %v249 = vpack.c.bf16 %v172, %v165
    %v250 = vpack.c.bf16 %v173, %v166
    %v251 = vpack.c.bf16 %v181, %v174
    %v252 = vpack.c.bf16 %v182, %v175
    %v253 = vpack.c.bf16 %v183, %v176
    %v254 = vpack.c.bf16 %v184, %v177
    %v255 = vpack.c.bf16 %v185, %v178
    %v256 = vpack.c.bf16 %v186, %v179
    %v257 = vpack.c.bf16 %v187, %v180
    %v258 = vpack.c.bf16 %v195, %v188
    %v259 = vpack.c.bf16 %v196, %v189
    %v260 = vpack.c.bf16 %v197, %v190
    %v261 = vpack.c.bf16 %v198, %v191
    %v262 = vpack.c.bf16 %v199, %v192
    %v263 = vpack.c.bf16 %v200, %v193
    %v264 = vpack.c.bf16 %v201, %v194
    %v265 = vpack.c.bf16 %v209, %v202
    %v266 = vpack.c.bf16 %v210, %v203
    %v267 = vpack.c.bf16 %v211, %v204
    %v268 = vpack.c.bf16 %v212, %v205
    %v269 = vpack.c.bf16 %v213, %v206
    %v270 = vpack.c.bf16 %v214, %v207
    %v271 = vpack.c.bf16 %v215, %v208
    %v272 = vld [vmem:[#allocation5] sm:$0xff]
    %v273 = vld [vmem:[#allocation5 + $0x8] sm:$0xff]
    %v274 = vld [vmem:[#allocation5 + $0x10] sm:$0xff]
    %v275 = vld [vmem:[#allocation5 + $0x18] sm:$0xff]
    %v276 = vld [vmem:[#allocation5 + $0x20] sm:$0xff]
    %v277 = vld [vmem:[#allocation5 + $0x28] sm:$0xff]
    %v278 = vld [vmem:[#allocation5 + $0x30] sm:$0xff]
    %v279 = vld [vmem:[#allocation5 + $0x38] sm:$0xff]
    %v280 = vld [vmem:[#allocation5 + $0x40] sm:$0xff]
    %v281 = vld [vmem:[#allocation5 + $0x48] sm:$0xff]
    %v282 = vld [vmem:[#allocation5 + $0x50] sm:$0xff]
    %v283 = vld [vmem:[#allocation5 + $0x58] sm:$0xff]
    %v284 = vld [vmem:[#allocation5 + $0x60] sm:$0xff]
    %v285 = vld [vmem:[#allocation5 + $0x68] sm:$0xff]
    %v286 = vld [vmem:[#allocation5 + $0x70] sm:$0xff]
    %v287 = vld [vmem:[#allocation5 + $0x78] sm:$0xff]
    %v288 = vld [vmem:[#allocation5 + $0x80] sm:$0xff]
    %v289 = vld [vmem:[#allocation5 + $0x88] sm:$0xff]
    %v290 = vld [vmem:[#allocation5 + $0x90] sm:$0xff]
    %v291 = vld [vmem:[#allocation5 + $0x98] sm:$0xff]
    %v292 = vld [vmem:[#allocation5 + $0xa0] sm:$0xff]
    %v293 = vld [vmem:[#allocation5 + $0xa8] sm:$0xff]
    %v294 = vld [vmem:[#allocation5 + $0xb0] sm:$0xff]
    %v295 = vld [vmem:[#allocation5 + $0xb8] sm:$0xff]
    %v296 = vld [vmem:[#allocation5 + $0xc0] sm:$0xff]
    %v297 = vld [vmem:[#allocation5 + $0xc8] sm:$0xff]
    %v298 = vld [vmem:[#allocation5 + $0xd0] sm:$0xff]
    %v299 = vld [vmem:[#allocation5 + $0xd8] sm:$0xff]
    %v300 = vld [vmem:[#allocation5 + $0xe0] sm:$0xff]
    %v301 = vld [vmem:[#allocation5 + $0xe8] sm:$0xff]
    %v302 = vld [vmem:[#allocation5 + $0xf0] sm:$0xff]
    %v303 = vld [vmem:[#allocation5 + $0xf8] sm:$0xff]
    %v304 = vld [vmem:[#allocation5 + $0x100] sm:$0xff]
    %v305 = vld [vmem:[#allocation5 + $0x108] sm:$0xff]
    %v306 = vld [vmem:[#allocation5 + $0x110] sm:$0xff]
    %v307 = vld [vmem:[#allocation5 + $0x118] sm:$0xff]
    %v308 = vld [vmem:[#allocation5 + $0x120] sm:$0xff]
    %v309 = vld [vmem:[#allocation5 + $0x128] sm:$0xff]
    %v310 = vld [vmem:[#allocation5 + $0x130] sm:$0xff]
    %v311 = vld [vmem:[#allocation5 + $0x138] sm:$0xff]
    %v312 = vld [vmem:[#allocation5 + $0x140] sm:$0xff]
    %v313 = vld [vmem:[#allocation5 + $0x148] sm:$0xff]
    %v314 = vld [vmem:[#allocation5 + $0x150] sm:$0xff]
    %v315 = vld [vmem:[#allocation5 + $0x158] sm:$0xff]
    %v316 = vld [vmem:[#allocation5 + $0x160] sm:$0xff]
    %v317 = vld [vmem:[#allocation5 + $0x168] sm:$0xff]
    %v318 = vld [vmem:[#allocation5 + $0x170] sm:$0xff]
    %v319 = vld [vmem:[#allocation5 + $0x178] sm:$0xff]
    %v320 = vld [vmem:[#allocation5 + $0x180] sm:$0xff]
    %v321 = vld [vmem:[#allocation5 + $0x188] sm:$0xff]
    %v322 = vld [vmem:[#allocation5 + $0x190] sm:$0xff]
    %v323 = vld [vmem:[#allocation5 + $0x198] sm:$0xff]
    %v324 = vld [vmem:[#allocation5 + $0x1a0] sm:$0xff]
    %v325 = vld [vmem:[#allocation5 + $0x1a8] sm:$0xff]
    %v326 = vld [vmem:[#allocation5 + $0x1b0] sm:$0xff]
    %v327 = vld [vmem:[#allocation5 + $0x1b8] sm:$0xff]
    %v328 = vld [vmem:[#allocation5 + $0x1c0] sm:$0xff]
    %v329 = vld [vmem:[#allocation5 + $0x1c8] sm:$0xff]
    %v330 = vld [vmem:[#allocation5 + $0x1d0] sm:$0xff]
    %v331 = vld [vmem:[#allocation5 + $0x1d8] sm:$0xff]
    %v332 = vld [vmem:[#allocation5 + $0x1e0] sm:$0xff]
    %v333 = vld [vmem:[#allocation5 + $0x1e8] sm:$0xff]
    %v334 = vld [vmem:[#allocation5 + $0x1f0] sm:$0xff]
    %v335 = vld [vmem:[#allocation5 + $0x1f8] sm:$0xff]
    %v336 = vld [vmem:[#allocation5 + $0x200] sm:$0xff]
    %v337 = vld [vmem:[#allocation5 + $0x208] sm:$0xff]
    %v338 = vld [vmem:[#allocation5 + $0x210] sm:$0xff]
    %v339 = vld [vmem:[#allocation5 + $0x218] sm:$0xff]
    %v340 = vld [vmem:[#allocation5 + $0x220] sm:$0xff]
    %v341 = vld [vmem:[#allocation5 + $0x228] sm:$0xff]
    %v342 = vld [vmem:[#allocation5 + $0x230] sm:$0xff]
    %v343 = vld [vmem:[#allocation5 + $0x238] sm:$0xff]
    %v344 = vld [vmem:[#allocation5 + $0x240] sm:$0xff]
    %v345 = vld [vmem:[#allocation5 + $0x248] sm:$0xff]
    %v346 = vld [vmem:[#allocation5 + $0x250] sm:$0xff]
    %v347 = vld [vmem:[#allocation5 + $0x258] sm:$0xff]
    %v348 = vld [vmem:[#allocation5 + $0x260] sm:$0xff]
    %v349 = vld [vmem:[#allocation5 + $0x268] sm:$0xff]
    %v350 = vld [vmem:[#allocation5 + $0x270] sm:$0xff]
    %v351 = vld [vmem:[#allocation5 + $0x278] sm:$0xff]
    %v352 = vld [vmem:[#allocation5 + $0x280] sm:$0xff]
    %v353 = vld [vmem:[#allocation5 + $0x288] sm:$0xff]
    %v354 = vld [vmem:[#allocation5 + $0x290] sm:$0xff]
    %v355 = vld [vmem:[#allocation5 + $0x298] sm:$0xff]
    %v356 = vld [vmem:[#allocation5 + $0x2a0] sm:$0xff]
    %v357 = vld [vmem:[#allocation5 + $0x2a8] sm:$0xff]
    %v358 = vld [vmem:[#allocation5 + $0x2b0] sm:$0xff]
    %v359 = vld [vmem:[#allocation5 + $0x2b8] sm:$0xff]
    %v360 = vld [vmem:[#allocation5 + $0x2c0] sm:$0xff]
    %v361 = vld [vmem:[#allocation5 + $0x2c8] sm:$0xff]
    %v362 = vld [vmem:[#allocation5 + $0x2d0] sm:$0xff]
    %v363 = vld [vmem:[#allocation5 + $0x2d8] sm:$0xff]
    %v364 = vld [vmem:[#allocation5 + $0x2e0] sm:$0xff]
    %v365 = vld [vmem:[#allocation5 + $0x2e8] sm:$0xff]
    %v366 = vld [vmem:[#allocation5 + $0x2f0] sm:$0xff]
    %v367 = vld [vmem:[#allocation5 + $0x2f8] sm:$0xff]
    %v368 = vld [vmem:[#allocation5 + $0x300] sm:$0xff]
    %v369 = vld [vmem:[#allocation5 + $0x308] sm:$0xff]
    %v370 = vld [vmem:[#allocation5 + $0x310] sm:$0xff]
    %v371 = vld [vmem:[#allocation5 + $0x318] sm:$0xff]
    %v372 = vld [vmem:[#allocation5 + $0x320] sm:$0xff]
    %v373 = vld [vmem:[#allocation5 + $0x328] sm:$0xff]
    %v374 = vld [vmem:[#allocation5 + $0x330] sm:$0xff]
    %v375 = vld [vmem:[#allocation5 + $0x338] sm:$0xff]
    %v376 = vld [vmem:[#allocation5 + $0x340] sm:$0xff]
    %v377 = vld [vmem:[#allocation5 + $0x348] sm:$0xff]
    %v378 = vld [vmem:[#allocation5 + $0x350] sm:$0xff]
    %v379 = vld [vmem:[#allocation5 + $0x358] sm:$0xff]
    %v380 = vld [vmem:[#allocation5 + $0x360] sm:$0xff]
    %v381 = vld [vmem:[#allocation5 + $0x368] sm:$0xff]
    %v382 = vld [vmem:[#allocation5 + $0x370] sm:$0xff]
    %v383 = vld [vmem:[#allocation5 + $0x378] sm:$0xff]
    %v384 = vld [vmem:[#allocation5 + $0x380] sm:$0xff]
    %v385 = vld [vmem:[#allocation5 + $0x388] sm:$0xff]
    %v386 = vld [vmem:[#allocation5 + $0x390] sm:$0xff]
    %v387 = vld [vmem:[#allocation5 + $0x398] sm:$0xff]
    %v388 = vld [vmem:[#allocation5 + $0x3a0] sm:$0xff]
    %v389 = vld [vmem:[#allocation5 + $0x3a8] sm:$0xff]
    %v390 = vld [vmem:[#allocation5 + $0x3b0] sm:$0xff]
    %v391 = vld [vmem:[#allocation5 + $0x3b8] sm:$0xff]
    %v392 = vld [vmem:[#allocation5 + $0x3c0] sm:$0xff]
    %v393 = vld [vmem:[#allocation5 + $0x3c8] sm:$0xff]
    %v394 = vld [vmem:[#allocation5 + $0x3d0] sm:$0xff]
    %v395 = vld [vmem:[#allocation5 + $0x3d8] sm:$0xff]
    %v396 = vld [vmem:[#allocation5 + $0x3e0] sm:$0xff]
    %v397 = vld [vmem:[#allocation5 + $0x3e8] sm:$0xff]
    %v398 = vld [vmem:[#allocation5 + $0x3f0] sm:$0xff]
    %v399 = vld [vmem:[#allocation5 + $0x3f8] sm:$0xff]
    %v400 = vld [vmem:[#allocation5 + $0x400] sm:$0xff]
    %v401 = vld [vmem:[#allocation5 + $0x408] sm:$0xff]
    %v402 = vld [vmem:[#allocation5 + $0x410] sm:$0xff]
    %v403 = vld [vmem:[#allocation5 + $0x418] sm:$0xff]
    %v404 = vld [vmem:[#allocation5 + $0x420] sm:$0xff]
    %v405 = vld [vmem:[#allocation5 + $0x428] sm:$0xff]
    %v406 = vld [vmem:[#allocation5 + $0x430] sm:$0xff]
    %v407 = vld [vmem:[#allocation5 + $0x438] sm:$0xff]
    %v408 = vld [vmem:[#allocation5 + $0x440] sm:$0xff]
    %v409 = vld [vmem:[#allocation5 + $0x448] sm:$0xff]
    %v410 = vld [vmem:[#allocation5 + $0x450] sm:$0xff]
    %v411 = vld [vmem:[#allocation5 + $0x458] sm:$0xff]
    %v412 = vld [vmem:[#allocation5 + $0x460] sm:$0xff]
    %v413 = vld [vmem:[#allocation5 + $0x468] sm:$0xff]
    %v414 = vld [vmem:[#allocation5 + $0x470] sm:$0xff]
    %v415 = vld [vmem:[#allocation5 + $0x478] sm:$0xff]
    %v416 = vld [vmem:[#allocation5 + $0x480] sm:$0xff]
    %v417 = vld [vmem:[#allocation5 + $0x488] sm:$0xff]
    %v418 = vld [vmem:[#allocation5 + $0x490] sm:$0xff]
    %v419 = vld [vmem:[#allocation5 + $0x498] sm:$0xff]
    %v420 = vld [vmem:[#allocation5 + $0x4a0] sm:$0xff]
    %v421 = vld [vmem:[#allocation5 + $0x4a8] sm:$0xff]
    %v422 = vld [vmem:[#allocation5 + $0x4b0] sm:$0xff]
    %v423 = vld [vmem:[#allocation5 + $0x4b8] sm:$0xff]
    %v424 = vld [vmem:[#allocation5 + $0x4c0] sm:$0xff]
    %v425 = vld [vmem:[#allocation5 + $0x4c8] sm:$0xff]
    %v426 = vld [vmem:[#allocation5 + $0x4d0] sm:$0xff]
    %v427 = vld [vmem:[#allocation5 + $0x4d8] sm:$0xff]
    %v428 = vld [vmem:[#allocation5 + $0x4e0] sm:$0xff]
    %v429 = vld [vmem:[#allocation5 + $0x4e8] sm:$0xff]
    %v430 = vld [vmem:[#allocation5 + $0x4f0] sm:$0xff]
    %v431 = vld [vmem:[#allocation5 + $0x4f8] sm:$0xff]
    %v432 = vld [vmem:[#allocation5 + $0x500] sm:$0xff]
    %v433 = vld [vmem:[#allocation5 + $0x508] sm:$0xff]
    %v434 = vld [vmem:[#allocation5 + $0x510] sm:$0xff]
    %v435 = vld [vmem:[#allocation5 + $0x518] sm:$0xff]
    %v436 = vld [vmem:[#allocation5 + $0x520] sm:$0xff]
    %v437 = vld [vmem:[#allocation5 + $0x528] sm:$0xff]
    %v438 = vld [vmem:[#allocation5 + $0x530] sm:$0xff]
    %v439 = vld [vmem:[#allocation5 + $0x538] sm:$0xff]
    %v440 = vld [vmem:[#allocation5 + $0x540] sm:$0xff]
    %v441 = vld [vmem:[#allocation5 + $0x548] sm:$0xff]
    %v442 = vld [vmem:[#allocation5 + $0x550] sm:$0xff]
    %v443 = vld [vmem:[#allocation5 + $0x558] sm:$0xff]
    %v444 = vld [vmem:[#allocation5 + $0x560] sm:$0xff]
    %v445 = vld [vmem:[#allocation5 + $0x568] sm:$0xff]
    %v446 = vld [vmem:[#allocation5 + $0x570] sm:$0xff]
    %v447 = vld [vmem:[#allocation5 + $0x578] sm:$0xff]
    %v448 = vld [vmem:[#allocation5 + $0x580] sm:$0xff]
    %v449 = vld [vmem:[#allocation5 + $0x588] sm:$0xff]
    %v450 = vld [vmem:[#allocation5 + $0x590] sm:$0xff]
    %v451 = vld [vmem:[#allocation5 + $0x598] sm:$0xff]
    %v452 = vld [vmem:[#allocation5 + $0x5a0] sm:$0xff]
    %v453 = vld [vmem:[#allocation5 + $0x5a8] sm:$0xff]
    %v454 = vld [vmem:[#allocation5 + $0x5b0] sm:$0xff]
    %v455 = vld [vmem:[#allocation5 + $0x5b8] sm:$0xff]
    %v456 = vld [vmem:[#allocation5 + $0x5c0] sm:$0xff]
    %v457 = vld [vmem:[#allocation5 + $0x5c8] sm:$0xff]
    %v458 = vld [vmem:[#allocation5 + $0x5d0] sm:$0xff]
    %v459 = vld [vmem:[#allocation5 + $0x5d8] sm:$0xff]
    %v460 = vld [vmem:[#allocation5 + $0x5e0] sm:$0xff]
    %v461 = vld [vmem:[#allocation5 + $0x5e8] sm:$0xff]
    %v462 = vld [vmem:[#allocation5 + $0x5f0] sm:$0xff]
    %v463 = vld [vmem:[#allocation5 + $0x5f8] sm:$0xff]
    %v464 = vld [vmem:[#allocation5 + $0x600] sm:$0xff]
    %v465 = vld [vmem:[#allocation5 + $0x608] sm:$0xff]
    %v466 = vld [vmem:[#allocation5 + $0x610] sm:$0xff]
    %v467 = vld [vmem:[#allocation5 + $0x618] sm:$0xff]
    %v468 = vld [vmem:[#allocation7] sm:$0xf]
    %v470 = vperm.slane %v468, 0
    %v471 = vperm.slane %v468, 1
    %v472 = vperm.slane %v468, 2
    %v473 = vperm.slane %v468, 3
    %v674 = vunpack.c.l.b16 %v272
    %v675 = vunpack.c.h.b16 %v272
    %v676 = vunpack.c.l.b16 %v273
    %v677 = vunpack.c.h.b16 %v273
    %v678 = vunpack.c.l.b16 %v274
    %v679 = vunpack.c.h.b16 %v274
    %v680 = vunpack.c.l.b16 %v275
    %v681 = vunpack.c.h.b16 %v275
    %v682 = vunpack.c.l.b16 %v276
    %v683 = vunpack.c.h.b16 %v276
    %v684 = vunpack.c.l.b16 %v277
    %v685 = vunpack.c.h.b16 %v277
    %v686 = vunpack.c.l.b16 %v278
    %v687 = vunpack.c.h.b16 %v278
    %v688 = vunpack.c.l.b16 %v279
    %v689 = vunpack.c.h.b16 %v279
    %v690 = vunpack.c.l.b16 %v280
    %v691 = vunpack.c.h.b16 %v280
    %v692 = vunpack.c.l.b16 %v281
    %v693 = vunpack.c.h.b16 %v281
    %v694 = vunpack.c.l.b16 %v282
    %v695 = vunpack.c.h.b16 %v282
    %v696 = vunpack.c.l.b16 %v283
    %v697 = vunpack.c.h.b16 %v283
    %v698 = vunpack.c.l.b16 %v284
    %v699 = vunpack.c.h.b16 %v284
    %v700 = vunpack.c.l.b16 %v285
    %v701 = vunpack.c.h.b16 %v285
    %v702 = vunpack.c.l.b16 %v286
    %v703 = vunpack.c.h.b16 %v286
    %v704 = vunpack.c.l.b16 %v287
    %v705 = vunpack.c.h.b16 %v287
    %v706 = vunpack.c.l.b16 %v288
    %v707 = vunpack.c.h.b16 %v288
    %v708 = vunpack.c.l.b16 %v289
    %v709 = vunpack.c.h.b16 %v289
    %v710 = vunpack.c.l.b16 %v290
    %v711 = vunpack.c.h.b16 %v290
    %v712 = vunpack.c.l.b16 %v291
    %v713 = vunpack.c.h.b16 %v291
    %v714 = vunpack.c.l.b16 %v292
    %v715 = vunpack.c.h.b16 %v292
    %v716 = vunpack.c.l.b16 %v293
    %v717 = vunpack.c.h.b16 %v293
    %v718 = vunpack.c.l.b16 %v294
    %v719 = vunpack.c.h.b16 %v294
    %v720 = vunpack.c.l.b16 %v295
    %v721 = vunpack.c.h.b16 %v295
    %v722 = vunpack.c.l.b16 %v296
    %v723 = vunpack.c.h.b16 %v296
    %v724 = vunpack.c.l.b16 %v297
    %v725 = vunpack.c.h.b16 %v297
    %v726 = vunpack.c.l.b16 %v298
    %v727 = vunpack.c.h.b16 %v298
    %v728 = vunpack.c.l.b16 %v299
    %v729 = vunpack.c.h.b16 %v299
    %v730 = vunpack.c.l.b16 %v300
    %v731 = vunpack.c.h.b16 %v300
    %v732 = vunpack.c.l.b16 %v301
    %v733 = vunpack.c.h.b16 %v301
    %v734 = vunpack.c.l.b16 %v302
    %v735 = vunpack.c.h.b16 %v302
    %v736 = vunpack.c.l.b16 %v303
    %v737 = vunpack.c.h.b16 %v303
    %v738 = vunpack.c.l.b16 %v304
    %v739 = vunpack.c.h.b16 %v304
    %v740 = vunpack.c.l.b16 %v305
    %v741 = vunpack.c.h.b16 %v305
    %v742 = vunpack.c.l.b16 %v306
    %v743 = vunpack.c.h.b16 %v306
    %v744 = vunpack.c.l.b16 %v307
    %v745 = vunpack.c.h.b16 %v307
    %v746 = vunpack.c.l.b16 %v308
    %v747 = vunpack.c.h.b16 %v308
    %v748 = vunpack.c.l.b16 %v309
    %v749 = vunpack.c.h.b16 %v309
    %v750 = vunpack.c.l.b16 %v310
    %v751 = vunpack.c.h.b16 %v310
    %v752 = vunpack.c.l.b16 %v311
    %v753 = vunpack.c.h.b16 %v311
    %v754 = vunpack.c.l.b16 %v312
    %v755 = vunpack.c.h.b16 %v312
    %v756 = vunpack.c.l.b16 %v313
    %v757 = vunpack.c.h.b16 %v313
    %v758 = vunpack.c.l.b16 %v314
    %v759 = vunpack.c.h.b16 %v314
    %v760 = vunpack.c.l.b16 %v315
    %v761 = vunpack.c.h.b16 %v315
    %v762 = vunpack.c.l.b16 %v316
    %v763 = vunpack.c.h.b16 %v316
    %v764 = vunpack.c.l.b16 %v317
    %v765 = vunpack.c.h.b16 %v317
    %v766 = vunpack.c.l.b16 %v318
    %v767 = vunpack.c.h.b16 %v318
    %v768 = vunpack.c.l.b16 %v319
    %v769 = vunpack.c.h.b16 %v319
    %v770 = vunpack.c.l.b16 %v320
    %v771 = vunpack.c.h.b16 %v320
    %v772 = vunpack.c.l.b16 %v321
    %v773 = vunpack.c.h.b16 %v321
    %v774 = vunpack.c.l.b16 %v322
    %v775 = vunpack.c.h.b16 %v322
    %v776 = vunpack.c.l.b16 %v323
    %v777 = vunpack.c.h.b16 %v323
    %v778 = vunpack.c.l.b16 %v324
    %v779 = vunpack.c.h.b16 %v324
    %v780 = vunpack.c.l.b16 %v325
    %v781 = vunpack.c.h.b16 %v325
    %v782 = vunpack.c.l.b16 %v326
    %v783 = vunpack.c.h.b16 %v326
    %v784 = vunpack.c.l.b16 %v327
    %v785 = vunpack.c.h.b16 %v327
    %v786 = vunpack.c.l.b16 %v328
    %v787 = vunpack.c.h.b16 %v328
    %v788 = vunpack.c.l.b16 %v329
    %v789 = vunpack.c.h.b16 %v329
    %v790 = vunpack.c.l.b16 %v330
    %v791 = vunpack.c.h.b16 %v330
    %v792 = vunpack.c.l.b16 %v331
    %v793 = vunpack.c.h.b16 %v331
    %v794 = vunpack.c.l.b16 %v332
    %v795 = vunpack.c.h.b16 %v332
    %v796 = vunpack.c.l.b16 %v333
    %v797 = vunpack.c.h.b16 %v333
    %v798 = vunpack.c.l.b16 %v334
    %v799 = vunpack.c.h.b16 %v334
    %v800 = vunpack.c.l.b16 %v335
    %v801 = vunpack.c.h.b16 %v335
    %v802 = vunpack.c.l.b16 %v336
    %v803 = vunpack.c.h.b16 %v336
    %v804 = vunpack.c.l.b16 %v337
    %v805 = vunpack.c.h.b16 %v337
    %v806 = vunpack.c.l.b16 %v338
    %v807 = vunpack.c.h.b16 %v338
    %v808 = vunpack.c.l.b16 %v339
    %v809 = vunpack.c.h.b16 %v339
    %v810 = vunpack.c.l.b16 %v340
    %v811 = vunpack.c.h.b16 %v340
    %v812 = vunpack.c.l.b16 %v341
    %v813 = vunpack.c.h.b16 %v341
    %v814 = vunpack.c.l.b16 %v342
    %v815 = vunpack.c.h.b16 %v342
    %v816 = vunpack.c.l.b16 %v343
    %v817 = vunpack.c.h.b16 %v343
    %v818 = vunpack.c.l.b16 %v344
    %v819 = vunpack.c.h.b16 %v344
    %v820 = vunpack.c.l.b16 %v345
    %v821 = vunpack.c.h.b16 %v345
    %v822 = vunpack.c.l.b16 %v346
    %v823 = vunpack.c.h.b16 %v346
    %v824 = vunpack.c.l.b16 %v347
    %v825 = vunpack.c.h.b16 %v347
    %v826 = vunpack.c.l.b16 %v348
    %v827 = vunpack.c.h.b16 %v348
    %v828 = vunpack.c.l.b16 %v349
    %v829 = vunpack.c.h.b16 %v349
    %v830 = vunpack.c.l.b16 %v350
    %v831 = vunpack.c.h.b16 %v350
    %v832 = vunpack.c.l.b16 %v351
    %v833 = vunpack.c.h.b16 %v351
    %v834 = vunpack.c.l.b16 %v352
    %v835 = vunpack.c.h.b16 %v352
    %v836 = vunpack.c.l.b16 %v353
    %v837 = vunpack.c.h.b16 %v353
    %v838 = vunpack.c.l.b16 %v354
    %v839 = vunpack.c.h.b16 %v354
    %v840 = vunpack.c.l.b16 %v355
    %v841 = vunpack.c.h.b16 %v355
    %v842 = vunpack.c.l.b16 %v356
    %v843 = vunpack.c.h.b16 %v356
    %v844 = vunpack.c.l.b16 %v357
    %v845 = vunpack.c.h.b16 %v357
    %v846 = vunpack.c.l.b16 %v358
    %v847 = vunpack.c.h.b16 %v358
    %v848 = vunpack.c.l.b16 %v359
    %v849 = vunpack.c.h.b16 %v359
    %v850 = vunpack.c.l.b16 %v360
    %v851 = vunpack.c.h.b16 %v360
    %v852 = vunpack.c.l.b16 %v361
    %v853 = vunpack.c.h.b16 %v361
    %v854 = vunpack.c.l.b16 %v362
    %v855 = vunpack.c.h.b16 %v362
    %v856 = vunpack.c.l.b16 %v363
    %v857 = vunpack.c.h.b16 %v363
    %v858 = vunpack.c.l.b16 %v364
    %v859 = vunpack.c.h.b16 %v364
    %v860 = vunpack.c.l.b16 %v365
    %v861 = vunpack.c.h.b16 %v365
    %v862 = vunpack.c.l.b16 %v366
    %v863 = vunpack.c.h.b16 %v366
    %v864 = vunpack.c.l.b16 %v367
    %v865 = vunpack.c.h.b16 %v367
    %v866 = vunpack.c.l.b16 %v368
    %v867 = vunpack.c.h.b16 %v368
    %v868 = vunpack.c.l.b16 %v369
    %v869 = vunpack.c.h.b16 %v369
    %v870 = vunpack.c.l.b16 %v370
    %v871 = vunpack.c.h.b16 %v370
    %v872 = vunpack.c.l.b16 %v371
    %v873 = vunpack.c.h.b16 %v371
    %v874 = vunpack.c.l.b16 %v372
    %v875 = vunpack.c.h.b16 %v372
    %v876 = vunpack.c.l.b16 %v373
    %v877 = vunpack.c.h.b16 %v373
    %v878 = vunpack.c.l.b16 %v374
    %v879 = vunpack.c.h.b16 %v374
    %v880 = vunpack.c.l.b16 %v375
    %v881 = vunpack.c.h.b16 %v375
    %v882 = vunpack.c.l.b16 %v376
    %v883 = vunpack.c.h.b16 %v376
    %v884 = vunpack.c.l.b16 %v377
    %v885 = vunpack.c.h.b16 %v377
    %v886 = vunpack.c.l.b16 %v378
    %v887 = vunpack.c.h.b16 %v378
    %v888 = vunpack.c.l.b16 %v379
    %v889 = vunpack.c.h.b16 %v379
    %v890 = vunpack.c.l.b16 %v380
    %v891 = vunpack.c.h.b16 %v380
    %v892 = vunpack.c.l.b16 %v381
    %v893 = vunpack.c.h.b16 %v381
    %v894 = vunpack.c.l.b16 %v382
    %v895 = vunpack.c.h.b16 %v382
    %v896 = vunpack.c.l.b16 %v383
    %v897 = vunpack.c.h.b16 %v383
    %v898 = vunpack.c.l.b16 %v384
    %v899 = vunpack.c.h.b16 %v384
    %v900 = vunpack.c.l.b16 %v385
    %v901 = vunpack.c.h.b16 %v385
    %v902 = vunpack.c.l.b16 %v386
    %v903 = vunpack.c.h.b16 %v386
    %v904 = vunpack.c.l.b16 %v387
    %v905 = vunpack.c.h.b16 %v387
    %v906 = vunpack.c.l.b16 %v388
    %v907 = vunpack.c.h.b16 %v388
    %v908 = vunpack.c.l.b16 %v389
    %v909 = vunpack.c.h.b16 %v389
    %v910 = vunpack.c.l.b16 %v390
    %v911 = vunpack.c.h.b16 %v390
    %v912 = vunpack.c.l.b16 %v391
    %v913 = vunpack.c.h.b16 %v391
    %v914 = vunpack.c.l.b16 %v392
    %v915 = vunpack.c.h.b16 %v392
    %v916 = vunpack.c.l.b16 %v393
    %v917 = vunpack.c.h.b16 %v393
    %v918 = vunpack.c.l.b16 %v394
    %v919 = vunpack.c.h.b16 %v394
    %v920 = vunpack.c.l.b16 %v395
    %v921 = vunpack.c.h.b16 %v395
    %v922 = vunpack.c.l.b16 %v396
    %v923 = vunpack.c.h.b16 %v396
    %v924 = vunpack.c.l.b16 %v397
    %v925 = vunpack.c.h.b16 %v397
    %v926 = vunpack.c.l.b16 %v398
    %v927 = vunpack.c.h.b16 %v398
    %v928 = vunpack.c.l.b16 %v399
    %v929 = vunpack.c.h.b16 %v399
    %v930 = vunpack.c.l.b16 %v400
    %v931 = vunpack.c.h.b16 %v400
    %v932 = vunpack.c.l.b16 %v401
    %v933 = vunpack.c.h.b16 %v401
    %v934 = vunpack.c.l.b16 %v402
    %v935 = vunpack.c.h.b16 %v402
    %v936 = vunpack.c.l.b16 %v403
    %v937 = vunpack.c.h.b16 %v403
    %v938 = vunpack.c.l.b16 %v404
    %v939 = vunpack.c.h.b16 %v404
    %v940 = vunpack.c.l.b16 %v405
    %v941 = vunpack.c.h.b16 %v405
    %v942 = vunpack.c.l.b16 %v406
    %v943 = vunpack.c.h.b16 %v406
    %v944 = vunpack.c.l.b16 %v407
    %v945 = vunpack.c.h.b16 %v407
    %v946 = vunpack.c.l.b16 %v408
    %v947 = vunpack.c.h.b16 %v408
    %v948 = vunpack.c.l.b16 %v409
    %v949 = vunpack.c.h.b16 %v409
    %v950 = vunpack.c.l.b16 %v410
    %v951 = vunpack.c.h.b16 %v410
    %v952 = vunpack.c.l.b16 %v411
    %v953 = vunpack.c.h.b16 %v411
    %v954 = vunpack.c.l.b16 %v412
    %v955 = vunpack.c.h.b16 %v412
    %v956 = vunpack.c.l.b16 %v413
    %v957 = vunpack.c.h.b16 %v413
    %v958 = vunpack.c.l.b16 %v414
    %v959 = vunpack.c.h.b16 %v414
    %v960 = vunpack.c.l.b16 %v415
    %v961 = vunpack.c.h.b16 %v415
    %v962 = vunpack.c.l.b16 %v416
    %v963 = vunpack.c.h.b16 %v416
    %v964 = vunpack.c.l.b16 %v417
    %v965 = vunpack.c.h.b16 %v417
    %v966 = vunpack.c.l.b16 %v418
    %v967 = vunpack.c.h.b16 %v418
    %v968 = vunpack.c.l.b16 %v419
    %v969 = vunpack.c.h.b16 %v419
    %v970 = vunpack.c.l.b16 %v420
    %v971 = vunpack.c.h.b16 %v420
    %v972 = vunpack.c.l.b16 %v421
    %v973 = vunpack.c.h.b16 %v421
    %v974 = vunpack.c.l.b16 %v422
    %v975 = vunpack.c.h.b16 %v422
    %v976 = vunpack.c.l.b16 %v423
    %v977 = vunpack.c.h.b16 %v423
    %v978 = vunpack.c.l.b16 %v424
    %v979 = vunpack.c.h.b16 %v424
    %v980 = vunpack.c.l.b16 %v425
    %v981 = vunpack.c.h.b16 %v425
    %v982 = vunpack.c.l.b16 %v426
    %v983 = vunpack.c.h.b16 %v426
    %v984 = vunpack.c.l.b16 %v427
    %v985 = vunpack.c.h.b16 %v427
    %v986 = vunpack.c.l.b16 %v428
    %v987 = vunpack.c.h.b16 %v428
    %v988 = vunpack.c.l.b16 %v429
    %v989 = vunpack.c.h.b16 %v429
    %v990 = vunpack.c.l.b16 %v430
    %v991 = vunpack.c.h.b16 %v430
    %v992 = vunpack.c.l.b16 %v431
    %v993 = vunpack.c.h.b16 %v431
    %v994 = vunpack.c.l.b16 %v432
    %v995 = vunpack.c.h.b16 %v432
    %v996 = vunpack.c.l.b16 %v433
    %v997 = vunpack.c.h.b16 %v433
    %v998 = vunpack.c.l.b16 %v434
    %v999 = vunpack.c.h.b16 %v434
    %v1000 = vunpack.c.l.b16 %v435
    %v1001 = vunpack.c.h.b16 %v435
    %v1002 = vunpack.c.l.b16 %v436
    %v1003 = vunpack.c.h.b16 %v436
    %v1004 = vunpack.c.l.b16 %v437
    %v1005 = vunpack.c.h.b16 %v437
    %v1006 = vunpack.c.l.b16 %v438
    %v1007 = vunpack.c.h.b16 %v438
    %v1008 = vunpack.c.l.b16 %v439
    %v1009 = vunpack.c.h.b16 %v439
    %v1010 = vunpack.c.l.b16 %v440
    %v1011 = vunpack.c.h.b16 %v440
    %v1012 = vunpack.c.l.b16 %v441
    %v1013 = vunpack.c.h.b16 %v441
    %v1014 = vunpack.c.l.b16 %v442
    %v1015 = vunpack.c.h.b16 %v442
    %v1016 = vunpack.c.l.b16 %v443
    %v1017 = vunpack.c.h.b16 %v443
    %v1018 = vunpack.c.l.b16 %v444
    %v1019 = vunpack.c.h.b16 %v444
    %v1020 = vunpack.c.l.b16 %v445
    %v1021 = vunpack.c.h.b16 %v445
    %v1022 = vunpack.c.l.b16 %v446
    %v1023 = vunpack.c.h.b16 %v446
    %v1024 = vunpack.c.l.b16 %v447
    %v1025 = vunpack.c.h.b16 %v447
    %v1026 = vunpack.c.l.b16 %v448
    %v1027 = vunpack.c.h.b16 %v448
    %v1028 = vunpack.c.l.b16 %v449
    %v1029 = vunpack.c.h.b16 %v449
    %v1030 = vunpack.c.l.b16 %v450
    %v1031 = vunpack.c.h.b16 %v450
    %v1032 = vunpack.c.l.b16 %v451
    %v1033 = vunpack.c.h.b16 %v451
    %v1034 = vunpack.c.l.b16 %v452
    %v1035 = vunpack.c.h.b16 %v452
    %v1036 = vunpack.c.l.b16 %v453
    %v1037 = vunpack.c.h.b16 %v453
    %v1038 = vunpack.c.l.b16 %v454
    %v1039 = vunpack.c.h.b16 %v454
    %v1040 = vunpack.c.l.b16 %v455
    %v1041 = vunpack.c.h.b16 %v455
    %v1042 = vunpack.c.l.b16 %v456
    %v1043 = vunpack.c.h.b16 %v456
    %v1044 = vunpack.c.l.b16 %v457
    %v1045 = vunpack.c.h.b16 %v457
    %v1046 = vunpack.c.l.b16 %v458
    %v1047 = vunpack.c.h.b16 %v458
    %v1048 = vunpack.c.l.b16 %v459
    %v1049 = vunpack.c.h.b16 %v459
    %v1050 = vunpack.c.l.b16 %v460
    %v1051 = vunpack.c.h.b16 %v460
    %v1052 = vunpack.c.l.b16 %v461
    %v1053 = vunpack.c.h.b16 %v461
    %v1054 = vunpack.c.l.b16 %v462
    %v1055 = vunpack.c.h.b16 %v462
    %v1056 = vunpack.c.l.b16 %v463
    %v1057 = vunpack.c.h.b16 %v463
    %v1058 = vunpack.c.l.b16 %v464
    %v1059 = vunpack.c.h.b16 %v464
    %v1060 = vunpack.c.l.b16 %v465
    %v1061 = vunpack.c.h.b16 %v465
    %v1062 = vunpack.c.l.b16 %v466
    %v1063 = vunpack.c.h.b16 %v466
    %v1064 = vunpack.c.l.b16 %v467
    %v1065 = vunpack.c.h.b16 %v467
    %v1066 = vpack.c.b16 %v678, %v674
    %v1067 = vpack.c.b16 %v679, %v675
    %v1068 = vpack.c.b16 %v680, %v676
    %v1069 = vpack.c.b16 %v681, %v677
    %v1070 = vpack.c.b16 %v686, %v682
    %v1071 = vpack.c.b16 %v687, %v683
    %v1072 = vpack.c.b16 %v688, %v684
    %v1073 = vpack.c.b16 %v689, %v685
    %v1074 = vpack.c.b16 %v694, %v690
    %v1075 = vpack.c.b16 %v695, %v691
    %v1076 = vpack.c.b16 %v696, %v692
    %v1077 = vpack.c.b16 %v697, %v693
    %v1078 = vpack.c.b16 %v702, %v698
    %v1079 = vpack.c.b16 %v703, %v699
    %v1080 = vpack.c.b16 %v704, %v700
    %v1081 = vpack.c.b16 %v705, %v701
    %v1082 = vpack.c.b16 %v710, %v706
    %v1083 = vpack.c.b16 %v711, %v707
    %v1084 = vpack.c.b16 %v712, %v708
    %v1085 = vpack.c.b16 %v713, %v709
    %v1086 = vpack.c.b16 %v718, %v714
    %v1087 = vpack.c.b16 %v719, %v715
    %v1088 = vpack.c.b16 %v720, %v716
    %v1089 = vpack.c.b16 %v721, %v717
    %v1090 = vpack.c.b16 %v726, %v722
    %v1091 = vpack.c.b16 %v727, %v723
    %v1092 = vpack.c.b16 %v728, %v724
    %v1093 = vpack.c.b16 %v729, %v725
    %v1094 = vpack.c.b16 %v734, %v730
    %v1095 = vpack.c.b16 %v735, %v731
    %v1096 = vpack.c.b16 %v736, %v732
    %v1097 = vpack.c.b16 %v737, %v733
    %v1098 = vpack.c.b16 %v742, %v738
    %v1099 = vpack.c.b16 %v743, %v739
    %v1100 = vpack.c.b16 %v744, %v740
    %v1101 = vpack.c.b16 %v745, %v741
    %v1102 = vpack.c.b16 %v750, %v746
    %v1103 = vpack.c.b16 %v751, %v747
    %v1104 = vpack.c.b16 %v752, %v748
    %v1105 = vpack.c.b16 %v753, %v749
    %v1106 = vpack.c.b16 %v758, %v754
    %v1107 = vpack.c.b16 %v759, %v755
    %v1108 = vpack.c.b16 %v760, %v756
    %v1109 = vpack.c.b16 %v761, %v757
    %v1110 = vpack.c.b16 %v766, %v762
    %v1111 = vpack.c.b16 %v767, %v763
    %v1112 = vpack.c.b16 %v768, %v764
    %v1113 = vpack.c.b16 %v769, %v765
    %v1114 = vpack.c.b16 %v774, %v770
    %v1115 = vpack.c.b16 %v775, %v771
    %v1116 = vpack.c.b16 %v776, %v772
    %v1117 = vpack.c.b16 %v777, %v773
    %v1118 = vpack.c.b16 %v782, %v778
    %v1119 = vpack.c.b16 %v783, %v779
    %v1120 = vpack.c.b16 %v784, %v780
    %v1121 = vpack.c.b16 %v785, %v781
    %v1122 = vpack.c.b16 %v790, %v786
    %v1123 = vpack.c.b16 %v791, %v787
    %v1124 = vpack.c.b16 %v792, %v788
    %v1125 = vpack.c.b16 %v793, %v789
    %v1126 = vpack.c.b16 %v798, %v794
    %v1127 = vpack.c.b16 %v799, %v795
    %v1128 = vpack.c.b16 %v800, %v796
    %v1129 = vpack.c.b16 %v801, %v797
    %v1130 = vpack.c.b16 %v806, %v802
    %v1131 = vpack.c.b16 %v807, %v803
    %v1132 = vpack.c.b16 %v808, %v804
    %v1133 = vpack.c.b16 %v809, %v805
    %v1134 = vpack.c.b16 %v814, %v810
    %v1135 = vpack.c.b16 %v815, %v811
    %v1136 = vpack.c.b16 %v816, %v812
    %v1137 = vpack.c.b16 %v817, %v813
    %v1138 = vpack.c.b16 %v822, %v818
    %v1139 = vpack.c.b16 %v823, %v819
    %v1140 = vpack.c.b16 %v824, %v820
    %v1141 = vpack.c.b16 %v825, %v821
    %v1142 = vpack.c.b16 %v830, %v826
    %v1143 = vpack.c.b16 %v831, %v827
    %v1144 = vpack.c.b16 %v832, %v828
    %v1145 = vpack.c.b16 %v833, %v829
    %v1146 = vpack.c.b16 %v838, %v834
    %v1147 = vpack.c.b16 %v839, %v835
    %v1148 = vpack.c.b16 %v840, %v836
    %v1149 = vpack.c.b16 %v841, %v837
    %v1150 = vpack.c.b16 %v846, %v842
    %v1151 = vpack.c.b16 %v847, %v843
    %v1152 = vpack.c.b16 %v848, %v844
    %v1153 = vpack.c.b16 %v849, %v845
    %v1154 = vpack.c.b16 %v854, %v850
    %v1155 = vpack.c.b16 %v855, %v851
    %v1156 = vpack.c.b16 %v856, %v852
    %v1157 = vpack.c.b16 %v857, %v853
    %v1158 = vpack.c.b16 %v862, %v858
    %v1159 = vpack.c.b16 %v863, %v859
    %v1160 = vpack.c.b16 %v864, %v860
    %v1161 = vpack.c.b16 %v865, %v861
    %v1162 = vpack.c.b16 %v870, %v866
    %v1163 = vpack.c.b16 %v871, %v867
    %v1164 = vpack.c.b16 %v872, %v868
    %v1165 = vpack.c.b16 %v873, %v869
    %v1166 = vpack.c.b16 %v878, %v874
    %v1167 = vpack.c.b16 %v879, %v875
    %v1168 = vpack.c.b16 %v880, %v876
    %v1169 = vpack.c.b16 %v881, %v877
    %v1170 = vpack.c.b16 %v886, %v882
    %v1171 = vpack.c.b16 %v887, %v883
    %v1172 = vpack.c.b16 %v888, %v884
    %v1173 = vpack.c.b16 %v889, %v885
    %v1174 = vpack.c.b16 %v894, %v890
    %v1175 = vpack.c.b16 %v895, %v891
    %v1176 = vpack.c.b16 %v896, %v892
    %v1177 = vpack.c.b16 %v897, %v893
    %v1178 = vpack.c.b16 %v902, %v898
    %v1179 = vpack.c.b16 %v903, %v899
    %v1180 = vpack.c.b16 %v904, %v900
    %v1181 = vpack.c.b16 %v905, %v901
    %v1182 = vpack.c.b16 %v910, %v906
    %v1183 = vpack.c.b16 %v911, %v907
    %v1184 = vpack.c.b16 %v912, %v908
    %v1185 = vpack.c.b16 %v913, %v909
    %v1186 = vpack.c.b16 %v918, %v914
    %v1187 = vpack.c.b16 %v919, %v915
    %v1188 = vpack.c.b16 %v920, %v916
    %v1189 = vpack.c.b16 %v921, %v917
    %v1190 = vpack.c.b16 %v926, %v922
    %v1191 = vpack.c.b16 %v927, %v923
    %v1192 = vpack.c.b16 %v928, %v924
    %v1193 = vpack.c.b16 %v929, %v925
    %v1194 = vpack.c.b16 %v934, %v930
    %v1195 = vpack.c.b16 %v935, %v931
    %v1196 = vpack.c.b16 %v936, %v932
    %v1197 = vpack.c.b16 %v937, %v933
    %v1198 = vpack.c.b16 %v942, %v938
    %v1199 = vpack.c.b16 %v943, %v939
    %v1200 = vpack.c.b16 %v944, %v940
    %v1201 = vpack.c.b16 %v945, %v941
    %v1202 = vpack.c.b16 %v950, %v946
    %v1203 = vpack.c.b16 %v951, %v947
    %v1204 = vpack.c.b16 %v952, %v948
    %v1205 = vpack.c.b16 %v953, %v949
    %v1206 = vpack.c.b16 %v958, %v954
    %v1207 = vpack.c.b16 %v959, %v955
    %v1208 = vpack.c.b16 %v960, %v956
    %v1209 = vpack.c.b16 %v961, %v957
    %v1210 = vpack.c.b16 %v966, %v962
    %v1211 = vpack.c.b16 %v967, %v963
    %v1212 = vpack.c.b16 %v968, %v964
    %v1213 = vpack.c.b16 %v969, %v965
    %v1214 = vpack.c.b16 %v974, %v970
    %v1215 = vpack.c.b16 %v975, %v971
    %v1216 = vpack.c.b16 %v976, %v972
    %v1217 = vpack.c.b16 %v977, %v973
    %v1218 = vpack.c.b16 %v982, %v978
    %v1219 = vpack.c.b16 %v983, %v979
    %v1220 = vpack.c.b16 %v984, %v980
    %v1221 = vpack.c.b16 %v985, %v981
    %v1222 = vpack.c.b16 %v990, %v986
    %v1223 = vpack.c.b16 %v991, %v987
    %v1224 = vpack.c.b16 %v992, %v988
    %v1225 = vpack.c.b16 %v993, %v989
    %v1226 = vpack.c.b16 %v998, %v994
    %v1227 = vpack.c.b16 %v999, %v995
    %v1228 = vpack.c.b16 %v1000, %v996
    %v1229 = vpack.c.b16 %v1001, %v997
    %v1230 = vpack.c.b16 %v1006, %v1002
    %v1231 = vpack.c.b16 %v1007, %v1003
    %v1232 = vpack.c.b16 %v1008, %v1004
    %v1233 = vpack.c.b16 %v1009, %v1005
    %v1234 = vpack.c.b16 %v1014, %v1010
    %v1235 = vpack.c.b16 %v1015, %v1011
    %v1236 = vpack.c.b16 %v1016, %v1012
    %v1237 = vpack.c.b16 %v1017, %v1013
    %v1238 = vpack.c.b16 %v1022, %v1018
    %v1239 = vpack.c.b16 %v1023, %v1019
    %v1240 = vpack.c.b16 %v1024, %v1020
    %v1241 = vpack.c.b16 %v1025, %v1021
    %v1242 = vpack.c.b16 %v1030, %v1026
    %v1243 = vpack.c.b16 %v1031, %v1027
    %v1244 = vpack.c.b16 %v1032, %v1028
    %v1245 = vpack.c.b16 %v1033, %v1029
    %v1246 = vpack.c.b16 %v1038, %v1034
    %v1247 = vpack.c.b16 %v1039, %v1035
    %v1248 = vpack.c.b16 %v1040, %v1036
    %v1249 = vpack.c.b16 %v1041, %v1037
    %v1250 = vpack.c.b16 %v1046, %v1042
    %v1251 = vpack.c.b16 %v1047, %v1043
    %v1252 = vpack.c.b16 %v1048, %v1044
    %v1253 = vpack.c.b16 %v1049, %v1045
    %v1254 = vpack.c.b16 %v1054, %v1050
    %v1255 = vpack.c.b16 %v1055, %v1051
    %v1256 = vpack.c.b16 %v1056, %v1052
    %v1257 = vpack.c.b16 %v1057, %v1053
    %v1258 = vpack.c.b16 %v1062, %v1058
    %v1259 = vpack.c.b16 %v1063, %v1059
    %v1260 = vpack.c.b16 %v1064, %v1060
    %v1261 = vpack.c.b16 %v1065, %v1061
    %vm1458 = vcmask 130048
    %v1460 = vsel %vm1458, %v222, 0
    %v1463 = vsel %vm1458, %v229, 0
    %v1466 = vsel %vm1458, %v236, 0
    %v1469 = vsel %vm1458, %v243, 0
    %v1472 = vsel %vm1458, %v250, 0
    %v1475 = vsel %vm1458, %v257, 0
    %v1478 = vsel %vm1458, %v264, 0
    %v1481 = vsel %vm1458, %v271, 0
    %1483 = vmatpush.bf16.msra.mxu0 %v1094
    %1484 = vmatpush.bf16.msra.mxu0 %v1090
    %1485 = vmatpush.bf16.msra.mxu0 %v1086
    %1486 = vmatpush.bf16.msra.mxu0 %v1082
    %1487 = vmatpush.bf16.msra.mxu0 %v1078
    %1488 = vmatpush.bf16.msra.mxu0 %v1074
    %1489 = vmatpush.bf16.msra.mxu0 %v1070
    %1490 = vmatpush.bf16.msra.mxu0 %v1066
    %1491 = vmatmul.bf16.gmra.mxu0 %v216
    %v1492 = vpop.f32.mrf.mxu0
    %v1493 = vadd.f32 %v470, %v1492
    %v1494 = vpop.f32.mrf.mxu0
    %v1495 = vadd.f32 %v470, %v1494
    %1496 = vmatmul.bf16.gmra.mxu0 %v223
    %v1497 = vpop.f32.mrf.mxu0
    %v1498 = vadd.f32 %v470, %v1497
    %v1499 = vpop.f32.mrf.mxu0
    %v1500 = vadd.f32 %v470, %v1499
    %1501 = vmatmul.bf16.gmra.mxu0 %v230
    %v1502 = vpop.f32.mrf.mxu0
    %v1503 = vadd.f32 %v470, %v1502
    %v1504 = vpop.f32.mrf.mxu0
    %v1505 = vadd.f32 %v470, %v1504
    %1506 = vmatmul.bf16.gmra.mxu0 %v237
    %v1507 = vpop.f32.mrf.mxu0
    %v1508 = vadd.f32 %v470, %v1507
    %v1509 = vpop.f32.mrf.mxu0
    %v1510 = vadd.f32 %v470, %v1509
    %1511 = vmatmul.bf16.gmra.mxu0 %v244
    %v1512 = vpop.f32.mrf.mxu0
    %v1513 = vadd.f32 %v470, %v1512
    %v1514 = vpop.f32.mrf.mxu0
    %v1515 = vadd.f32 %v470, %v1514
    %1516 = vmatmul.bf16.gmra.mxu0 %v251
    %v1517 = vpop.f32.mrf.mxu0
    %v1518 = vadd.f32 %v470, %v1517
    %v1519 = vpop.f32.mrf.mxu0
    %v1520 = vadd.f32 %v470, %v1519
    %1521 = vmatmul.bf16.gmra.mxu0 %v258
    %v1522 = vpop.f32.mrf.mxu0
    %v1523 = vadd.f32 %v470, %v1522
    %v1524 = vpop.f32.mrf.mxu0
    %v1525 = vadd.f32 %v470, %v1524
    %1526 = vmatmul.bf16.gmra.mxu0 %v265
    %v1527 = vpop.f32.mrf.mxu0
    %v1528 = vadd.f32 %v470, %v1527
    %v1529 = vpop.f32.mrf.mxu0
    %v1530 = vadd.f32 %v470, %v1529
    %1531 = vdwg.mxu0
    %1532 = vmatpush.bf16.msra.mxu0 %v1126
    %1533 = vmatpush.bf16.msra.mxu0 %v1122
    %1534 = vmatpush.bf16.msra.mxu0 %v1118
    %1535 = vmatpush.bf16.msra.mxu0 %v1114
    %1536 = vmatpush.bf16.msra.mxu0 %v1110
    %1537 = vmatpush.bf16.msra.mxu0 %v1106
    %1538 = vmatpush.bf16.msra.mxu0 %v1102
    %1539 = vmatpush.bf16.msra.mxu0 %v1098
    %1540 = vmatmul.bf16.gmra.mxu0 %v217
    %v1541 = vpop.f32.mrf.mxu0
    %v1542 = vadd.f32 %v1493, %v1541
    %v1543 = vpop.f32.mrf.mxu0
    %v1544 = vadd.f32 %v1495, %v1543
    %1545 = vmatmul.bf16.gmra.mxu0 %v224
    %v1546 = vpop.f32.mrf.mxu0
    %v1547 = vadd.f32 %v1498, %v1546
    %v1548 = vpop.f32.mrf.mxu0
    %v1549 = vadd.f32 %v1500, %v1548
    %1550 = vmatmul.bf16.gmra.mxu0 %v231
    %v1551 = vpop.f32.mrf.mxu0
    %v1552 = vadd.f32 %v1503, %v1551
    %v1553 = vpop.f32.mrf.mxu0
    %v1554 = vadd.f32 %v1505, %v1553
    %1555 = vmatmul.bf16.gmra.mxu0 %v238
    %v1556 = vpop.f32.mrf.mxu0
    %v1557 = vadd.f32 %v1508, %v1556
    %v1558 = vpop.f32.mrf.mxu0
    %v1559 = vadd.f32 %v1510, %v1558
    %1560 = vmatmul.bf16.gmra.mxu0 %v245
    %v1561 = vpop.f32.mrf.mxu0
    %v1562 = vadd.f32 %v1513, %v1561
    %v1563 = vpop.f32.mrf.mxu0
    %v1564 = vadd.f32 %v1515, %v1563
    %1565 = vmatmul.bf16.gmra.mxu0 %v252
    %v1566 = vpop.f32.mrf.mxu0
    %v1567 = vadd.f32 %v1518, %v1566
    %v1568 = vpop.f32.mrf.mxu0
    %v1569 = vadd.f32 %v1520, %v1568
    %1570 = vmatmul.bf16.gmra.mxu0 %v259
    %v1571 = vpop.f32.mrf.mxu0
    %v1572 = vadd.f32 %v1523, %v1571
    %v1573 = vpop.f32.mrf.mxu0
    %v1574 = vadd.f32 %v1525, %v1573
    %1575 = vmatmul.bf16.gmra.mxu0 %v266
    %v1576 = vpop.f32.mrf.mxu0
    %v1577 = vadd.f32 %v1528, %v1576
    %v1578 = vpop.f32.mrf.mxu0
    %v1579 = vadd.f32 %v1530, %v1578
    %1580 = vdwg.mxu0
    %1581 = vmatpush.bf16.msra.mxu0 %v1158
    %1582 = vmatpush.bf16.msra.mxu0 %v1154
    %1583 = vmatpush.bf16.msra.mxu0 %v1150
    %1584 = vmatpush.bf16.msra.mxu0 %v1146
    %1585 = vmatpush.bf16.msra.mxu0 %v1142
    %1586 = vmatpush.bf16.msra.mxu0 %v1138
    %1587 = vmatpush.bf16.msra.mxu0 %v1134
    %1588 = vmatpush.bf16.msra.mxu0 %v1130
    %1589 = vmatmul.bf16.gmra.mxu0 %v218
    %v1590 = vpop.f32.mrf.mxu0
    %v1591 = vadd.f32 %v1542, %v1590
    %v1592 = vpop.f32.mrf.mxu0
    %v1593 = vadd.f32 %v1544, %v1592
    %1594 = vmatmul.bf16.gmra.mxu0 %v225
    %v1595 = vpop.f32.mrf.mxu0
    %v1596 = vadd.f32 %v1547, %v1595
    %v1597 = vpop.f32.mrf.mxu0
    %v1598 = vadd.f32 %v1549, %v1597
    %1599 = vmatmul.bf16.gmra.mxu0 %v232
    %v1600 = vpop.f32.mrf.mxu0
    %v1601 = vadd.f32 %v1552, %v1600
    %v1602 = vpop.f32.mrf.mxu0
    %v1603 = vadd.f32 %v1554, %v1602
    %1604 = vmatmul.bf16.gmra.mxu0 %v239
    %v1605 = vpop.f32.mrf.mxu0
    %v1606 = vadd.f32 %v1557, %v1605
    %v1607 = vpop.f32.mrf.mxu0
    %v1608 = vadd.f32 %v1559, %v1607
    %1609 = vmatmul.bf16.gmra.mxu0 %v246
    %v1610 = vpop.f32.mrf.mxu0
    %v1611 = vadd.f32 %v1562, %v1610
    %v1612 = vpop.f32.mrf.mxu0
    %v1613 = vadd.f32 %v1564, %v1612
    %1614 = vmatmul.bf16.gmra.mxu0 %v253
    %v1615 = vpop.f32.mrf.mxu0
    %v1616 = vadd.f32 %v1567, %v1615
    %v1617 = vpop.f32.mrf.mxu0
    %v1618 = vadd.f32 %v1569, %v1617
    %1619 = vmatmul.bf16.gmra.mxu0 %v260
    %v1620 = vpop.f32.mrf.mxu0
    %v1621 = vadd.f32 %v1572, %v1620
    %v1622 = vpop.f32.mrf.mxu0
    %v1623 = vadd.f32 %v1574, %v1622
    %1624 = vmatmul.bf16.gmra.mxu0 %v267
    %v1625 = vpop.f32.mrf.mxu0
    %v1626 = vadd.f32 %v1577, %v1625
    %v1627 = vpop.f32.mrf.mxu0
    %v1628 = vadd.f32 %v1579, %v1627
    %1629 = vdwg.mxu0
    %1630 = vmatpush.bf16.msra.mxu0 %v1190
    %1631 = vmatpush.bf16.msra.mxu0 %v1186
    %1632 = vmatpush.bf16.msra.mxu0 %v1182
    %1633 = vmatpush.bf16.msra.mxu0 %v1178
    %1634 = vmatpush.bf16.msra.mxu0 %v1174
    %1635 = vmatpush.bf16.msra.mxu0 %v1170
    %1636 = vmatpush.bf16.msra.mxu0 %v1166
    %1637 = vmatpush.bf16.msra.mxu0 %v1162
    %1638 = vmatmul.bf16.gmra.mxu0 %v219
    %v1639 = vpop.f32.mrf.mxu0
    %v1640 = vadd.f32 %v1591, %v1639
    %v1641 = vpop.f32.mrf.mxu0
    %v1642 = vadd.f32 %v1593, %v1641
    %1643 = vmatmul.bf16.gmra.mxu0 %v226
    %v1644 = vpop.f32.mrf.mxu0
    %v1645 = vadd.f32 %v1596, %v1644
    %v1646 = vpop.f32.mrf.mxu0
    %v1647 = vadd.f32 %v1598, %v1646
    %1648 = vmatmul.bf16.gmra.mxu0 %v233
    %v1649 = vpop.f32.mrf.mxu0
    %v1650 = vadd.f32 %v1601, %v1649
    %v1651 = vpop.f32.mrf.mxu0
    %v1652 = vadd.f32 %v1603, %v1651
    %1653 = vmatmul.bf16.gmra.mxu0 %v240
    %v1654 = vpop.f32.mrf.mxu0
    %v1655 = vadd.f32 %v1606, %v1654
    %v1656 = vpop.f32.mrf.mxu0
    %v1657 = vadd.f32 %v1608, %v1656
    %1658 = vmatmul.bf16.gmra.mxu0 %v247
    %v1659 = vpop.f32.mrf.mxu0
    %v1660 = vadd.f32 %v1611, %v1659
    %v1661 = vpop.f32.mrf.mxu0
    %v1662 = vadd.f32 %v1613, %v1661
    %1663 = vmatmul.bf16.gmra.mxu0 %v254
    %v1664 = vpop.f32.mrf.mxu0
    %v1665 = vadd.f32 %v1616, %v1664
    %v1666 = vpop.f32.mrf.mxu0
    %v1667 = vadd.f32 %v1618, %v1666
    %1668 = vmatmul.bf16.gmra.mxu0 %v261
    %v1669 = vpop.f32.mrf.mxu0
    %v1670 = vadd.f32 %v1621, %v1669
    %v1671 = vpop.f32.mrf.mxu0
    %v1672 = vadd.f32 %v1623, %v1671
    %1673 = vmatmul.bf16.gmra.mxu0 %v268
    %v1674 = vpop.f32.mrf.mxu0
    %v1675 = vadd.f32 %v1626, %v1674
    %v1676 = vpop.f32.mrf.mxu0
    %v1677 = vadd.f32 %v1628, %v1676
    %1678 = vdwg.mxu0
    %1679 = vmatpush.bf16.msra.mxu0 %v1222
    %1680 = vmatpush.bf16.msra.mxu0 %v1218
    %1681 = vmatpush.bf16.msra.mxu0 %v1214
    %1682 = vmatpush.bf16.msra.mxu0 %v1210
    %1683 = vmatpush.bf16.msra.mxu0 %v1206
    %1684 = vmatpush.bf16.msra.mxu0 %v1202
    %1685 = vmatpush.bf16.msra.mxu0 %v1198
    %1686 = vmatpush.bf16.msra.mxu0 %v1194
    %1687 = vmatmul.bf16.gmra.mxu0 %v220
    %v1688 = vpop.f32.mrf.mxu0
    %v1689 = vadd.f32 %v1640, %v1688
    %v1690 = vpop.f32.mrf.mxu0
    %v1691 = vadd.f32 %v1642, %v1690
    %1692 = vmatmul.bf16.gmra.mxu0 %v227
    %v1693 = vpop.f32.mrf.mxu0
    %v1694 = vadd.f32 %v1645, %v1693
    %v1695 = vpop.f32.mrf.mxu0
    %v1696 = vadd.f32 %v1647, %v1695
    %1697 = vmatmul.bf16.gmra.mxu0 %v234
    %v1698 = vpop.f32.mrf.mxu0
    %v1699 = vadd.f32 %v1650, %v1698
    %v1700 = vpop.f32.mrf.mxu0
    %v1701 = vadd.f32 %v1652, %v1700
    %1702 = vmatmul.bf16.gmra.mxu0 %v241
    %v1703 = vpop.f32.mrf.mxu0
    %v1704 = vadd.f32 %v1655, %v1703
    %v1705 = vpop.f32.mrf.mxu0
    %v1706 = vadd.f32 %v1657, %v1705
    %1707 = vmatmul.bf16.gmra.mxu0 %v248
    %v1708 = vpop.f32.mrf.mxu0
    %v1709 = vadd.f32 %v1660, %v1708
    %v1710 = vpop.f32.mrf.mxu0
    %v1711 = vadd.f32 %v1662, %v1710
    %1712 = vmatmul.bf16.gmra.mxu0 %v255
    %v1713 = vpop.f32.mrf.mxu0
    %v1714 = vadd.f32 %v1665, %v1713
    %v1715 = vpop.f32.mrf.mxu0
    %v1716 = vadd.f32 %v1667, %v1715
    %1717 = vmatmul.bf16.gmra.mxu0 %v262
    %v1718 = vpop.f32.mrf.mxu0
    %v1719 = vadd.f32 %v1670, %v1718
    %v1720 = vpop.f32.mrf.mxu0
    %v1721 = vadd.f32 %v1672, %v1720
    %1722 = vmatmul.bf16.gmra.mxu0 %v269
    %v1723 = vpop.f32.mrf.mxu0
    %v1724 = vadd.f32 %v1675, %v1723
    %v1725 = vpop.f32.mrf.mxu0
    %v1726 = vadd.f32 %v1677, %v1725
    %1727 = vdwg.mxu0
    %1728 = vmatpush.bf16.msra.mxu0 %v1254
    %1729 = vmatpush.bf16.msra.mxu0 %v1250
    %1730 = vmatpush.bf16.msra.mxu0 %v1246
    %1731 = vmatpush.bf16.msra.mxu0 %v1242
    %1732 = vmatpush.bf16.msra.mxu0 %v1238
    %1733 = vmatpush.bf16.msra.mxu0 %v1234
    %1734 = vmatpush.bf16.msra.mxu0 %v1230
    %1735 = vmatpush.bf16.msra.mxu0 %v1226
    %1736 = vmatmul.bf16.gmra.mxu0 %v221
    %v1737 = vpop.f32.mrf.mxu0
    %v1738 = vadd.f32 %v1689, %v1737
    %v1739 = vpop.f32.mrf.mxu0
    %v1740 = vadd.f32 %v1691, %v1739
    %1741 = vmatmul.bf16.gmra.mxu0 %v228
    %v1742 = vpop.f32.mrf.mxu0
    %v1743 = vadd.f32 %v1694, %v1742
    %v1744 = vpop.f32.mrf.mxu0
    %v1745 = vadd.f32 %v1696, %v1744
    %1746 = vmatmul.bf16.gmra.mxu0 %v235
    %v1747 = vpop.f32.mrf.mxu0
    %v1748 = vadd.f32 %v1699, %v1747
    %v1749 = vpop.f32.mrf.mxu0
    %v1750 = vadd.f32 %v1701, %v1749
    %1751 = vmatmul.bf16.gmra.mxu0 %v242
    %v1752 = vpop.f32.mrf.mxu0
    %v1753 = vadd.f32 %v1704, %v1752
    %v1754 = vpop.f32.mrf.mxu0
    %v1755 = vadd.f32 %v1706, %v1754
    %1756 = vmatmul.bf16.gmra.mxu0 %v249
    %v1757 = vpop.f32.mrf.mxu0
    %v1758 = vadd.f32 %v1709, %v1757
    %v1759 = vpop.f32.mrf.mxu0
    %v1760 = vadd.f32 %v1711, %v1759
    %1761 = vmatmul.bf16.gmra.mxu0 %v256
    %v1762 = vpop.f32.mrf.mxu0
    %v1763 = vadd.f32 %v1714, %v1762
    %v1764 = vpop.f32.mrf.mxu0
    %v1765 = vadd.f32 %v1716, %v1764
    %1766 = vmatmul.bf16.gmra.mxu0 %v263
    %v1767 = vpop.f32.mrf.mxu0
    %v1768 = vadd.f32 %v1719, %v1767
    %v1769 = vpop.f32.mrf.mxu0
    %v1770 = vadd.f32 %v1721, %v1769
    %1771 = vmatmul.bf16.gmra.mxu0 %v270
    %v1772 = vpop.f32.mrf.mxu0
    %v1773 = vadd.f32 %v1724, %v1772
    %v1774 = vpop.f32.mrf.mxu0
    %v1775 = vadd.f32 %v1726, %v1774
    %1776 = vdwg.mxu0
    %1777 = vmatpush.bf16.msra.mxu0 0
    %1778 = vmatpush.bf16.msra.mxu0 0
    %1779 = vmatpush.bf16.msra.mxu0 0
    %1780 = vmatpush.bf16.msra.mxu0 0
    %1781 = vmatpush.bf16.msra.mxu0 0
    %1782 = vmatpush.bf16.msra.mxu0 0
    %1783 = vmatpush.bf16.msra.mxu0 0
    %1784 = vmatpush.bf16.msra.mxu0 %v1258
    %1785 = vmatmul.bf16.gmra.mxu0 %v1460
    %v1786 = vpop.f32.mrf.mxu0
    %v1787 = vadd.f32 %v1738, %v1786
    %v1788 = vpop.f32.mrf.mxu0
    %v1789 = vadd.f32 %v1740, %v1788
    %1790 = vmatmul.bf16.gmra.mxu0 %v1463
    %v1791 = vpop.f32.mrf.mxu0
    %v1792 = vadd.f32 %v1743, %v1791
    %v1793 = vpop.f32.mrf.mxu0
    %v1794 = vadd.f32 %v1745, %v1793
    %1795 = vmatmul.bf16.gmra.mxu0 %v1466
    %v1796 = vpop.f32.mrf.mxu0
    %v1797 = vadd.f32 %v1748, %v1796
    %v1798 = vpop.f32.mrf.mxu0
    %v1799 = vadd.f32 %v1750, %v1798
    %1800 = vmatmul.bf16.gmra.mxu0 %v1469
    %v1801 = vpop.f32.mrf.mxu0
    %v1802 = vadd.f32 %v1753, %v1801
    %v1803 = vpop.f32.mrf.mxu0
    %v1804 = vadd.f32 %v1755, %v1803
    %1805 = vmatmul.bf16.gmra.mxu0 %v1472
    %v1806 = vpop.f32.mrf.mxu0
    %v1807 = vadd.f32 %v1758, %v1806
    %v1808 = vpop.f32.mrf.mxu0
    %v1809 = vadd.f32 %v1760, %v1808
    %1810 = vmatmul.bf16.gmra.mxu0 %v1475
    %v1811 = vpop.f32.mrf.mxu0
    %v1812 = vadd.f32 %v1763, %v1811
    %v1813 = vpop.f32.mrf.mxu0
    %v1814 = vadd.f32 %v1765, %v1813
    %1815 = vmatmul.bf16.gmra.mxu0 %v1478
    %v1816 = vpop.f32.mrf.mxu0
    %v1817 = vadd.f32 %v1768, %v1816
    %v1818 = vpop.f32.mrf.mxu0
    %v1819 = vadd.f32 %v1770, %v1818
    %1820 = vmatmul.bf16.gmra.mxu0 %v1481
    %v1821 = vpop.f32.mrf.mxu0
    %v1822 = vadd.f32 %v1773, %v1821
    %v1823 = vpop.f32.mrf.mxu0
    %v1824 = vadd.f32 %v1775, %v1823
    %1825 = vdwg.mxu0
    %1826 = vmatpush.bf16.msra.mxu0 %v1095
    %1827 = vmatpush.bf16.msra.mxu0 %v1091
    %1828 = vmatpush.bf16.msra.mxu0 %v1087
    %1829 = vmatpush.bf16.msra.mxu0 %v1083
    %1830 = vmatpush.bf16.msra.mxu0 %v1079
    %1831 = vmatpush.bf16.msra.mxu0 %v1075
    %1832 = vmatpush.bf16.msra.mxu0 %v1071
    %1833 = vmatpush.bf16.msra.mxu0 %v1067
    %1834 = vmatmul.bf16.gmra.mxu0 %v216
    %v1835 = vpop.f32.mrf.mxu0
    %v1836 = vadd.f32 %v471, %v1835
    %v1837 = vpop.f32.mrf.mxu0
    %v1838 = vadd.f32 %v471, %v1837
    %1839 = vmatmul.bf16.gmra.mxu0 %v223
    %v1840 = vpop.f32.mrf.mxu0
    %v1841 = vadd.f32 %v471, %v1840
    %v1842 = vpop.f32.mrf.mxu0
    %v1843 = vadd.f32 %v471, %v1842
    %1844 = vmatmul.bf16.gmra.mxu0 %v230
    %v1845 = vpop.f32.mrf.mxu0
    %v1846 = vadd.f32 %v471, %v1845
    %v1847 = vpop.f32.mrf.mxu0
    %v1848 = vadd.f32 %v471, %v1847
    %1849 = vmatmul.bf16.gmra.mxu0 %v237
    %v1850 = vpop.f32.mrf.mxu0
    %v1851 = vadd.f32 %v471, %v1850
    %v1852 = vpop.f32.mrf.mxu0
    %v1853 = vadd.f32 %v471, %v1852
    %1854 = vmatmul.bf16.gmra.mxu0 %v244
    %v1855 = vpop.f32.mrf.mxu0
    %v1856 = vadd.f32 %v471, %v1855
    %v1857 = vpop.f32.mrf.mxu0
    %v1858 = vadd.f32 %v471, %v1857
    %1859 = vmatmul.bf16.gmra.mxu0 %v251
    %v1860 = vpop.f32.mrf.mxu0
    %v1861 = vadd.f32 %v471, %v1860
    %v1862 = vpop.f32.mrf.mxu0
    %v1863 = vadd.f32 %v471, %v1862
    %1864 = vmatmul.bf16.gmra.mxu0 %v258
    %v1865 = vpop.f32.mrf.mxu0
    %v1866 = vadd.f32 %v471, %v1865
    %v1867 = vpop.f32.mrf.mxu0
    %v1868 = vadd.f32 %v471, %v1867
    %1869 = vmatmul.bf16.gmra.mxu0 %v265
    %v1870 = vpop.f32.mrf.mxu0
    %v1871 = vadd.f32 %v471, %v1870
    %v1872 = vpop.f32.mrf.mxu0
    %v1873 = vadd.f32 %v471, %v1872
    %1874 = vdwg.mxu0
    %1875 = vmatpush.bf16.msra.mxu0 %v1127
    %1876 = vmatpush.bf16.msra.mxu0 %v1123
    %1877 = vmatpush.bf16.msra.mxu0 %v1119
    %1878 = vmatpush.bf16.msra.mxu0 %v1115
    %1879 = vmatpush.bf16.msra.mxu0 %v1111
    %1880 = vmatpush.bf16.msra.mxu0 %v1107
    %1881 = vmatpush.bf16.msra.mxu0 %v1103
    %1882 = vmatpush.bf16.msra.mxu0 %v1099
    %1883 = vmatmul.bf16.gmra.mxu0 %v217
    %v1884 = vpop.f32.mrf.mxu0
    %v1885 = vadd.f32 %v1836, %v1884
    %v1886 = vpop.f32.mrf.mxu0
    %v1887 = vadd.f32 %v1838, %v1886
    %1888 = vmatmul.bf16.gmra.mxu0 %v224
    %v1889 = vpop.f32.mrf.mxu0
    %v1890 = vadd.f32 %v1841, %v1889
    %v1891 = vpop.f32.mrf.mxu0
    %v1892 = vadd.f32 %v1843, %v1891
    %1893 = vmatmul.bf16.gmra.mxu0 %v231
    %v1894 = vpop.f32.mrf.mxu0
    %v1895 = vadd.f32 %v1846, %v1894
    %v1896 = vpop.f32.mrf.mxu0
    %v1897 = vadd.f32 %v1848, %v1896
    %1898 = vmatmul.bf16.gmra.mxu0 %v238
    %v1899 = vpop.f32.mrf.mxu0
    %v1900 = vadd.f32 %v1851, %v1899
    %v1901 = vpop.f32.mrf.mxu0
    %v1902 = vadd.f32 %v1853, %v1901
    %1903 = vmatmul.bf16.gmra.mxu0 %v245
    %v1904 = vpop.f32.mrf.mxu0
    %v1905 = vadd.f32 %v1856, %v1904
    %v1906 = vpop.f32.mrf.mxu0
    %v1907 = vadd.f32 %v1858, %v1906
    %1908 = vmatmul.bf16.gmra.mxu0 %v252
    %v1909 = vpop.f32.mrf.mxu0
    %v1910 = vadd.f32 %v1861, %v1909
    %v1911 = vpop.f32.mrf.mxu0
    %v1912 = vadd.f32 %v1863, %v1911
    %1913 = vmatmul.bf16.gmra.mxu0 %v259
    %v1914 = vpop.f32.mrf.mxu0
    %v1915 = vadd.f32 %v1866, %v1914
    %v1916 = vpop.f32.mrf.mxu0
    %v1917 = vadd.f32 %v1868, %v1916
    %1918 = vmatmul.bf16.gmra.mxu0 %v266
    %v1919 = vpop.f32.mrf.mxu0
    %v1920 = vadd.f32 %v1871, %v1919
    %v1921 = vpop.f32.mrf.mxu0
    %v1922 = vadd.f32 %v1873, %v1921
    %1923 = vdwg.mxu0
    %1924 = vmatpush.bf16.msra.mxu0 %v1159
    %1925 = vmatpush.bf16.msra.mxu0 %v1155
    %1926 = vmatpush.bf16.msra.mxu0 %v1151
    %1927 = vmatpush.bf16.msra.mxu0 %v1147
    %1928 = vmatpush.bf16.msra.mxu0 %v1143
    %1929 = vmatpush.bf16.msra.mxu0 %v1139
    %1930 = vmatpush.bf16.msra.mxu0 %v1135
    %1931 = vmatpush.bf16.msra.mxu0 %v1131
    %1932 = vmatmul.bf16.gmra.mxu0 %v218
    %v1933 = vpop.f32.mrf.mxu0
    %v1934 = vadd.f32 %v1885, %v1933
    %v1935 = vpop.f32.mrf.mxu0
    %v1936 = vadd.f32 %v1887, %v1935
    %1937 = vmatmul.bf16.gmra.mxu0 %v225
    %v1938 = vpop.f32.mrf.mxu0
    %v1939 = vadd.f32 %v1890, %v1938
    %v1940 = vpop.f32.mrf.mxu0
    %v1941 = vadd.f32 %v1892, %v1940
    %1942 = vmatmul.bf16.gmra.mxu0 %v232
    %v1943 = vpop.f32.mrf.mxu0
    %v1944 = vadd.f32 %v1895, %v1943
    %v1945 = vpop.f32.mrf.mxu0
    %v1946 = vadd.f32 %v1897, %v1945
    %1947 = vmatmul.bf16.gmra.mxu0 %v239
    %v1948 = vpop.f32.mrf.mxu0
    %v1949 = vadd.f32 %v1900, %v1948
    %v1950 = vpop.f32.mrf.mxu0
    %v1951 = vadd.f32 %v1902, %v1950
    %1952 = vmatmul.bf16.gmra.mxu0 %v246
    %v1953 = vpop.f32.mrf.mxu0
    %v1954 = vadd.f32 %v1905, %v1953
    %v1955 = vpop.f32.mrf.mxu0
    %v1956 = vadd.f32 %v1907, %v1955
    %1957 = vmatmul.bf16.gmra.mxu0 %v253
    %v1958 = vpop.f32.mrf.mxu0
    %v1959 = vadd.f32 %v1910, %v1958
    %v1960 = vpop.f32.mrf.mxu0
    %v1961 = vadd.f32 %v1912, %v1960
    %1962 = vmatmul.bf16.gmra.mxu0 %v260
    %v1963 = vpop.f32.mrf.mxu0
    %v1964 = vadd.f32 %v1915, %v1963
    %v1965 = vpop.f32.mrf.mxu0
    %v1966 = vadd.f32 %v1917, %v1965
    %1967 = vmatmul.bf16.gmra.mxu0 %v267
    %v1968 = vpop.f32.mrf.mxu0
    %v1969 = vadd.f32 %v1920, %v1968
    %v1970 = vpop.f32.mrf.mxu0
    %v1971 = vadd.f32 %v1922, %v1970
    %1972 = vdwg.mxu0
    %1973 = vmatpush.bf16.msra.mxu0 %v1191
    %1974 = vmatpush.bf16.msra.mxu0 %v1187
    %1975 = vmatpush.bf16.msra.mxu0 %v1183
    %1976 = vmatpush.bf16.msra.mxu0 %v1179
    %1977 = vmatpush.bf16.msra.mxu0 %v1175
    %1978 = vmatpush.bf16.msra.mxu0 %v1171
    %1979 = vmatpush.bf16.msra.mxu0 %v1167
    %1980 = vmatpush.bf16.msra.mxu0 %v1163
    %1981 = vmatmul.bf16.gmra.mxu0 %v219
    %v1982 = vpop.f32.mrf.mxu0
    %v1983 = vadd.f32 %v1934, %v1982
    %v1984 = vpop.f32.mrf.mxu0
    %v1985 = vadd.f32 %v1936, %v1984
    %1986 = vmatmul.bf16.gmra.mxu0 %v226
    %v1987 = vpop.f32.mrf.mxu0
    %v1988 = vadd.f32 %v1939, %v1987
    %v1989 = vpop.f32.mrf.mxu0
    %v1990 = vadd.f32 %v1941, %v1989
    %1991 = vmatmul.bf16.gmra.mxu0 %v233
    %v1992 = vpop.f32.mrf.mxu0
    %v1993 = vadd.f32 %v1944, %v1992
    %v1994 = vpop.f32.mrf.mxu0
    %v1995 = vadd.f32 %v1946, %v1994
    %1996 = vmatmul.bf16.gmra.mxu0 %v240
    %v1997 = vpop.f32.mrf.mxu0
    %v1998 = vadd.f32 %v1949, %v1997
    %v1999 = vpop.f32.mrf.mxu0
    %v2000 = vadd.f32 %v1951, %v1999
    %2001 = vmatmul.bf16.gmra.mxu0 %v247
    %v2002 = vpop.f32.mrf.mxu0
    %v2003 = vadd.f32 %v1954, %v2002
    %v2004 = vpop.f32.mrf.mxu0
    %v2005 = vadd.f32 %v1956, %v2004
    %2006 = vmatmul.bf16.gmra.mxu0 %v254
    %v2007 = vpop.f32.mrf.mxu0
    %v2008 = vadd.f32 %v1959, %v2007
    %v2009 = vpop.f32.mrf.mxu0
    %v2010 = vadd.f32 %v1961, %v2009
    %2011 = vmatmul.bf16.gmra.mxu0 %v261
    %v2012 = vpop.f32.mrf.mxu0
    %v2013 = vadd.f32 %v1964, %v2012
    %v2014 = vpop.f32.mrf.mxu0
    %v2015 = vadd.f32 %v1966, %v2014
    %2016 = vmatmul.bf16.gmra.mxu0 %v268
    %v2017 = vpop.f32.mrf.mxu0
    %v2018 = vadd.f32 %v1969, %v2017
    %v2019 = vpop.f32.mrf.mxu0
    %v2020 = vadd.f32 %v1971, %v2019
    %2021 = vdwg.mxu0
    %2022 = vmatpush.bf16.msra.mxu0 %v1223
    %2023 = vmatpush.bf16.msra.mxu0 %v1219
    %2024 = vmatpush.bf16.msra.mxu0 %v1215
    %2025 = vmatpush.bf16.msra.mxu0 %v1211
    %2026 = vmatpush.bf16.msra.mxu0 %v1207
    %2027 = vmatpush.bf16.msra.mxu0 %v1203
    %2028 = vmatpush.bf16.msra.mxu0 %v1199
    %2029 = vmatpush.bf16.msra.mxu0 %v1195
    %2030 = vmatmul.bf16.gmra.mxu0 %v220
    %v2031 = vpop.f32.mrf.mxu0
    %v2032 = vadd.f32 %v1983, %v2031
    %v2033 = vpop.f32.mrf.mxu0
    %v2034 = vadd.f32 %v1985, %v2033
    %2035 = vmatmul.bf16.gmra.mxu0 %v227
    %v2036 = vpop.f32.mrf.mxu0
    %v2037 = vadd.f32 %v1988, %v2036
    %v2038 = vpop.f32.mrf.mxu0
    %v2039 = vadd.f32 %v1990, %v2038
    %2040 = vmatmul.bf16.gmra.mxu0 %v234
    %v2041 = vpop.f32.mrf.mxu0
    %v2042 = vadd.f32 %v1993, %v2041
    %v2043 = vpop.f32.mrf.mxu0
    %v2044 = vadd.f32 %v1995, %v2043
    %2045 = vmatmul.bf16.gmra.mxu0 %v241
    %v2046 = vpop.f32.mrf.mxu0
    %v2047 = vadd.f32 %v1998, %v2046
    %v2048 = vpop.f32.mrf.mxu0
    %v2049 = vadd.f32 %v2000, %v2048
    %2050 = vmatmul.bf16.gmra.mxu0 %v248
    %v2051 = vpop.f32.mrf.mxu0
    %v2052 = vadd.f32 %v2003, %v2051
    %v2053 = vpop.f32.mrf.mxu0
    %v2054 = vadd.f32 %v2005, %v2053
    %2055 = vmatmul.bf16.gmra.mxu0 %v255
    %v2056 = vpop.f32.mrf.mxu0
    %v2057 = vadd.f32 %v2008, %v2056
    %v2058 = vpop.f32.mrf.mxu0
    %v2059 = vadd.f32 %v2010, %v2058
    %2060 = vmatmul.bf16.gmra.mxu0 %v262
    %v2061 = vpop.f32.mrf.mxu0
    %v2062 = vadd.f32 %v2013, %v2061
    %v2063 = vpop.f32.mrf.mxu0
    %v2064 = vadd.f32 %v2015, %v2063
    %2065 = vmatmul.bf16.gmra.mxu0 %v269
    %v2066 = vpop.f32.mrf.mxu0
    %v2067 = vadd.f32 %v2018, %v2066
    %v2068 = vpop.f32.mrf.mxu0
    %v2069 = vadd.f32 %v2020, %v2068
    %2070 = vdwg.mxu0
    %2071 = vmatpush.bf16.msra.mxu0 %v1255
    %2072 = vmatpush.bf16.msra.mxu0 %v1251
    %2073 = vmatpush.bf16.msra.mxu0 %v1247
    %2074 = vmatpush.bf16.msra.mxu0 %v1243
    %2075 = vmatpush.bf16.msra.mxu0 %v1239
    %2076 = vmatpush.bf16.msra.mxu0 %v1235
    %2077 = vmatpush.bf16.msra.mxu0 %v1231
    %2078 = vmatpush.bf16.msra.mxu0 %v1227
    %2079 = vmatmul.bf16.gmra.mxu0 %v221
    %v2080 = vpop.f32.mrf.mxu0
    %v2081 = vadd.f32 %v2032, %v2080
    %v2082 = vpop.f32.mrf.mxu0
    %v2083 = vadd.f32 %v2034, %v2082
    %2084 = vmatmul.bf16.gmra.mxu0 %v228
    %v2085 = vpop.f32.mrf.mxu0
    %v2086 = vadd.f32 %v2037, %v2085
    %v2087 = vpop.f32.mrf.mxu0
    %v2088 = vadd.f32 %v2039, %v2087
    %2089 = vmatmul.bf16.gmra.mxu0 %v235
    %v2090 = vpop.f32.mrf.mxu0
    %v2091 = vadd.f32 %v2042, %v2090
    %v2092 = vpop.f32.mrf.mxu0
    %v2093 = vadd.f32 %v2044, %v2092
    %2094 = vmatmul.bf16.gmra.mxu0 %v242
    %v2095 = vpop.f32.mrf.mxu0
    %v2096 = vadd.f32 %v2047, %v2095
    %v2097 = vpop.f32.mrf.mxu0
    %v2098 = vadd.f32 %v2049, %v2097
    %2099 = vmatmul.bf16.gmra.mxu0 %v249
    %v2100 = vpop.f32.mrf.mxu0
    %v2101 = vadd.f32 %v2052, %v2100
    %v2102 = vpop.f32.mrf.mxu0
    %v2103 = vadd.f32 %v2054, %v2102
    %2104 = vmatmul.bf16.gmra.mxu0 %v256
    %v2105 = vpop.f32.mrf.mxu0
    %v2106 = vadd.f32 %v2057, %v2105
    %v2107 = vpop.f32.mrf.mxu0
    %v2108 = vadd.f32 %v2059, %v2107
    %2109 = vmatmul.bf16.gmra.mxu0 %v263
    %v2110 = vpop.f32.mrf.mxu0
    %v2111 = vadd.f32 %v2062, %v2110
    %v2112 = vpop.f32.mrf.mxu0
    %v2113 = vadd.f32 %v2064, %v2112
    %2114 = vmatmul.bf16.gmra.mxu0 %v270
    %v2115 = vpop.f32.mrf.mxu0
    %v2116 = vadd.f32 %v2067, %v2115
    %v2117 = vpop.f32.mrf.mxu0
    %v2118 = vadd.f32 %v2069, %v2117
    %2119 = vdwg.mxu0
    %2120 = vmatpush.bf16.msra.mxu0 0
    %2121 = vmatpush.bf16.msra.mxu0 0
    %2122 = vmatpush.bf16.msra.mxu0 0
    %2123 = vmatpush.bf16.msra.mxu0 0
    %2124 = vmatpush.bf16.msra.mxu0 0
    %2125 = vmatpush.bf16.msra.mxu0 0
    %2126 = vmatpush.bf16.msra.mxu0 0
    %2127 = vmatpush.bf16.msra.mxu0 %v1259
    %2128 = vmatmul.bf16.gmra.mxu0 %v1460
    %v2129 = vpop.f32.mrf.mxu0
    %v2130 = vadd.f32 %v2081, %v2129
    %v2131 = vpop.f32.mrf.mxu0
    %v2132 = vadd.f32 %v2083, %v2131
    %2133 = vmatmul.bf16.gmra.mxu0 %v1463
    %v2134 = vpop.f32.mrf.mxu0
    %v2135 = vadd.f32 %v2086, %v2134
    %v2136 = vpop.f32.mrf.mxu0
    %v2137 = vadd.f32 %v2088, %v2136
    %2138 = vmatmul.bf16.gmra.mxu0 %v1466
    %v2139 = vpop.f32.mrf.mxu0
    %v2140 = vadd.f32 %v2091, %v2139
    %v2141 = vpop.f32.mrf.mxu0
    %v2142 = vadd.f32 %v2093, %v2141
    %2143 = vmatmul.bf16.gmra.mxu0 %v1469
    %v2144 = vpop.f32.mrf.mxu0
    %v2145 = vadd.f32 %v2096, %v2144
    %v2146 = vpop.f32.mrf.mxu0
    %v2147 = vadd.f32 %v2098, %v2146
    %2148 = vmatmul.bf16.gmra.mxu0 %v1472
    %v2149 = vpop.f32.mrf.mxu0
    %v2150 = vadd.f32 %v2101, %v2149
    %v2151 = vpop.f32.mrf.mxu0
    %v2152 = vadd.f32 %v2103, %v2151
    %2153 = vmatmul.bf16.gmra.mxu0 %v1475
    %v2154 = vpop.f32.mrf.mxu0
    %v2155 = vadd.f32 %v2106, %v2154
    %v2156 = vpop.f32.mrf.mxu0
    %v2157 = vadd.f32 %v2108, %v2156
    %2158 = vmatmul.bf16.gmra.mxu0 %v1478
    %v2159 = vpop.f32.mrf.mxu0
    %v2160 = vadd.f32 %v2111, %v2159
    %v2161 = vpop.f32.mrf.mxu0
    %v2162 = vadd.f32 %v2113, %v2161
    %2163 = vmatmul.bf16.gmra.mxu0 %v1481
    %v2164 = vpop.f32.mrf.mxu0
    %v2165 = vadd.f32 %v2116, %v2164
    %v2166 = vpop.f32.mrf.mxu0
    %v2167 = vadd.f32 %v2118, %v2166
    %2168 = vdwg.mxu0
    %2169 = vmatpush.bf16.msra.mxu0 %v1096
    %2170 = vmatpush.bf16.msra.mxu0 %v1092
    %2171 = vmatpush.bf16.msra.mxu0 %v1088
    %2172 = vmatpush.bf16.msra.mxu0 %v1084
    %2173 = vmatpush.bf16.msra.mxu0 %v1080
    %2174 = vmatpush.bf16.msra.mxu0 %v1076
    %2175 = vmatpush.bf16.msra.mxu0 %v1072
    %2176 = vmatpush.bf16.msra.mxu0 %v1068
    %2177 = vmatmul.bf16.gmra.mxu0 %v216
    %v2178 = vpop.f32.mrf.mxu0
    %v2179 = vadd.f32 %v472, %v2178
    %v2180 = vpop.f32.mrf.mxu0
    %v2181 = vadd.f32 %v472, %v2180
    %2182 = vmatmul.bf16.gmra.mxu0 %v223
    %v2183 = vpop.f32.mrf.mxu0
    %v2184 = vadd.f32 %v472, %v2183
    %v2185 = vpop.f32.mrf.mxu0
    %v2186 = vadd.f32 %v472, %v2185
    %2187 = vmatmul.bf16.gmra.mxu0 %v230
    %v2188 = vpop.f32.mrf.mxu0
    %v2189 = vadd.f32 %v472, %v2188
    %v2190 = vpop.f32.mrf.mxu0
    %v2191 = vadd.f32 %v472, %v2190
    %2192 = vmatmul.bf16.gmra.mxu0 %v237
    %v2193 = vpop.f32.mrf.mxu0
    %v2194 = vadd.f32 %v472, %v2193
    %v2195 = vpop.f32.mrf.mxu0
    %v2196 = vadd.f32 %v472, %v2195
    %2197 = vmatmul.bf16.gmra.mxu0 %v244
    %v2198 = vpop.f32.mrf.mxu0
    %v2199 = vadd.f32 %v472, %v2198
    %v2200 = vpop.f32.mrf.mxu0
    %v2201 = vadd.f32 %v472, %v2200
    %2202 = vmatmul.bf16.gmra.mxu0 %v251
    %v2203 = vpop.f32.mrf.mxu0
    %v2204 = vadd.f32 %v472, %v2203
    %v2205 = vpop.f32.mrf.mxu0
    %v2206 = vadd.f32 %v472, %v2205
    %2207 = vmatmul.bf16.gmra.mxu0 %v258
    %v2208 = vpop.f32.mrf.mxu0
    %v2209 = vadd.f32 %v472, %v2208
    %v2210 = vpop.f32.mrf.mxu0
    %v2211 = vadd.f32 %v472, %v2210
    %2212 = vmatmul.bf16.gmra.mxu0 %v265
    %v2213 = vpop.f32.mrf.mxu0
    %v2214 = vadd.f32 %v472, %v2213
    %v2215 = vpop.f32.mrf.mxu0
    %v2216 = vadd.f32 %v472, %v2215
    %2217 = vdwg.mxu0
    %2218 = vmatpush.bf16.msra.mxu0 %v1128
    %2219 = vmatpush.bf16.msra.mxu0 %v1124
    %2220 = vmatpush.bf16.msra.mxu0 %v1120
    %2221 = vmatpush.bf16.msra.mxu0 %v1116
    %2222 = vmatpush.bf16.msra.mxu0 %v1112
    %2223 = vmatpush.bf16.msra.mxu0 %v1108
    %2224 = vmatpush.bf16.msra.mxu0 %v1104
    %2225 = vmatpush.bf16.msra.mxu0 %v1100
    %2226 = vmatmul.bf16.gmra.mxu0 %v217
    %v2227 = vpop.f32.mrf.mxu0
    %v2228 = vadd.f32 %v2179, %v2227
    %v2229 = vpop.f32.mrf.mxu0
    %v2230 = vadd.f32 %v2181, %v2229
    %2231 = vmatmul.bf16.gmra.mxu0 %v224
    %v2232 = vpop.f32.mrf.mxu0
    %v2233 = vadd.f32 %v2184, %v2232
    %v2234 = vpop.f32.mrf.mxu0
    %v2235 = vadd.f32 %v2186, %v2234
    %2236 = vmatmul.bf16.gmra.mxu0 %v231
    %v2237 = vpop.f32.mrf.mxu0
    %v2238 = vadd.f32 %v2189, %v2237
    %v2239 = vpop.f32.mrf.mxu0
    %v2240 = vadd.f32 %v2191, %v2239
    %2241 = vmatmul.bf16.gmra.mxu0 %v238
    %v2242 = vpop.f32.mrf.mxu0
    %v2243 = vadd.f32 %v2194, %v2242
    %v2244 = vpop.f32.mrf.mxu0
    %v2245 = vadd.f32 %v2196, %v2244
    %2246 = vmatmul.bf16.gmra.mxu0 %v245
    %v2247 = vpop.f32.mrf.mxu0
    %v2248 = vadd.f32 %v2199, %v2247
    %v2249 = vpop.f32.mrf.mxu0
    %v2250 = vadd.f32 %v2201, %v2249
    %2251 = vmatmul.bf16.gmra.mxu0 %v252
    %v2252 = vpop.f32.mrf.mxu0
    %v2253 = vadd.f32 %v2204, %v2252
    %v2254 = vpop.f32.mrf.mxu0
    %v2255 = vadd.f32 %v2206, %v2254
    %2256 = vmatmul.bf16.gmra.mxu0 %v259
    %v2257 = vpop.f32.mrf.mxu0
    %v2258 = vadd.f32 %v2209, %v2257
    %v2259 = vpop.f32.mrf.mxu0
    %v2260 = vadd.f32 %v2211, %v2259
    %2261 = vmatmul.bf16.gmra.mxu0 %v266
    %v2262 = vpop.f32.mrf.mxu0
    %v2263 = vadd.f32 %v2214, %v2262
    %v2264 = vpop.f32.mrf.mxu0
    %v2265 = vadd.f32 %v2216, %v2264
    %2266 = vdwg.mxu0
    %2267 = vmatpush.bf16.msra.mxu0 %v1160
    %2268 = vmatpush.bf16.msra.mxu0 %v1156
    %2269 = vmatpush.bf16.msra.mxu0 %v1152
    %2270 = vmatpush.bf16.msra.mxu0 %v1148
    %2271 = vmatpush.bf16.msra.mxu0 %v1144
    %2272 = vmatpush.bf16.msra.mxu0 %v1140
    %2273 = vmatpush.bf16.msra.mxu0 %v1136
    %2274 = vmatpush.bf16.msra.mxu0 %v1132
    %2275 = vmatmul.bf16.gmra.mxu0 %v218
    %v2276 = vpop.f32.mrf.mxu0
    %v2277 = vadd.f32 %v2228, %v2276
    %v2278 = vpop.f32.mrf.mxu0
    %v2279 = vadd.f32 %v2230, %v2278
    %2280 = vmatmul.bf16.gmra.mxu0 %v225
    %v2281 = vpop.f32.mrf.mxu0
    %v2282 = vadd.f32 %v2233, %v2281
    %v2283 = vpop.f32.mrf.mxu0
    %v2284 = vadd.f32 %v2235, %v2283
    %2285 = vmatmul.bf16.gmra.mxu0 %v232
    %v2286 = vpop.f32.mrf.mxu0
    %v2287 = vadd.f32 %v2238, %v2286
    %v2288 = vpop.f32.mrf.mxu0
    %v2289 = vadd.f32 %v2240, %v2288
    %2290 = vmatmul.bf16.gmra.mxu0 %v239
    %v2291 = vpop.f32.mrf.mxu0
    %v2292 = vadd.f32 %v2243, %v2291
    %v2293 = vpop.f32.mrf.mxu0
    %v2294 = vadd.f32 %v2245, %v2293
    %2295 = vmatmul.bf16.gmra.mxu0 %v246
    %v2296 = vpop.f32.mrf.mxu0
    %v2297 = vadd.f32 %v2248, %v2296
    %v2298 = vpop.f32.mrf.mxu0
    %v2299 = vadd.f32 %v2250, %v2298
    %2300 = vmatmul.bf16.gmra.mxu0 %v253
    %v2301 = vpop.f32.mrf.mxu0
    %v2302 = vadd.f32 %v2253, %v2301
    %v2303 = vpop.f32.mrf.mxu0
    %v2304 = vadd.f32 %v2255, %v2303
    %2305 = vmatmul.bf16.gmra.mxu0 %v260
    %v2306 = vpop.f32.mrf.mxu0
    %v2307 = vadd.f32 %v2258, %v2306
    %v2308 = vpop.f32.mrf.mxu0
    %v2309 = vadd.f32 %v2260, %v2308
    %2310 = vmatmul.bf16.gmra.mxu0 %v267
    %v2311 = vpop.f32.mrf.mxu0
    %v2312 = vadd.f32 %v2263, %v2311
    %v2313 = vpop.f32.mrf.mxu0
    %v2314 = vadd.f32 %v2265, %v2313
    %2315 = vdwg.mxu0
    %2316 = vmatpush.bf16.msra.mxu0 %v1192
    %2317 = vmatpush.bf16.msra.mxu0 %v1188
    %2318 = vmatpush.bf16.msra.mxu0 %v1184
    %2319 = vmatpush.bf16.msra.mxu0 %v1180
    %2320 = vmatpush.bf16.msra.mxu0 %v1176
    %2321 = vmatpush.bf16.msra.mxu0 %v1172
    %2322 = vmatpush.bf16.msra.mxu0 %v1168
    %2323 = vmatpush.bf16.msra.mxu0 %v1164
    %2324 = vmatmul.bf16.gmra.mxu0 %v219
    %v2325 = vpop.f32.mrf.mxu0
    %v2326 = vadd.f32 %v2277, %v2325
    %v2327 = vpop.f32.mrf.mxu0
    %v2328 = vadd.f32 %v2279, %v2327
    %2329 = vmatmul.bf16.gmra.mxu0 %v226
    %v2330 = vpop.f32.mrf.mxu0
    %v2331 = vadd.f32 %v2282, %v2330
    %v2332 = vpop.f32.mrf.mxu0
    %v2333 = vadd.f32 %v2284, %v2332
    %2334 = vmatmul.bf16.gmra.mxu0 %v233
    %v2335 = vpop.f32.mrf.mxu0
    %v2336 = vadd.f32 %v2287, %v2335
    %v2337 = vpop.f32.mrf.mxu0
    %v2338 = vadd.f32 %v2289, %v2337
    %2339 = vmatmul.bf16.gmra.mxu0 %v240
    %v2340 = vpop.f32.mrf.mxu0
    %v2341 = vadd.f32 %v2292, %v2340
    %v2342 = vpop.f32.mrf.mxu0
    %v2343 = vadd.f32 %v2294, %v2342
    %2344 = vmatmul.bf16.gmra.mxu0 %v247
    %v2345 = vpop.f32.mrf.mxu0
    %v2346 = vadd.f32 %v2297, %v2345
    %v2347 = vpop.f32.mrf.mxu0
    %v2348 = vadd.f32 %v2299, %v2347
    %2349 = vmatmul.bf16.gmra.mxu0 %v254
    %v2350 = vpop.f32.mrf.mxu0
    %v2351 = vadd.f32 %v2302, %v2350
    %v2352 = vpop.f32.mrf.mxu0
    %v2353 = vadd.f32 %v2304, %v2352
    %2354 = vmatmul.bf16.gmra.mxu0 %v261
    %v2355 = vpop.f32.mrf.mxu0
    %v2356 = vadd.f32 %v2307, %v2355
    %v2357 = vpop.f32.mrf.mxu0
    %v2358 = vadd.f32 %v2309, %v2357
    %2359 = vmatmul.bf16.gmra.mxu0 %v268
    %v2360 = vpop.f32.mrf.mxu0
    %v2361 = vadd.f32 %v2312, %v2360
    %v2362 = vpop.f32.mrf.mxu0
    %v2363 = vadd.f32 %v2314, %v2362
    %2364 = vdwg.mxu0
    %2365 = vmatpush.bf16.msra.mxu0 %v1224
    %2366 = vmatpush.bf16.msra.mxu0 %v1220
    %2367 = vmatpush.bf16.msra.mxu0 %v1216
    %2368 = vmatpush.bf16.msra.mxu0 %v1212
    %2369 = vmatpush.bf16.msra.mxu0 %v1208
    %2370 = vmatpush.bf16.msra.mxu0 %v1204
    %2371 = vmatpush.bf16.msra.mxu0 %v1200
    %2372 = vmatpush.bf16.msra.mxu0 %v1196
    %2373 = vmatmul.bf16.gmra.mxu0 %v220
    %v2374 = vpop.f32.mrf.mxu0
    %v2375 = vadd.f32 %v2326, %v2374
    %v2376 = vpop.f32.mrf.mxu0
    %v2377 = vadd.f32 %v2328, %v2376
    %2378 = vmatmul.bf16.gmra.mxu0 %v227
    %v2379 = vpop.f32.mrf.mxu0
    %v2380 = vadd.f32 %v2331, %v2379
    %v2381 = vpop.f32.mrf.mxu0
    %v2382 = vadd.f32 %v2333, %v2381
    %2383 = vmatmul.bf16.gmra.mxu0 %v234
    %v2384 = vpop.f32.mrf.mxu0
    %v2385 = vadd.f32 %v2336, %v2384
    %v2386 = vpop.f32.mrf.mxu0
    %v2387 = vadd.f32 %v2338, %v2386
    %2388 = vmatmul.bf16.gmra.mxu0 %v241
    %v2389 = vpop.f32.mrf.mxu0
    %v2390 = vadd.f32 %v2341, %v2389
    %v2391 = vpop.f32.mrf.mxu0
    %v2392 = vadd.f32 %v2343, %v2391
    %2393 = vmatmul.bf16.gmra.mxu0 %v248
    %v2394 = vpop.f32.mrf.mxu0
    %v2395 = vadd.f32 %v2346, %v2394
    %v2396 = vpop.f32.mrf.mxu0
    %v2397 = vadd.f32 %v2348, %v2396
    %2398 = vmatmul.bf16.gmra.mxu0 %v255
    %v2399 = vpop.f32.mrf.mxu0
    %v2400 = vadd.f32 %v2351, %v2399
    %v2401 = vpop.f32.mrf.mxu0
    %v2402 = vadd.f32 %v2353, %v2401
    %2403 = vmatmul.bf16.gmra.mxu0 %v262
    %v2404 = vpop.f32.mrf.mxu0
    %v2405 = vadd.f32 %v2356, %v2404
    %v2406 = vpop.f32.mrf.mxu0
    %v2407 = vadd.f32 %v2358, %v2406
    %2408 = vmatmul.bf16.gmra.mxu0 %v269
    %v2409 = vpop.f32.mrf.mxu0
    %v2410 = vadd.f32 %v2361, %v2409
    %v2411 = vpop.f32.mrf.mxu0
    %v2412 = vadd.f32 %v2363, %v2411
    %2413 = vdwg.mxu0
    %2414 = vmatpush.bf16.msra.mxu0 %v1256
    %2415 = vmatpush.bf16.msra.mxu0 %v1252
    %2416 = vmatpush.bf16.msra.mxu0 %v1248
    %2417 = vmatpush.bf16.msra.mxu0 %v1244
    %2418 = vmatpush.bf16.msra.mxu0 %v1240
    %2419 = vmatpush.bf16.msra.mxu0 %v1236
    %2420 = vmatpush.bf16.msra.mxu0 %v1232
    %2421 = vmatpush.bf16.msra.mxu0 %v1228
    %2422 = vmatmul.bf16.gmra.mxu0 %v221
    %v2423 = vpop.f32.mrf.mxu0
    %v2424 = vadd.f32 %v2375, %v2423
    %v2425 = vpop.f32.mrf.mxu0
    %v2426 = vadd.f32 %v2377, %v2425
    %2427 = vmatmul.bf16.gmra.mxu0 %v228
    %v2428 = vpop.f32.mrf.mxu0
    %v2429 = vadd.f32 %v2380, %v2428
    %v2430 = vpop.f32.mrf.mxu0
    %v2431 = vadd.f32 %v2382, %v2430
    %2432 = vmatmul.bf16.gmra.mxu0 %v235
    %v2433 = vpop.f32.mrf.mxu0
    %v2434 = vadd.f32 %v2385, %v2433
    %v2435 = vpop.f32.mrf.mxu0
    %v2436 = vadd.f32 %v2387, %v2435
    %2437 = vmatmul.bf16.gmra.mxu0 %v242
    %v2438 = vpop.f32.mrf.mxu0
    %v2439 = vadd.f32 %v2390, %v2438
    %v2440 = vpop.f32.mrf.mxu0
    %v2441 = vadd.f32 %v2392, %v2440
    %2442 = vmatmul.bf16.gmra.mxu0 %v249
    %v2443 = vpop.f32.mrf.mxu0
    %v2444 = vadd.f32 %v2395, %v2443
    %v2445 = vpop.f32.mrf.mxu0
    %v2446 = vadd.f32 %v2397, %v2445
    %2447 = vmatmul.bf16.gmra.mxu0 %v256
    %v2448 = vpop.f32.mrf.mxu0
    %v2449 = vadd.f32 %v2400, %v2448
    %v2450 = vpop.f32.mrf.mxu0
    %v2451 = vadd.f32 %v2402, %v2450
    %2452 = vmatmul.bf16.gmra.mxu0 %v263
    %v2453 = vpop.f32.mrf.mxu0
    %v2454 = vadd.f32 %v2405, %v2453
    %v2455 = vpop.f32.mrf.mxu0
    %v2456 = vadd.f32 %v2407, %v2455
    %2457 = vmatmul.bf16.gmra.mxu0 %v270
    %v2458 = vpop.f32.mrf.mxu0
    %v2459 = vadd.f32 %v2410, %v2458
    %v2460 = vpop.f32.mrf.mxu0
    %v2461 = vadd.f32 %v2412, %v2460
    %2462 = vdwg.mxu0
    %2463 = vmatpush.bf16.msra.mxu0 0
    %2464 = vmatpush.bf16.msra.mxu0 0
    %2465 = vmatpush.bf16.msra.mxu0 0
    %2466 = vmatpush.bf16.msra.mxu0 0
    %2467 = vmatpush.bf16.msra.mxu0 0
    %2468 = vmatpush.bf16.msra.mxu0 0
    %2469 = vmatpush.bf16.msra.mxu0 0
    %2470 = vmatpush.bf16.msra.mxu0 %v1260
    %2471 = vmatmul.bf16.gmra.mxu0 %v1460
    %v2472 = vpop.f32.mrf.mxu0
    %v2473 = vadd.f32 %v2424, %v2472
    %v2474 = vpop.f32.mrf.mxu0
    %v2475 = vadd.f32 %v2426, %v2474
    %2476 = vmatmul.bf16.gmra.mxu0 %v1463
    %v2477 = vpop.f32.mrf.mxu0
    %v2478 = vadd.f32 %v2429, %v2477
    %v2479 = vpop.f32.mrf.mxu0
    %v2480 = vadd.f32 %v2431, %v2479
    %2481 = vmatmul.bf16.gmra.mxu0 %v1466
    %v2482 = vpop.f32.mrf.mxu0
    %v2483 = vadd.f32 %v2434, %v2482
    %v2484 = vpop.f32.mrf.mxu0
    %v2485 = vadd.f32 %v2436, %v2484
    %2486 = vmatmul.bf16.gmra.mxu0 %v1469
    %v2487 = vpop.f32.mrf.mxu0
    %v2488 = vadd.f32 %v2439, %v2487
    %v2489 = vpop.f32.mrf.mxu0
    %v2490 = vadd.f32 %v2441, %v2489
    %2491 = vmatmul.bf16.gmra.mxu0 %v1472
    %v2492 = vpop.f32.mrf.mxu0
    %v2493 = vadd.f32 %v2444, %v2492
    %v2494 = vpop.f32.mrf.mxu0
    %v2495 = vadd.f32 %v2446, %v2494
    %2496 = vmatmul.bf16.gmra.mxu0 %v1475
    %v2497 = vpop.f32.mrf.mxu0
    %v2498 = vadd.f32 %v2449, %v2497
    %v2499 = vpop.f32.mrf.mxu0
    %v2500 = vadd.f32 %v2451, %v2499
    %2501 = vmatmul.bf16.gmra.mxu0 %v1478
    %v2502 = vpop.f32.mrf.mxu0
    %v2503 = vadd.f32 %v2454, %v2502
    %v2504 = vpop.f32.mrf.mxu0
    %v2505 = vadd.f32 %v2456, %v2504
    %2506 = vmatmul.bf16.gmra.mxu0 %v1481
    %v2507 = vpop.f32.mrf.mxu0
    %v2508 = vadd.f32 %v2459, %v2507
    %v2509 = vpop.f32.mrf.mxu0
    %v2510 = vadd.f32 %v2461, %v2509
    %2511 = vdwg.mxu0
    %2512 = vmatpush.bf16.msra.mxu0 %v1097
    %2513 = vmatpush.bf16.msra.mxu0 %v1093
    %2514 = vmatpush.bf16.msra.mxu0 %v1089
    %2515 = vmatpush.bf16.msra.mxu0 %v1085
    %2516 = vmatpush.bf16.msra.mxu0 %v1081
    %2517 = vmatpush.bf16.msra.mxu0 %v1077
    %2518 = vmatpush.bf16.msra.mxu0 %v1073
    %2519 = vmatpush.bf16.msra.mxu0 %v1069
    %2520 = vmatmul.bf16.gmra.mxu0 %v216
    %v2521 = vpop.f32.mrf.mxu0
    %v2522 = vadd.f32 %v473, %v2521
    %v2523 = vpop.f32.mrf.mxu0
    %v2524 = vadd.f32 %v473, %v2523
    %2525 = vmatmul.bf16.gmra.mxu0 %v223
    %v2526 = vpop.f32.mrf.mxu0
    %v2527 = vadd.f32 %v473, %v2526
    %v2528 = vpop.f32.mrf.mxu0
    %v2529 = vadd.f32 %v473, %v2528
    %2530 = vmatmul.bf16.gmra.mxu0 %v230
    %v2531 = vpop.f32.mrf.mxu0
    %v2532 = vadd.f32 %v473, %v2531
    %v2533 = vpop.f32.mrf.mxu0
    %v2534 = vadd.f32 %v473, %v2533
    %2535 = vmatmul.bf16.gmra.mxu0 %v237
    %v2536 = vpop.f32.mrf.mxu0
    %v2537 = vadd.f32 %v473, %v2536
    %v2538 = vpop.f32.mrf.mxu0
    %v2539 = vadd.f32 %v473, %v2538
    %2540 = vmatmul.bf16.gmra.mxu0 %v244
    %v2541 = vpop.f32.mrf.mxu0
    %v2542 = vadd.f32 %v473, %v2541
    %v2543 = vpop.f32.mrf.mxu0
    %v2544 = vadd.f32 %v473, %v2543
    %2545 = vmatmul.bf16.gmra.mxu0 %v251
    %v2546 = vpop.f32.mrf.mxu0
    %v2547 = vadd.f32 %v473, %v2546
    %v2548 = vpop.f32.mrf.mxu0
    %v2549 = vadd.f32 %v473, %v2548
    %2550 = vmatmul.bf16.gmra.mxu0 %v258
    %v2551 = vpop.f32.mrf.mxu0
    %v2552 = vadd.f32 %v473, %v2551
    %v2553 = vpop.f32.mrf.mxu0
    %v2554 = vadd.f32 %v473, %v2553
    %2555 = vmatmul.bf16.gmra.mxu0 %v265
    %v2556 = vpop.f32.mrf.mxu0
    %v2557 = vadd.f32 %v473, %v2556
    %v2558 = vpop.f32.mrf.mxu0
    %v2559 = vadd.f32 %v473, %v2558
    %2560 = vdwg.mxu0
    %2561 = vmatpush.bf16.msra.mxu0 %v1129
    %2562 = vmatpush.bf16.msra.mxu0 %v1125
    %2563 = vmatpush.bf16.msra.mxu0 %v1121
    %2564 = vmatpush.bf16.msra.mxu0 %v1117
    %2565 = vmatpush.bf16.msra.mxu0 %v1113
    %2566 = vmatpush.bf16.msra.mxu0 %v1109
    %2567 = vmatpush.bf16.msra.mxu0 %v1105
    %2568 = vmatpush.bf16.msra.mxu0 %v1101
    %2569 = vmatmul.bf16.gmra.mxu0 %v217
    %v2570 = vpop.f32.mrf.mxu0
    %v2571 = vadd.f32 %v2522, %v2570
    %v2572 = vpop.f32.mrf.mxu0
    %v2573 = vadd.f32 %v2524, %v2572
    %2574 = vmatmul.bf16.gmra.mxu0 %v224
    %v2575 = vpop.f32.mrf.mxu0
    %v2576 = vadd.f32 %v2527, %v2575
    %v2577 = vpop.f32.mrf.mxu0
    %v2578 = vadd.f32 %v2529, %v2577
    %2579 = vmatmul.bf16.gmra.mxu0 %v231
    %v2580 = vpop.f32.mrf.mxu0
    %v2581 = vadd.f32 %v2532, %v2580
    %v2582 = vpop.f32.mrf.mxu0
    %v2583 = vadd.f32 %v2534, %v2582
    %2584 = vmatmul.bf16.gmra.mxu0 %v238
    %v2585 = vpop.f32.mrf.mxu0
    %v2586 = vadd.f32 %v2537, %v2585
    %v2587 = vpop.f32.mrf.mxu0
    %v2588 = vadd.f32 %v2539, %v2587
    %2589 = vmatmul.bf16.gmra.mxu0 %v245
    %v2590 = vpop.f32.mrf.mxu0
    %v2591 = vadd.f32 %v2542, %v2590
    %v2592 = vpop.f32.mrf.mxu0
    %v2593 = vadd.f32 %v2544, %v2592
    %2594 = vmatmul.bf16.gmra.mxu0 %v252
    %v2595 = vpop.f32.mrf.mxu0
    %v2596 = vadd.f32 %v2547, %v2595
    %v2597 = vpop.f32.mrf.mxu0
    %v2598 = vadd.f32 %v2549, %v2597
    %2599 = vmatmul.bf16.gmra.mxu0 %v259
    %v2600 = vpop.f32.mrf.mxu0
    %v2601 = vadd.f32 %v2552, %v2600
    %v2602 = vpop.f32.mrf.mxu0
    %v2603 = vadd.f32 %v2554, %v2602
    %2604 = vmatmul.bf16.gmra.mxu0 %v266
    %v2605 = vpop.f32.mrf.mxu0
    %v2606 = vadd.f32 %v2557, %v2605
    %v2607 = vpop.f32.mrf.mxu0
    %v2608 = vadd.f32 %v2559, %v2607
    %2609 = vdwg.mxu0
    %2610 = vmatpush.bf16.msra.mxu0 %v1161
    %2611 = vmatpush.bf16.msra.mxu0 %v1157
    %2612 = vmatpush.bf16.msra.mxu0 %v1153
    %2613 = vmatpush.bf16.msra.mxu0 %v1149
    %2614 = vmatpush.bf16.msra.mxu0 %v1145
    %2615 = vmatpush.bf16.msra.mxu0 %v1141
    %2616 = vmatpush.bf16.msra.mxu0 %v1137
    %2617 = vmatpush.bf16.msra.mxu0 %v1133
    %2618 = vmatmul.bf16.gmra.mxu0 %v218
    %v2619 = vpop.f32.mrf.mxu0
    %v2620 = vadd.f32 %v2571, %v2619
    %v2621 = vpop.f32.mrf.mxu0
    %v2622 = vadd.f32 %v2573, %v2621
    %2623 = vmatmul.bf16.gmra.mxu0 %v225
    %v2624 = vpop.f32.mrf.mxu0
    %v2625 = vadd.f32 %v2576, %v2624
    %v2626 = vpop.f32.mrf.mxu0
    %v2627 = vadd.f32 %v2578, %v2626
    %2628 = vmatmul.bf16.gmra.mxu0 %v232
    %v2629 = vpop.f32.mrf.mxu0
    %v2630 = vadd.f32 %v2581, %v2629
    %v2631 = vpop.f32.mrf.mxu0
    %v2632 = vadd.f32 %v2583, %v2631
    %2633 = vmatmul.bf16.gmra.mxu0 %v239
    %v2634 = vpop.f32.mrf.mxu0
    %v2635 = vadd.f32 %v2586, %v2634
    %v2636 = vpop.f32.mrf.mxu0
    %v2637 = vadd.f32 %v2588, %v2636
    %2638 = vmatmul.bf16.gmra.mxu0 %v246
    %v2639 = vpop.f32.mrf.mxu0
    %v2640 = vadd.f32 %v2591, %v2639
    %v2641 = vpop.f32.mrf.mxu0
    %v2642 = vadd.f32 %v2593, %v2641
    %2643 = vmatmul.bf16.gmra.mxu0 %v253
    %v2644 = vpop.f32.mrf.mxu0
    %v2645 = vadd.f32 %v2596, %v2644
    %v2646 = vpop.f32.mrf.mxu0
    %v2647 = vadd.f32 %v2598, %v2646
    %2648 = vmatmul.bf16.gmra.mxu0 %v260
    %v2649 = vpop.f32.mrf.mxu0
    %v2650 = vadd.f32 %v2601, %v2649
    %v2651 = vpop.f32.mrf.mxu0
    %v2652 = vadd.f32 %v2603, %v2651
    %2653 = vmatmul.bf16.gmra.mxu0 %v267
    %v2654 = vpop.f32.mrf.mxu0
    %v2655 = vadd.f32 %v2606, %v2654
    %v2656 = vpop.f32.mrf.mxu0
    %v2657 = vadd.f32 %v2608, %v2656
    %2658 = vdwg.mxu0
    %2659 = vmatpush.bf16.msra.mxu0 %v1193
    %2660 = vmatpush.bf16.msra.mxu0 %v1189
    %2661 = vmatpush.bf16.msra.mxu0 %v1185
    %2662 = vmatpush.bf16.msra.mxu0 %v1181
    %2663 = vmatpush.bf16.msra.mxu0 %v1177
    %2664 = vmatpush.bf16.msra.mxu0 %v1173
    %2665 = vmatpush.bf16.msra.mxu0 %v1169
    %2666 = vmatpush.bf16.msra.mxu0 %v1165
    %2667 = vmatmul.bf16.gmra.mxu0 %v219
    %v2668 = vpop.f32.mrf.mxu0
    %v2669 = vadd.f32 %v2620, %v2668
    %v2670 = vpop.f32.mrf.mxu0
    %v2671 = vadd.f32 %v2622, %v2670
    %2672 = vmatmul.bf16.gmra.mxu0 %v226
    %v2673 = vpop.f32.mrf.mxu0
    %v2674 = vadd.f32 %v2625, %v2673
    %v2675 = vpop.f32.mrf.mxu0
    %v2676 = vadd.f32 %v2627, %v2675
    %2677 = vmatmul.bf16.gmra.mxu0 %v233
    %v2678 = vpop.f32.mrf.mxu0
    %v2679 = vadd.f32 %v2630, %v2678
    %v2680 = vpop.f32.mrf.mxu0
    %v2681 = vadd.f32 %v2632, %v2680
    %2682 = vmatmul.bf16.gmra.mxu0 %v240
    %v2683 = vpop.f32.mrf.mxu0
    %v2684 = vadd.f32 %v2635, %v2683
    %v2685 = vpop.f32.mrf.mxu0
    %v2686 = vadd.f32 %v2637, %v2685
    %2687 = vmatmul.bf16.gmra.mxu0 %v247
    %v2688 = vpop.f32.mrf.mxu0
    %v2689 = vadd.f32 %v2640, %v2688
    %v2690 = vpop.f32.mrf.mxu0
    %v2691 = vadd.f32 %v2642, %v2690
    %2692 = vmatmul.bf16.gmra.mxu0 %v254
    %v2693 = vpop.f32.mrf.mxu0
    %v2694 = vadd.f32 %v2645, %v2693
    %v2695 = vpop.f32.mrf.mxu0
    %v2696 = vadd.f32 %v2647, %v2695
    %2697 = vmatmul.bf16.gmra.mxu0 %v261
    %v2698 = vpop.f32.mrf.mxu0
    %v2699 = vadd.f32 %v2650, %v2698
    %v2700 = vpop.f32.mrf.mxu0
    %v2701 = vadd.f32 %v2652, %v2700
    %2702 = vmatmul.bf16.gmra.mxu0 %v268
    %v2703 = vpop.f32.mrf.mxu0
    %v2704 = vadd.f32 %v2655, %v2703
    %v2705 = vpop.f32.mrf.mxu0
    %v2706 = vadd.f32 %v2657, %v2705
    %2707 = vdwg.mxu0
    %2708 = vmatpush.bf16.msra.mxu0 %v1225
    %2709 = vmatpush.bf16.msra.mxu0 %v1221
    %2710 = vmatpush.bf16.msra.mxu0 %v1217
    %2711 = vmatpush.bf16.msra.mxu0 %v1213
    %2712 = vmatpush.bf16.msra.mxu0 %v1209
    %2713 = vmatpush.bf16.msra.mxu0 %v1205
    %2714 = vmatpush.bf16.msra.mxu0 %v1201
    %2715 = vmatpush.bf16.msra.mxu0 %v1197
    %2716 = vmatmul.bf16.gmra.mxu0 %v220
    %v2717 = vpop.f32.mrf.mxu0
    %v2718 = vadd.f32 %v2669, %v2717
    %v2719 = vpop.f32.mrf.mxu0
    %v2720 = vadd.f32 %v2671, %v2719
    %2721 = vmatmul.bf16.gmra.mxu0 %v227
    %v2722 = vpop.f32.mrf.mxu0
    %v2723 = vadd.f32 %v2674, %v2722
    %v2724 = vpop.f32.mrf.mxu0
    %v2725 = vadd.f32 %v2676, %v2724
    %2726 = vmatmul.bf16.gmra.mxu0 %v234
    %v2727 = vpop.f32.mrf.mxu0
    %v2728 = vadd.f32 %v2679, %v2727
    %v2729 = vpop.f32.mrf.mxu0
    %v2730 = vadd.f32 %v2681, %v2729
    %2731 = vmatmul.bf16.gmra.mxu0 %v241
    %v2732 = vpop.f32.mrf.mxu0
    %v2733 = vadd.f32 %v2684, %v2732
    %v2734 = vpop.f32.mrf.mxu0
    %v2735 = vadd.f32 %v2686, %v2734
    %2736 = vmatmul.bf16.gmra.mxu0 %v248
    %v2737 = vpop.f32.mrf.mxu0
    %v2738 = vadd.f32 %v2689, %v2737
    %v2739 = vpop.f32.mrf.mxu0
    %v2740 = vadd.f32 %v2691, %v2739
    %2741 = vmatmul.bf16.gmra.mxu0 %v255
    %v2742 = vpop.f32.mrf.mxu0
    %v2743 = vadd.f32 %v2694, %v2742
    %v2744 = vpop.f32.mrf.mxu0
    %v2745 = vadd.f32 %v2696, %v2744
    %2746 = vmatmul.bf16.gmra.mxu0 %v262
    %v2747 = vpop.f32.mrf.mxu0
    %v2748 = vadd.f32 %v2699, %v2747
    %v2749 = vpop.f32.mrf.mxu0
    %v2750 = vadd.f32 %v2701, %v2749
    %2751 = vmatmul.bf16.gmra.mxu0 %v269
    %v2752 = vpop.f32.mrf.mxu0
    %v2753 = vadd.f32 %v2704, %v2752
    %v2754 = vpop.f32.mrf.mxu0
    %v2755 = vadd.f32 %v2706, %v2754
    %2756 = vdwg.mxu0
    %2757 = vmatpush.bf16.msra.mxu0 %v1257
    %2758 = vmatpush.bf16.msra.mxu0 %v1253
    %2759 = vmatpush.bf16.msra.mxu0 %v1249
    %2760 = vmatpush.bf16.msra.mxu0 %v1245
    %2761 = vmatpush.bf16.msra.mxu0 %v1241
    %2762 = vmatpush.bf16.msra.mxu0 %v1237
    %2763 = vmatpush.bf16.msra.mxu0 %v1233
    %2764 = vmatpush.bf16.msra.mxu0 %v1229
    %2765 = vmatmul.bf16.gmra.mxu0 %v221
    %v2766 = vpop.f32.mrf.mxu0
    %v2767 = vadd.f32 %v2718, %v2766
    %v2768 = vpop.f32.mrf.mxu0
    %v2769 = vadd.f32 %v2720, %v2768
    %2770 = vmatmul.bf16.gmra.mxu0 %v228
    %v2771 = vpop.f32.mrf.mxu0
    %v2772 = vadd.f32 %v2723, %v2771
    %v2773 = vpop.f32.mrf.mxu0
    %v2774 = vadd.f32 %v2725, %v2773
    %2775 = vmatmul.bf16.gmra.mxu0 %v235
    %v2776 = vpop.f32.mrf.mxu0
    %v2777 = vadd.f32 %v2728, %v2776
    %v2778 = vpop.f32.mrf.mxu0
    %v2779 = vadd.f32 %v2730, %v2778
    %2780 = vmatmul.bf16.gmra.mxu0 %v242
    %v2781 = vpop.f32.mrf.mxu0
    %v2782 = vadd.f32 %v2733, %v2781
    %v2783 = vpop.f32.mrf.mxu0
    %v2784 = vadd.f32 %v2735, %v2783
    %2785 = vmatmul.bf16.gmra.mxu0 %v249
    %v2786 = vpop.f32.mrf.mxu0
    %v2787 = vadd.f32 %v2738, %v2786
    %v2788 = vpop.f32.mrf.mxu0
    %v2789 = vadd.f32 %v2740, %v2788
    %2790 = vmatmul.bf16.gmra.mxu0 %v256
    %v2791 = vpop.f32.mrf.mxu0
    %v2792 = vadd.f32 %v2743, %v2791
    %v2793 = vpop.f32.mrf.mxu0
    %v2794 = vadd.f32 %v2745, %v2793
    %2795 = vmatmul.bf16.gmra.mxu0 %v263
    %v2796 = vpop.f32.mrf.mxu0
    %v2797 = vadd.f32 %v2748, %v2796
    %v2798 = vpop.f32.mrf.mxu0
    %v2799 = vadd.f32 %v2750, %v2798
    %2800 = vmatmul.bf16.gmra.mxu0 %v270
    %v2801 = vpop.f32.mrf.mxu0
    %v2802 = vadd.f32 %v2753, %v2801
    %v2803 = vpop.f32.mrf.mxu0
    %v2804 = vadd.f32 %v2755, %v2803
    %2805 = vdwg.mxu0
    %2806 = vmatpush.bf16.msra.mxu0 0
    %2807 = vmatpush.bf16.msra.mxu0 0
    %2808 = vmatpush.bf16.msra.mxu0 0
    %2809 = vmatpush.bf16.msra.mxu0 0
    %2810 = vmatpush.bf16.msra.mxu0 0
    %2811 = vmatpush.bf16.msra.mxu0 0
    %2812 = vmatpush.bf16.msra.mxu0 0
    %2813 = vmatpush.bf16.msra.mxu0 %v1261
    %2814 = vmatmul.bf16.gmra.mxu0 %v1460
    %v2815 = vpop.f32.mrf.mxu0
    %v2816 = vadd.f32 %v2767, %v2815
    %v2817 = vpop.f32.mrf.mxu0
    %v2818 = vadd.f32 %v2769, %v2817
    %2819 = vmatmul.bf16.gmra.mxu0 %v1463
    %v2820 = vpop.f32.mrf.mxu0
    %v2821 = vadd.f32 %v2772, %v2820
    %v2822 = vpop.f32.mrf.mxu0
    %v2823 = vadd.f32 %v2774, %v2822
    %2824 = vmatmul.bf16.gmra.mxu0 %v1466
    %v2825 = vpop.f32.mrf.mxu0
    %v2826 = vadd.f32 %v2777, %v2825
    %v2827 = vpop.f32.mrf.mxu0
    %v2828 = vadd.f32 %v2779, %v2827
    %2829 = vmatmul.bf16.gmra.mxu0 %v1469
    %v2830 = vpop.f32.mrf.mxu0
    %v2831 = vadd.f32 %v2782, %v2830
    %v2832 = vpop.f32.mrf.mxu0
    %v2833 = vadd.f32 %v2784, %v2832
    %2834 = vmatmul.bf16.gmra.mxu0 %v1472
    %v2835 = vpop.f32.mrf.mxu0
    %v2836 = vadd.f32 %v2787, %v2835
    %v2837 = vpop.f32.mrf.mxu0
    %v2838 = vadd.f32 %v2789, %v2837
    %2839 = vmatmul.bf16.gmra.mxu0 %v1475
    %v2840 = vpop.f32.mrf.mxu0
    %v2841 = vadd.f32 %v2792, %v2840
    %v2842 = vpop.f32.mrf.mxu0
    %v2843 = vadd.f32 %v2794, %v2842
    %2844 = vmatmul.bf16.gmra.mxu0 %v1478
    %v2845 = vpop.f32.mrf.mxu0
    %v2846 = vadd.f32 %v2797, %v2845
    %v2847 = vpop.f32.mrf.mxu0
    %v2848 = vadd.f32 %v2799, %v2847
    %2849 = vmatmul.bf16.gmra.mxu0 %v1481
    %v2850 = vpop.f32.mrf.mxu0
    %v2851 = vadd.f32 %v2802, %v2850
    %v2852 = vpop.f32.mrf.mxu0
    %v2853 = vadd.f32 %v2804, %v2852
    %2854 = vdwg.mxu0
    %v2855 = vmax.f32 %v1787, 0.0
    %v2856 = vmax.f32 %v2130, 0.0
    %v2857 = vmax.f32 %v2473, 0.0
    %v2858 = vmax.f32 %v2816, 0.0
    %v2859 = vmax.f32 %v1789, 0.0
    %v2860 = vmax.f32 %v2132, 0.0
    %v2861 = vmax.f32 %v2475, 0.0
    %v2862 = vmax.f32 %v2818, 0.0
    %v2863 = vmax.f32 %v1792, 0.0
    %v2864 = vmax.f32 %v2135, 0.0
    %v2865 = vmax.f32 %v2478, 0.0
    %v2866 = vmax.f32 %v2821, 0.0
    %v2867 = vmax.f32 %v1794, 0.0
    %v2868 = vmax.f32 %v2137, 0.0
    %v2869 = vmax.f32 %v2480, 0.0
    %v2870 = vmax.f32 %v2823, 0.0
    %v2871 = vmax.f32 %v1797, 0.0
    %v2872 = vmax.f32 %v2140, 0.0
    %v2873 = vmax.f32 %v2483, 0.0
    %v2874 = vmax.f32 %v2826, 0.0
    %v2875 = vmax.f32 %v1799, 0.0
    %v2876 = vmax.f32 %v2142, 0.0
    %v2877 = vmax.f32 %v2485, 0.0
    %v2878 = vmax.f32 %v2828, 0.0
    %v2879 = vmax.f32 %v1802, 0.0
    %v2880 = vmax.f32 %v2145, 0.0
    %v2881 = vmax.f32 %v2488, 0.0
    %v2882 = vmax.f32 %v2831, 0.0
    %v2883 = vmax.f32 %v1804, 0.0
    %v2884 = vmax.f32 %v2147, 0.0
    %v2885 = vmax.f32 %v2490, 0.0
    %v2886 = vmax.f32 %v2833, 0.0
    %v2887 = vmax.f32 %v1807, 0.0
    %v2888 = vmax.f32 %v2150, 0.0
    %v2889 = vmax.f32 %v2493, 0.0
    %v2890 = vmax.f32 %v2836, 0.0
    %v2891 = vmax.f32 %v1809, 0.0
    %v2892 = vmax.f32 %v2152, 0.0
    %v2893 = vmax.f32 %v2495, 0.0
    %v2894 = vmax.f32 %v2838, 0.0
    %v2895 = vmax.f32 %v1812, 0.0
    %v2896 = vmax.f32 %v2155, 0.0
    %v2897 = vmax.f32 %v2498, 0.0
    %v2898 = vmax.f32 %v2841, 0.0
    %v2899 = vmax.f32 %v1814, 0.0
    %v2900 = vmax.f32 %v2157, 0.0
    %v2901 = vmax.f32 %v2500, 0.0
    %v2902 = vmax.f32 %v2843, 0.0
    %v2903 = vmax.f32 %v1817, 0.0
    %v2904 = vmax.f32 %v2160, 0.0
    %v2905 = vmax.f32 %v2503, 0.0
    %v2906 = vmax.f32 %v2846, 0.0
    %v2907 = vmax.f32 %v1819, 0.0
    %v2908 = vmax.f32 %v2162, 0.0
    %v2909 = vmax.f32 %v2505, 0.0
    %v2910 = vmax.f32 %v2848, 0.0
    %v2911 = vmax.f32 %v1822, 0.0
    %v2912 = vmax.f32 %v2165, 0.0
    %v2913 = vmax.f32 %v2508, 0.0
    %v2914 = vmax.f32 %v2851, 0.0
    %v2915 = vmax.f32 %v1824, 0.0
    %v2916 = vmax.f32 %v2167, 0.0
    %v2917 = vmax.f32 %v2510, 0.0
    %v2918 = vmax.f32 %v2853, 0.0
    %v2919 = vpack.c.bf16 %v2859, %v2855
    %v2920 = vpack.c.bf16 %v2860, %v2856
    %v2921 = vpack.c.bf16 %v2861, %v2857
    %v2922 = vpack.c.bf16 %v2862, %v2858
    %v2923 = vpack.c.bf16 %v2867, %v2863
    %v2924 = vpack.c.bf16 %v2868, %v2864
    %v2925 = vpack.c.bf16 %v2869, %v2865
    %v2926 = vpack.c.bf16 %v2870, %v2866
    %v2927 = vpack.c.bf16 %v2875, %v2871
    %v2928 = vpack.c.bf16 %v2876, %v2872
    %v2929 = vpack.c.bf16 %v2877, %v2873
    %v2930 = vpack.c.bf16 %v2878, %v2874
    %v2931 = vpack.c.bf16 %v2883, %v2879
    %v2932 = vpack.c.bf16 %v2884, %v2880
    %v2933 = vpack.c.bf16 %v2885, %v2881
    %v2934 = vpack.c.bf16 %v2886, %v2882
    %v2935 = vpack.c.bf16 %v2891, %v2887
    %v2936 = vpack.c.bf16 %v2892, %v2888
    %v2937 = vpack.c.bf16 %v2893, %v2889
    %v2938 = vpack.c.bf16 %v2894, %v2890
    %v2939 = vpack.c.bf16 %v2899, %v2895
    %v2940 = vpack.c.bf16 %v2900, %v2896
    %v2941 = vpack.c.bf16 %v2901, %v2897
    %v2942 = vpack.c.bf16 %v2902, %v2898
    %v2943 = vpack.c.bf16 %v2907, %v2903
    %v2944 = vpack.c.bf16 %v2908, %v2904
    %v2945 = vpack.c.bf16 %v2909, %v2905
    %v2946 = vpack.c.bf16 %v2910, %v2906
    %v2947 = vpack.c.bf16 %v2915, %v2911
    %v2948 = vpack.c.bf16 %v2916, %v2912
    %v2949 = vpack.c.bf16 %v2917, %v2913
    %v2950 = vpack.c.bf16 %v2918, %v2914
    %v2951 = vld [vmem:[#allocation8] sm:$0xff]
    %v2952 = vld [vmem:[#allocation8 + $0x8] sm:$0xff]
    %v2953 = vld [vmem:[#allocation8 + $0x10] sm:$0xff]
    %v2954 = vld [vmem:[#allocation8 + $0x18] sm:$0xff]
    %v2955 = vld [vmem:[#allocation8 + $0x20] sm:$0xff]
    %v2956 = vld [vmem:[#allocation8 + $0x28] sm:$0xff]
    %v2957 = vld [vmem:[#allocation8 + $0x30] sm:$0xff]
    %v2958 = vld [vmem:[#allocation8 + $0x38] sm:$0xff]
    %v2959 = vld [vmem:[#allocation8 + $0x40] sm:$0xff]
    %v2960 = vld [vmem:[#allocation8 + $0x48] sm:$0xff]
    %v2961 = vld [vmem:[#allocation8 + $0x50] sm:$0xff]
    %v2962 = vld [vmem:[#allocation8 + $0x58] sm:$0xff]
    %v2963 = vld [vmem:[#allocation8 + $0x60] sm:$0xff]
    %v2964 = vld [vmem:[#allocation8 + $0x68] sm:$0xff]
    %v2965 = vld [vmem:[#allocation8 + $0x70] sm:$0xff]
    %v2966 = vld [vmem:[#allocation8 + $0x78] sm:$0xff]
    %v2967 = vld [vmem:[#allocation8 + $0x80] sm:$0xff]
    %v2968 = vld [vmem:[#allocation8 + $0x88] sm:$0xff]
    %v2969 = vld [vmem:[#allocation8 + $0x90] sm:$0xff]
    %v2970 = vld [vmem:[#allocation8 + $0x98] sm:$0xff]
    %v2971 = vld [vmem:[#allocation8 + $0xa0] sm:$0xff]
    %v2972 = vld [vmem:[#allocation8 + $0xa8] sm:$0xff]
    %v2973 = vld [vmem:[#allocation8 + $0xb0] sm:$0xff]
    %v2974 = vld [vmem:[#allocation8 + $0xb8] sm:$0xff]
    %v2975 = vld [vmem:[#allocation8 + $0xc0] sm:$0xff]
    %v2976 = vld [vmem:[#allocation8 + $0xc8] sm:$0xff]
    %v2977 = vld [vmem:[#allocation8 + $0xd0] sm:$0xff]
    %v2978 = vld [vmem:[#allocation8 + $0xd8] sm:$0xff]
    %v2979 = vld [vmem:[#allocation8 + $0xe0] sm:$0xff]
    %v2980 = vld [vmem:[#allocation8 + $0xe8] sm:$0xff]
    %v2981 = vld [vmem:[#allocation8 + $0xf0] sm:$0xff]
    %v2982 = vld [vmem:[#allocation8 + $0xf8] sm:$0xff]
    %v2983 = vld [vmem:[#allocation8 + $0x100] sm:$0xff]
    %v2984 = vld [vmem:[#allocation8 + $0x108] sm:$0xff]
    %v2985 = vld [vmem:[#allocation8 + $0x110] sm:$0xff]
    %v2986 = vld [vmem:[#allocation8 + $0x118] sm:$0xff]
    %v2987 = vld [vmem:[#allocation8 + $0x120] sm:$0xff]
    %v2988 = vld [vmem:[#allocation8 + $0x128] sm:$0xff]
    %v2989 = vld [vmem:[#allocation8 + $0x130] sm:$0xff]
    %v2990 = vld [vmem:[#allocation8 + $0x138] sm:$0xff]
    %v2991 = vld [vmem:[#allocation8 + $0x140] sm:$0xff]
    %v2992 = vld [vmem:[#allocation8 + $0x148] sm:$0xff]
    %v2993 = vld [vmem:[#allocation8 + $0x150] sm:$0xff]
    %v2994 = vld [vmem:[#allocation8 + $0x158] sm:$0xff]
    %v2995 = vld [vmem:[#allocation8 + $0x160] sm:$0xff]
    %v2996 = vld [vmem:[#allocation8 + $0x168] sm:$0xff]
    %v2997 = vld [vmem:[#allocation8 + $0x170] sm:$0xff]
    %v2998 = vld [vmem:[#allocation8 + $0x178] sm:$0xff]
    %v2999 = vld [vmem:[#allocation8 + $0x180] sm:$0xff]
    %v3000 = vld [vmem:[#allocation8 + $0x188] sm:$0xff]
    %v3001 = vld [vmem:[#allocation8 + $0x190] sm:$0xff]
    %v3002 = vld [vmem:[#allocation8 + $0x198] sm:$0xff]
    %v3003 = vld [vmem:[#allocation8 + $0x1a0] sm:$0xff]
    %v3004 = vld [vmem:[#allocation8 + $0x1a8] sm:$0xff]
    %v3005 = vld [vmem:[#allocation8 + $0x1b0] sm:$0xff]
    %v3006 = vld [vmem:[#allocation8 + $0x1b8] sm:$0xff]
    %v3007 = vld [vmem:[#allocation8 + $0x1c0] sm:$0xff]
    %v3008 = vld [vmem:[#allocation8 + $0x1c8] sm:$0xff]
    %v3009 = vld [vmem:[#allocation8 + $0x1d0] sm:$0xff]
    %v3010 = vld [vmem:[#allocation8 + $0x1d8] sm:$0xff]
    %v3011 = vld [vmem:[#allocation8 + $0x1e0] sm:$0xff]
    %v3012 = vld [vmem:[#allocation8 + $0x1e8] sm:$0xff]
    %v3013 = vld [vmem:[#allocation8 + $0x1f0] sm:$0xff]
    %v3014 = vld [vmem:[#allocation8 + $0x1f8] sm:$0xff]
    %v3015 = vld [vmem:[%s4] sm:$0x3]
    %v3017 = vperm.slane %v3015, 0
    %v3018 = vperm.slane %v3015, 1
    %v3085 = vunpack.c.l.b16 %v2951
    %v3086 = vunpack.c.h.b16 %v2951
    %v3087 = vunpack.c.l.b16 %v2952
    %v3088 = vunpack.c.h.b16 %v2952
    %v3089 = vunpack.c.l.b16 %v2953
    %v3090 = vunpack.c.h.b16 %v2953
    %v3091 = vunpack.c.l.b16 %v2954
    %v3092 = vunpack.c.h.b16 %v2954
    %v3093 = vunpack.c.l.b16 %v2955
    %v3094 = vunpack.c.h.b16 %v2955
    %v3095 = vunpack.c.l.b16 %v2956
    %v3096 = vunpack.c.h.b16 %v2956
    %v3097 = vunpack.c.l.b16 %v2957
    %v3098 = vunpack.c.h.b16 %v2957
    %v3099 = vunpack.c.l.b16 %v2958
    %v3100 = vunpack.c.h.b16 %v2958
    %v3101 = vunpack.c.l.b16 %v2959
    %v3102 = vunpack.c.h.b16 %v2959
    %v3103 = vunpack.c.l.b16 %v2960
    %v3104 = vunpack.c.h.b16 %v2960
    %v3105 = vunpack.c.l.b16 %v2961
    %v3106 = vunpack.c.h.b16 %v2961
    %v3107 = vunpack.c.l.b16 %v2962
    %v3108 = vunpack.c.h.b16 %v2962
    %v3109 = vunpack.c.l.b16 %v2963
    %v3110 = vunpack.c.h.b16 %v2963
    %v3111 = vunpack.c.l.b16 %v2964
    %v3112 = vunpack.c.h.b16 %v2964
    %v3113 = vunpack.c.l.b16 %v2965
    %v3114 = vunpack.c.h.b16 %v2965
    %v3115 = vunpack.c.l.b16 %v2966
    %v3116 = vunpack.c.h.b16 %v2966
    %v3117 = vunpack.c.l.b16 %v2967
    %v3118 = vunpack.c.h.b16 %v2967
    %v3119 = vunpack.c.l.b16 %v2968
    %v3120 = vunpack.c.h.b16 %v2968
    %v3121 = vunpack.c.l.b16 %v2969
    %v3122 = vunpack.c.h.b16 %v2969
    %v3123 = vunpack.c.l.b16 %v2970
    %v3124 = vunpack.c.h.b16 %v2970
    %v3125 = vunpack.c.l.b16 %v2971
    %v3126 = vunpack.c.h.b16 %v2971
    %v3127 = vunpack.c.l.b16 %v2972
    %v3128 = vunpack.c.h.b16 %v2972
    %v3129 = vunpack.c.l.b16 %v2973
    %v3130 = vunpack.c.h.b16 %v2973
    %v3131 = vunpack.c.l.b16 %v2974
    %v3132 = vunpack.c.h.b16 %v2974
    %v3133 = vunpack.c.l.b16 %v2975
    %v3134 = vunpack.c.h.b16 %v2975
    %v3135 = vunpack.c.l.b16 %v2976
    %v3136 = vunpack.c.h.b16 %v2976
    %v3137 = vunpack.c.l.b16 %v2977
    %v3138 = vunpack.c.h.b16 %v2977
    %v3139 = vunpack.c.l.b16 %v2978
    %v3140 = vunpack.c.h.b16 %v2978
    %v3141 = vunpack.c.l.b16 %v2979
    %v3142 = vunpack.c.h.b16 %v2979
    %v3143 = vunpack.c.l.b16 %v2980
    %v3144 = vunpack.c.h.b16 %v2980
    %v3145 = vunpack.c.l.b16 %v2981
    %v3146 = vunpack.c.h.b16 %v2981
    %v3147 = vunpack.c.l.b16 %v2982
    %v3148 = vunpack.c.h.b16 %v2982
    %v3149 = vunpack.c.l.b16 %v2983
    %v3150 = vunpack.c.h.b16 %v2983
    %v3151 = vunpack.c.l.b16 %v2984
    %v3152 = vunpack.c.h.b16 %v2984
    %v3153 = vunpack.c.l.b16 %v2985
    %v3154 = vunpack.c.h.b16 %v2985
    %v3155 = vunpack.c.l.b16 %v2986
    %v3156 = vunpack.c.h.b16 %v2986
    %v3157 = vunpack.c.l.b16 %v2987
    %v3158 = vunpack.c.h.b16 %v2987
    %v3159 = vunpack.c.l.b16 %v2988
    %v3160 = vunpack.c.h.b16 %v2988
    %v3161 = vunpack.c.l.b16 %v2989
    %v3162 = vunpack.c.h.b16 %v2989
    %v3163 = vunpack.c.l.b16 %v2990
    %v3164 = vunpack.c.h.b16 %v2990
    %v3165 = vunpack.c.l.b16 %v2991
    %v3166 = vunpack.c.h.b16 %v2991
    %v3167 = vunpack.c.l.b16 %v2992
    %v3168 = vunpack.c.h.b16 %v2992
    %v3169 = vunpack.c.l.b16 %v2993
    %v3170 = vunpack.c.h.b16 %v2993
    %v3171 = vunpack.c.l.b16 %v2994
    %v3172 = vunpack.c.h.b16 %v2994
    %v3173 = vunpack.c.l.b16 %v2995
    %v3174 = vunpack.c.h.b16 %v2995
    %v3175 = vunpack.c.l.b16 %v2996
    %v3176 = vunpack.c.h.b16 %v2996
    %v3177 = vunpack.c.l.b16 %v2997
    %v3178 = vunpack.c.h.b16 %v2997
    %v3179 = vunpack.c.l.b16 %v2998
    %v3180 = vunpack.c.h.b16 %v2998
    %v3181 = vunpack.c.l.b16 %v2999
    %v3182 = vunpack.c.h.b16 %v2999
    %v3183 = vunpack.c.l.b16 %v3000
    %v3184 = vunpack.c.h.b16 %v3000
    %v3185 = vunpack.c.l.b16 %v3001
    %v3186 = vunpack.c.h.b16 %v3001
    %v3187 = vunpack.c.l.b16 %v3002
    %v3188 = vunpack.c.h.b16 %v3002
    %v3189 = vunpack.c.l.b16 %v3003
    %v3190 = vunpack.c.h.b16 %v3003
    %v3191 = vunpack.c.l.b16 %v3004
    %v3192 = vunpack.c.h.b16 %v3004
    %v3193 = vunpack.c.l.b16 %v3005
    %v3194 = vunpack.c.h.b16 %v3005
    %v3195 = vunpack.c.l.b16 %v3006
    %v3196 = vunpack.c.h.b16 %v3006
    %v3197 = vunpack.c.l.b16 %v3007
    %v3198 = vunpack.c.h.b16 %v3007
    %v3199 = vunpack.c.l.b16 %v3008
    %v3200 = vunpack.c.h.b16 %v3008
    %v3201 = vunpack.c.l.b16 %v3009
    %v3202 = vunpack.c.h.b16 %v3009
    %v3203 = vunpack.c.l.b16 %v3010
    %v3204 = vunpack.c.h.b16 %v3010
    %v3205 = vunpack.c.l.b16 %v3011
    %v3206 = vunpack.c.h.b16 %v3011
    %v3207 = vunpack.c.l.b16 %v3012
    %v3208 = vunpack.c.h.b16 %v3012
    %v3209 = vunpack.c.l.b16 %v3013
    %v3210 = vunpack.c.h.b16 %v3013
    %v3211 = vunpack.c.l.b16 %v3014
    %v3212 = vunpack.c.h.b16 %v3014
    %v3213 = vpack.c.b16 %v3087, %v3085
    %v3214 = vpack.c.b16 %v3088, %v3086
    %v3215 = vpack.c.b16 %v3091, %v3089
    %v3216 = vpack.c.b16 %v3092, %v3090
    %v3217 = vpack.c.b16 %v3095, %v3093
    %v3218 = vpack.c.b16 %v3096, %v3094
    %v3219 = vpack.c.b16 %v3099, %v3097
    %v3220 = vpack.c.b16 %v3100, %v3098
    %v3221 = vpack.c.b16 %v3103, %v3101
    %v3222 = vpack.c.b16 %v3104, %v3102
    %v3223 = vpack.c.b16 %v3107, %v3105
    %v3224 = vpack.c.b16 %v3108, %v3106
    %v3225 = vpack.c.b16 %v3111, %v3109
    %v3226 = vpack.c.b16 %v3112, %v3110
    %v3227 = vpack.c.b16 %v3115, %v3113
    %v3228 = vpack.c.b16 %v3116, %v3114
    %v3229 = vpack.c.b16 %v3119, %v3117
    %v3230 = vpack.c.b16 %v3120, %v3118
    %v3231 = vpack.c.b16 %v3123, %v3121
    %v3232 = vpack.c.b16 %v3124, %v3122
    %v3233 = vpack.c.b16 %v3127, %v3125
    %v3234 = vpack.c.b16 %v3128, %v3126
    %v3235 = vpack.c.b16 %v3131, %v3129
    %v3236 = vpack.c.b16 %v3132, %v3130
    %v3237 = vpack.c.b16 %v3135, %v3133
    %v3238 = vpack.c.b16 %v3136, %v3134
    %v3239 = vpack.c.b16 %v3139, %v3137
    %v3240 = vpack.c.b16 %v3140, %v3138
    %v3241 = vpack.c.b16 %v3143, %v3141
    %v3242 = vpack.c.b16 %v3144, %v3142
    %v3243 = vpack.c.b16 %v3147, %v3145
    %v3244 = vpack.c.b16 %v3148, %v3146
    %v3245 = vpack.c.b16 %v3151, %v3149
    %v3246 = vpack.c.b16 %v3152, %v3150
    %v3247 = vpack.c.b16 %v3155, %v3153
    %v3248 = vpack.c.b16 %v3156, %v3154
    %v3249 = vpack.c.b16 %v3159, %v3157
    %v3250 = vpack.c.b16 %v3160, %v3158
    %v3251 = vpack.c.b16 %v3163, %v3161
    %v3252 = vpack.c.b16 %v3164, %v3162
    %v3253 = vpack.c.b16 %v3167, %v3165
    %v3254 = vpack.c.b16 %v3168, %v3166
    %v3255 = vpack.c.b16 %v3171, %v3169
    %v3256 = vpack.c.b16 %v3172, %v3170
    %v3257 = vpack.c.b16 %v3175, %v3173
    %v3258 = vpack.c.b16 %v3176, %v3174
    %v3259 = vpack.c.b16 %v3179, %v3177
    %v3260 = vpack.c.b16 %v3180, %v3178
    %v3261 = vpack.c.b16 %v3183, %v3181
    %v3262 = vpack.c.b16 %v3184, %v3182
    %v3263 = vpack.c.b16 %v3187, %v3185
    %v3264 = vpack.c.b16 %v3188, %v3186
    %v3265 = vpack.c.b16 %v3191, %v3189
    %v3266 = vpack.c.b16 %v3192, %v3190
    %v3267 = vpack.c.b16 %v3195, %v3193
    %v3268 = vpack.c.b16 %v3196, %v3194
    %v3269 = vpack.c.b16 %v3199, %v3197
    %v3270 = vpack.c.b16 %v3200, %v3198
    %v3271 = vpack.c.b16 %v3203, %v3201
    %v3272 = vpack.c.b16 %v3204, %v3202
    %v3273 = vpack.c.b16 %v3207, %v3205
    %v3274 = vpack.c.b16 %v3208, %v3206
    %v3275 = vpack.c.b16 %v3211, %v3209
    %v3276 = vpack.c.b16 %v3212, %v3210
    %3341 = vmatpush.bf16.msra.mxu0 %v3227
    %3342 = vmatpush.bf16.msra.mxu0 %v3225
    %3343 = vmatpush.bf16.msra.mxu0 %v3223
    %3344 = vmatpush.bf16.msra.mxu0 %v3221
    %3345 = vmatpush.bf16.msra.mxu0 %v3219
    %3346 = vmatpush.bf16.msra.mxu0 %v3217
    %3347 = vmatpush.bf16.msra.mxu0 %v3215
    %3348 = vmatpush.bf16.msra.mxu0 %v3213
    %3349 = vmatmul.bf16.gmra.mxu0 %v2919
    %v3350 = vpop.f32.mrf.mxu0
    %v3351 = vadd.f32 %v3017, %v3350
    %v3352 = vpop.f32.mrf.mxu0
    %v3353 = vadd.f32 %v3017, %v3352
    %3354 = vmatmul.bf16.gmra.mxu0 %v2923
    %v3355 = vpop.f32.mrf.mxu0
    %v3356 = vadd.f32 %v3017, %v3355
    %v3357 = vpop.f32.mrf.mxu0
    %v3358 = vadd.f32 %v3017, %v3357
    %3359 = vmatmul.bf16.gmra.mxu0 %v2927
    %v3360 = vpop.f32.mrf.mxu0
    %v3361 = vadd.f32 %v3017, %v3360
    %v3362 = vpop.f32.mrf.mxu0
    %v3363 = vadd.f32 %v3017, %v3362
    %3364 = vmatmul.bf16.gmra.mxu0 %v2931
    %v3365 = vpop.f32.mrf.mxu0
    %v3366 = vadd.f32 %v3017, %v3365
    %v3367 = vpop.f32.mrf.mxu0
    %v3368 = vadd.f32 %v3017, %v3367
    %3369 = vmatmul.bf16.gmra.mxu0 %v2935
    %v3370 = vpop.f32.mrf.mxu0
    %v3371 = vadd.f32 %v3017, %v3370
    %v3372 = vpop.f32.mrf.mxu0
    %v3373 = vadd.f32 %v3017, %v3372
    %3374 = vmatmul.bf16.gmra.mxu0 %v2939
    %v3375 = vpop.f32.mrf.mxu0
    %v3376 = vadd.f32 %v3017, %v3375
    %v3377 = vpop.f32.mrf.mxu0
    %v3378 = vadd.f32 %v3017, %v3377
    %3379 = vmatmul.bf16.gmra.mxu0 %v2943
    %v3380 = vpop.f32.mrf.mxu0
    %v3381 = vadd.f32 %v3017, %v3380
    %v3382 = vpop.f32.mrf.mxu0
    %v3383 = vadd.f32 %v3017, %v3382
    %3384 = vmatmul.bf16.gmra.mxu0 %v2947
    %v3385 = vpop.f32.mrf.mxu0
    %v3386 = vadd.f32 %v3017, %v3385
    %v3387 = vpop.f32.mrf.mxu0
    %v3388 = vadd.f32 %v3017, %v3387
    %3389 = vdwg.mxu0
    %3390 = vmatpush.bf16.msra.mxu0 %v3243
    %3391 = vmatpush.bf16.msra.mxu0 %v3241
    %3392 = vmatpush.bf16.msra.mxu0 %v3239
    %3393 = vmatpush.bf16.msra.mxu0 %v3237
    %3394 = vmatpush.bf16.msra.mxu0 %v3235
    %3395 = vmatpush.bf16.msra.mxu0 %v3233
    %3396 = vmatpush.bf16.msra.mxu0 %v3231
    %3397 = vmatpush.bf16.msra.mxu0 %v3229
    %3398 = vmatmul.bf16.gmra.mxu0 %v2920
    %v3399 = vpop.f32.mrf.mxu0
    %v3400 = vadd.f32 %v3351, %v3399
    %v3401 = vpop.f32.mrf.mxu0
    %v3402 = vadd.f32 %v3353, %v3401
    %3403 = vmatmul.bf16.gmra.mxu0 %v2924
    %v3404 = vpop.f32.mrf.mxu0
    %v3405 = vadd.f32 %v3356, %v3404
    %v3406 = vpop.f32.mrf.mxu0
    %v3407 = vadd.f32 %v3358, %v3406
    %3408 = vmatmul.bf16.gmra.mxu0 %v2928
    %v3409 = vpop.f32.mrf.mxu0
    %v3410 = vadd.f32 %v3361, %v3409
    %v3411 = vpop.f32.mrf.mxu0
    %v3412 = vadd.f32 %v3363, %v3411
    %3413 = vmatmul.bf16.gmra.mxu0 %v2932
    %v3414 = vpop.f32.mrf.mxu0
    %v3415 = vadd.f32 %v3366, %v3414
    %v3416 = vpop.f32.mrf.mxu0
    %v3417 = vadd.f32 %v3368, %v3416
    %3418 = vmatmul.bf16.gmra.mxu0 %v2936
    %v3419 = vpop.f32.mrf.mxu0
    %v3420 = vadd.f32 %v3371, %v3419
    %v3421 = vpop.f32.mrf.mxu0
    %v3422 = vadd.f32 %v3373, %v3421
    %3423 = vmatmul.bf16.gmra.mxu0 %v2940
    %v3424 = vpop.f32.mrf.mxu0
    %v3425 = vadd.f32 %v3376, %v3424
    %v3426 = vpop.f32.mrf.mxu0
    %v3427 = vadd.f32 %v3378, %v3426
    %3428 = vmatmul.bf16.gmra.mxu0 %v2944
    %v3429 = vpop.f32.mrf.mxu0
    %v3430 = vadd.f32 %v3381, %v3429
    %v3431 = vpop.f32.mrf.mxu0
    %v3432 = vadd.f32 %v3383, %v3431
    %3433 = vmatmul.bf16.gmra.mxu0 %v2948
    %v3434 = vpop.f32.mrf.mxu0
    %v3435 = vadd.f32 %v3386, %v3434
    %v3436 = vpop.f32.mrf.mxu0
    %v3437 = vadd.f32 %v3388, %v3436
    %3438 = vdwg.mxu0
    %3439 = vmatpush.bf16.msra.mxu0 %v3259
    %3440 = vmatpush.bf16.msra.mxu0 %v3257
    %3441 = vmatpush.bf16.msra.mxu0 %v3255
    %3442 = vmatpush.bf16.msra.mxu0 %v3253
    %3443 = vmatpush.bf16.msra.mxu0 %v3251
    %3444 = vmatpush.bf16.msra.mxu0 %v3249
    %3445 = vmatpush.bf16.msra.mxu0 %v3247
    %3446 = vmatpush.bf16.msra.mxu0 %v3245
    %3447 = vmatmul.bf16.gmra.mxu0 %v2921
    %v3448 = vpop.f32.mrf.mxu0
    %v3449 = vadd.f32 %v3400, %v3448
    %v3450 = vpop.f32.mrf.mxu0
    %v3451 = vadd.f32 %v3402, %v3450
    %3452 = vmatmul.bf16.gmra.mxu0 %v2925
    %v3453 = vpop.f32.mrf.mxu0
    %v3454 = vadd.f32 %v3405, %v3453
    %v3455 = vpop.f32.mrf.mxu0
    %v3456 = vadd.f32 %v3407, %v3455
    %3457 = vmatmul.bf16.gmra.mxu0 %v2929
    %v3458 = vpop.f32.mrf.mxu0
    %v3459 = vadd.f32 %v3410, %v3458
    %v3460 = vpop.f32.mrf.mxu0
    %v3461 = vadd.f32 %v3412, %v3460
    %3462 = vmatmul.bf16.gmra.mxu0 %v2933
    %v3463 = vpop.f32.mrf.mxu0
    %v3464 = vadd.f32 %v3415, %v3463
    %v3465 = vpop.f32.mrf.mxu0
    %v3466 = vadd.f32 %v3417, %v3465
    %3467 = vmatmul.bf16.gmra.mxu0 %v2937
    %v3468 = vpop.f32.mrf.mxu0
    %v3469 = vadd.f32 %v3420, %v3468
    %v3470 = vpop.f32.mrf.mxu0
    %v3471 = vadd.f32 %v3422, %v3470
    %3472 = vmatmul.bf16.gmra.mxu0 %v2941
    %v3473 = vpop.f32.mrf.mxu0
    %v3474 = vadd.f32 %v3425, %v3473
    %v3475 = vpop.f32.mrf.mxu0
    %v3476 = vadd.f32 %v3427, %v3475
    %3477 = vmatmul.bf16.gmra.mxu0 %v2945
    %v3478 = vpop.f32.mrf.mxu0
    %v3479 = vadd.f32 %v3430, %v3478
    %v3480 = vpop.f32.mrf.mxu0
    %v3481 = vadd.f32 %v3432, %v3480
    %3482 = vmatmul.bf16.gmra.mxu0 %v2949
    %v3483 = vpop.f32.mrf.mxu0
    %v3484 = vadd.f32 %v3435, %v3483
    %v3485 = vpop.f32.mrf.mxu0
    %v3486 = vadd.f32 %v3437, %v3485
    %3487 = vdwg.mxu0
    %3488 = vmatpush.bf16.msra.mxu0 %v3275
    %3489 = vmatpush.bf16.msra.mxu0 %v3273
    %3490 = vmatpush.bf16.msra.mxu0 %v3271
    %3491 = vmatpush.bf16.msra.mxu0 %v3269
    %3492 = vmatpush.bf16.msra.mxu0 %v3267
    %3493 = vmatpush.bf16.msra.mxu0 %v3265
    %3494 = vmatpush.bf16.msra.mxu0 %v3263
    %3495 = vmatpush.bf16.msra.mxu0 %v3261
    %3496 = vmatmul.bf16.gmra.mxu0 %v2922
    %v3497 = vpop.f32.mrf.mxu0
    %v3498 = vadd.f32 %v3449, %v3497
    %v3499 = vpop.f32.mrf.mxu0
    %v3500 = vadd.f32 %v3451, %v3499
    %3501 = vmatmul.bf16.gmra.mxu0 %v2926
    %v3502 = vpop.f32.mrf.mxu0
    %v3503 = vadd.f32 %v3454, %v3502
    %v3504 = vpop.f32.mrf.mxu0
    %v3505 = vadd.f32 %v3456, %v3504
    %3506 = vmatmul.bf16.gmra.mxu0 %v2930
    %v3507 = vpop.f32.mrf.mxu0
    %v3508 = vadd.f32 %v3459, %v3507
    %v3509 = vpop.f32.mrf.mxu0
    %v3510 = vadd.f32 %v3461, %v3509
    %3511 = vmatmul.bf16.gmra.mxu0 %v2934
    %v3512 = vpop.f32.mrf.mxu0
    %v3513 = vadd.f32 %v3464, %v3512
    %v3514 = vpop.f32.mrf.mxu0
    %v3515 = vadd.f32 %v3466, %v3514
    %3516 = vmatmul.bf16.gmra.mxu0 %v2938
    %v3517 = vpop.f32.mrf.mxu0
    %v3518 = vadd.f32 %v3469, %v3517
    %v3519 = vpop.f32.mrf.mxu0
    %v3520 = vadd.f32 %v3471, %v3519
    %3521 = vmatmul.bf16.gmra.mxu0 %v2942
    %v3522 = vpop.f32.mrf.mxu0
    %v3523 = vadd.f32 %v3474, %v3522
    %v3524 = vpop.f32.mrf.mxu0
    %v3525 = vadd.f32 %v3476, %v3524
    %3526 = vmatmul.bf16.gmra.mxu0 %v2946
    %v3527 = vpop.f32.mrf.mxu0
    %v3528 = vadd.f32 %v3479, %v3527
    %v3529 = vpop.f32.mrf.mxu0
    %v3530 = vadd.f32 %v3481, %v3529
    %3531 = vmatmul.bf16.gmra.mxu0 %v2950
    %v3532 = vpop.f32.mrf.mxu0
    %v3533 = vadd.f32 %v3484, %v3532
    %v3534 = vpop.f32.mrf.mxu0
    %v3535 = vadd.f32 %v3486, %v3534
    %3536 = vdwg.mxu0
    %3537 = vmatpush.bf16.msra.mxu0 %v3228
    %3538 = vmatpush.bf16.msra.mxu0 %v3226
    %3539 = vmatpush.bf16.msra.mxu0 %v3224
    %3540 = vmatpush.bf16.msra.mxu0 %v3222
    %3541 = vmatpush.bf16.msra.mxu0 %v3220
    %3542 = vmatpush.bf16.msra.mxu0 %v3218
    %3543 = vmatpush.bf16.msra.mxu0 %v3216
    %3544 = vmatpush.bf16.msra.mxu0 %v3214
    %3545 = vmatmul.bf16.gmra.mxu0 %v2919
    %v3546 = vpop.f32.mrf.mxu0
    %v3547 = vadd.f32 %v3018, %v3546
    %v3548 = vpop.f32.mrf.mxu0
    %v3549 = vadd.f32 %v3018, %v3548
    %3550 = vmatmul.bf16.gmra.mxu0 %v2923
    %v3551 = vpop.f32.mrf.mxu0
    %v3552 = vadd.f32 %v3018, %v3551
    %v3553 = vpop.f32.mrf.mxu0
    %v3554 = vadd.f32 %v3018, %v3553
    %3555 = vmatmul.bf16.gmra.mxu0 %v2927
    %v3556 = vpop.f32.mrf.mxu0
    %v3557 = vadd.f32 %v3018, %v3556
    %v3558 = vpop.f32.mrf.mxu0
    %v3559 = vadd.f32 %v3018, %v3558
    %3560 = vmatmul.bf16.gmra.mxu0 %v2931
    %v3561 = vpop.f32.mrf.mxu0
    %v3562 = vadd.f32 %v3018, %v3561
    %v3563 = vpop.f32.mrf.mxu0
    %v3564 = vadd.f32 %v3018, %v3563
    %3565 = vmatmul.bf16.gmra.mxu0 %v2935
    %v3566 = vpop.f32.mrf.mxu0
    %v3567 = vadd.f32 %v3018, %v3566
    %v3568 = vpop.f32.mrf.mxu0
    %v3569 = vadd.f32 %v3018, %v3568
    %3570 = vmatmul.bf16.gmra.mxu0 %v2939
    %v3571 = vpop.f32.mrf.mxu0
    %v3572 = vadd.f32 %v3018, %v3571
    %v3573 = vpop.f32.mrf.mxu0
    %v3574 = vadd.f32 %v3018, %v3573
    %3575 = vmatmul.bf16.gmra.mxu0 %v2943
    %v3576 = vpop.f32.mrf.mxu0
    %v3577 = vadd.f32 %v3018, %v3576
    %v3578 = vpop.f32.mrf.mxu0
    %v3579 = vadd.f32 %v3018, %v3578
    %3580 = vmatmul.bf16.gmra.mxu0 %v2947
    %v3581 = vpop.f32.mrf.mxu0
    %v3582 = vadd.f32 %v3018, %v3581
    %v3583 = vpop.f32.mrf.mxu0
    %v3584 = vadd.f32 %v3018, %v3583
    %3585 = vdwg.mxu0
    %3586 = vmatpush.bf16.msra.mxu0 %v3244
    %3587 = vmatpush.bf16.msra.mxu0 %v3242
    %3588 = vmatpush.bf16.msra.mxu0 %v3240
    %3589 = vmatpush.bf16.msra.mxu0 %v3238
    %3590 = vmatpush.bf16.msra.mxu0 %v3236
    %3591 = vmatpush.bf16.msra.mxu0 %v3234
    %3592 = vmatpush.bf16.msra.mxu0 %v3232
    %3593 = vmatpush.bf16.msra.mxu0 %v3230
    %3594 = vmatmul.bf16.gmra.mxu0 %v2920
    %v3595 = vpop.f32.mrf.mxu0
    %v3596 = vadd.f32 %v3547, %v3595
    %v3597 = vpop.f32.mrf.mxu0
    %v3598 = vadd.f32 %v3549, %v3597
    %3599 = vmatmul.bf16.gmra.mxu0 %v2924
    %v3600 = vpop.f32.mrf.mxu0
    %v3601 = vadd.f32 %v3552, %v3600
    %v3602 = vpop.f32.mrf.mxu0
    %v3603 = vadd.f32 %v3554, %v3602
    %3604 = vmatmul.bf16.gmra.mxu0 %v2928
    %v3605 = vpop.f32.mrf.mxu0
    %v3606 = vadd.f32 %v3557, %v3605
    %v3607 = vpop.f32.mrf.mxu0
    %v3608 = vadd.f32 %v3559, %v3607
    %3609 = vmatmul.bf16.gmra.mxu0 %v2932
    %v3610 = vpop.f32.mrf.mxu0
    %v3611 = vadd.f32 %v3562, %v3610
    %v3612 = vpop.f32.mrf.mxu0
    %v3613 = vadd.f32 %v3564, %v3612
    %3614 = vmatmul.bf16.gmra.mxu0 %v2936
    %v3615 = vpop.f32.mrf.mxu0
    %v3616 = vadd.f32 %v3567, %v3615
    %v3617 = vpop.f32.mrf.mxu0
    %v3618 = vadd.f32 %v3569, %v3617
    %3619 = vmatmul.bf16.gmra.mxu0 %v2940
    %v3620 = vpop.f32.mrf.mxu0
    %v3621 = vadd.f32 %v3572, %v3620
    %v3622 = vpop.f32.mrf.mxu0
    %v3623 = vadd.f32 %v3574, %v3622
    %3624 = vmatmul.bf16.gmra.mxu0 %v2944
    %v3625 = vpop.f32.mrf.mxu0
    %v3626 = vadd.f32 %v3577, %v3625
    %v3627 = vpop.f32.mrf.mxu0
    %v3628 = vadd.f32 %v3579, %v3627
    %3629 = vmatmul.bf16.gmra.mxu0 %v2948
    %v3630 = vpop.f32.mrf.mxu0
    %v3631 = vadd.f32 %v3582, %v3630
    %v3632 = vpop.f32.mrf.mxu0
    %v3633 = vadd.f32 %v3584, %v3632
    %3634 = vdwg.mxu0
    %3635 = vmatpush.bf16.msra.mxu0 %v3260
    %3636 = vmatpush.bf16.msra.mxu0 %v3258
    %3637 = vmatpush.bf16.msra.mxu0 %v3256
    %3638 = vmatpush.bf16.msra.mxu0 %v3254
    %3639 = vmatpush.bf16.msra.mxu0 %v3252
    %3640 = vmatpush.bf16.msra.mxu0 %v3250
    %3641 = vmatpush.bf16.msra.mxu0 %v3248
    %3642 = vmatpush.bf16.msra.mxu0 %v3246
    %3643 = vmatmul.bf16.gmra.mxu0 %v2921
    %v3644 = vpop.f32.mrf.mxu0
    %v3645 = vadd.f32 %v3596, %v3644
    %v3646 = vpop.f32.mrf.mxu0
    %v3647 = vadd.f32 %v3598, %v3646
    %3648 = vmatmul.bf16.gmra.mxu0 %v2925
    %v3649 = vpop.f32.mrf.mxu0
    %v3650 = vadd.f32 %v3601, %v3649
    %v3651 = vpop.f32.mrf.mxu0
    %v3652 = vadd.f32 %v3603, %v3651
    %3653 = vmatmul.bf16.gmra.mxu0 %v2929
    %v3654 = vpop.f32.mrf.mxu0
    %v3655 = vadd.f32 %v3606, %v3654
    %v3656 = vpop.f32.mrf.mxu0
    %v3657 = vadd.f32 %v3608, %v3656
    %3658 = vmatmul.bf16.gmra.mxu0 %v2933
    %v3659 = vpop.f32.mrf.mxu0
    %v3660 = vadd.f32 %v3611, %v3659
    %v3661 = vpop.f32.mrf.mxu0
    %v3662 = vadd.f32 %v3613, %v3661
    %3663 = vmatmul.bf16.gmra.mxu0 %v2937
    %v3664 = vpop.f32.mrf.mxu0
    %v3665 = vadd.f32 %v3616, %v3664
    %v3666 = vpop.f32.mrf.mxu0
    %v3667 = vadd.f32 %v3618, %v3666
    %3668 = vmatmul.bf16.gmra.mxu0 %v2941
    %v3669 = vpop.f32.mrf.mxu0
    %v3670 = vadd.f32 %v3621, %v3669
    %v3671 = vpop.f32.mrf.mxu0
    %v3672 = vadd.f32 %v3623, %v3671
    %3673 = vmatmul.bf16.gmra.mxu0 %v2945
    %v3674 = vpop.f32.mrf.mxu0
    %v3675 = vadd.f32 %v3626, %v3674
    %v3676 = vpop.f32.mrf.mxu0
    %v3677 = vadd.f32 %v3628, %v3676
    %3678 = vmatmul.bf16.gmra.mxu0 %v2949
    %v3679 = vpop.f32.mrf.mxu0
    %v3680 = vadd.f32 %v3631, %v3679
    %v3681 = vpop.f32.mrf.mxu0
    %v3682 = vadd.f32 %v3633, %v3681
    %3683 = vdwg.mxu0
    %3684 = vmatpush.bf16.msra.mxu0 %v3276
    %3685 = vmatpush.bf16.msra.mxu0 %v3274
    %3686 = vmatpush.bf16.msra.mxu0 %v3272
    %3687 = vmatpush.bf16.msra.mxu0 %v3270
    %3688 = vmatpush.bf16.msra.mxu0 %v3268
    %3689 = vmatpush.bf16.msra.mxu0 %v3266
    %3690 = vmatpush.bf16.msra.mxu0 %v3264
    %3691 = vmatpush.bf16.msra.mxu0 %v3262
    %3692 = vmatmul.bf16.gmra.mxu0 %v2922
    %v3693 = vpop.f32.mrf.mxu0
    %v3694 = vadd.f32 %v3645, %v3693
    %v3695 = vpop.f32.mrf.mxu0
    %v3696 = vadd.f32 %v3647, %v3695
    %3697 = vmatmul.bf16.gmra.mxu0 %v2926
    %v3698 = vpop.f32.mrf.mxu0
    %v3699 = vadd.f32 %v3650, %v3698
    %v3700 = vpop.f32.mrf.mxu0
    %v3701 = vadd.f32 %v3652, %v3700
    %3702 = vmatmul.bf16.gmra.mxu0 %v2930
    %v3703 = vpop.f32.mrf.mxu0
    %v3704 = vadd.f32 %v3655, %v3703
    %v3705 = vpop.f32.mrf.mxu0
    %v3706 = vadd.f32 %v3657, %v3705
    %3707 = vmatmul.bf16.gmra.mxu0 %v2934
    %v3708 = vpop.f32.mrf.mxu0
    %v3709 = vadd.f32 %v3660, %v3708
    %v3710 = vpop.f32.mrf.mxu0
    %v3711 = vadd.f32 %v3662, %v3710
    %3712 = vmatmul.bf16.gmra.mxu0 %v2938
    %v3713 = vpop.f32.mrf.mxu0
    %v3714 = vadd.f32 %v3665, %v3713
    %v3715 = vpop.f32.mrf.mxu0
    %v3716 = vadd.f32 %v3667, %v3715
    %3717 = vmatmul.bf16.gmra.mxu0 %v2942
    %v3718 = vpop.f32.mrf.mxu0
    %v3719 = vadd.f32 %v3670, %v3718
    %v3720 = vpop.f32.mrf.mxu0
    %v3721 = vadd.f32 %v3672, %v3720
    %3722 = vmatmul.bf16.gmra.mxu0 %v2946
    %v3723 = vpop.f32.mrf.mxu0
    %v3724 = vadd.f32 %v3675, %v3723
    %v3725 = vpop.f32.mrf.mxu0
    %v3726 = vadd.f32 %v3677, %v3725
    %3727 = vmatmul.bf16.gmra.mxu0 %v2950
    %v3728 = vpop.f32.mrf.mxu0
    %v3729 = vadd.f32 %v3680, %v3728
    %v3730 = vpop.f32.mrf.mxu0
    %v3731 = vadd.f32 %v3682, %v3730
    %3732 = vdwg.mxu0
    %v3733 = vmax.f32 %v3498, 0.0
    %v3734 = vmax.f32 %v3694, 0.0
    %v3735 = vmax.f32 %v3500, 0.0
    %v3736 = vmax.f32 %v3696, 0.0
    %v3737 = vmax.f32 %v3503, 0.0
    %v3738 = vmax.f32 %v3699, 0.0
    %v3739 = vmax.f32 %v3505, 0.0
    %v3740 = vmax.f32 %v3701, 0.0
    %v3741 = vmax.f32 %v3508, 0.0
    %v3742 = vmax.f32 %v3704, 0.0
    %v3743 = vmax.f32 %v3510, 0.0
    %v3744 = vmax.f32 %v3706, 0.0
    %v3745 = vmax.f32 %v3513, 0.0
    %v3746 = vmax.f32 %v3709, 0.0
    %v3747 = vmax.f32 %v3515, 0.0
    %v3748 = vmax.f32 %v3711, 0.0
    %v3749 = vmax.f32 %v3518, 0.0
    %v3750 = vmax.f32 %v3714, 0.0
    %v3751 = vmax.f32 %v3520, 0.0
    %v3752 = vmax.f32 %v3716, 0.0
    %v3753 = vmax.f32 %v3523, 0.0
    %v3754 = vmax.f32 %v3719, 0.0
    %v3755 = vmax.f32 %v3525, 0.0
    %v3756 = vmax.f32 %v3721, 0.0
    %v3757 = vmax.f32 %v3528, 0.0
    %v3758 = vmax.f32 %v3724, 0.0
    %v3759 = vmax.f32 %v3530, 0.0
    %v3760 = vmax.f32 %v3726, 0.0
    %v3761 = vmax.f32 %v3533, 0.0
    %v3762 = vmax.f32 %v3729, 0.0
    %v3763 = vmax.f32 %v3535, 0.0
    %v3764 = vmax.f32 %v3731, 0.0
    %v3765 = vpack.c.bf16 %v3735, %v3733
    %v3766 = vpack.c.bf16 %v3736, %v3734
    %v3767 = vpack.c.bf16 %v3739, %v3737
    %v3768 = vpack.c.bf16 %v3740, %v3738
    %v3769 = vpack.c.bf16 %v3743, %v3741
    %v3770 = vpack.c.bf16 %v3744, %v3742
    %v3771 = vpack.c.bf16 %v3747, %v3745
    %v3772 = vpack.c.bf16 %v3748, %v3746
    %v3773 = vpack.c.bf16 %v3751, %v3749
    %v3774 = vpack.c.bf16 %v3752, %v3750
    %v3775 = vpack.c.bf16 %v3755, %v3753
    %v3776 = vpack.c.bf16 %v3756, %v3754
    %v3777 = vpack.c.bf16 %v3759, %v3757
    %v3778 = vpack.c.bf16 %v3760, %v3758
    %v3779 = vpack.c.bf16 %v3763, %v3761
    %v3780 = vpack.c.bf16 %v3764, %v3762
    %v3781 = vld [vmem:[#allocation10] sm:$0xf]
    %v3782 = vld [vmem:[#allocation10 + $0x4] sm:$0xf]
    %v3783 = vld [vmem:[#allocation10 + $0x8] sm:$0xf]
    %v3784 = vld [vmem:[#allocation10 + $0xc] sm:$0xf]
    %v3785 = vld [vmem:[#allocation10 + $0x10] sm:$0xf]
    %v3786 = vld [vmem:[#allocation10 + $0x14] sm:$0xf]
    %v3787 = vld [vmem:[#allocation10 + $0x18] sm:$0xf]
    %v3788 = vld [vmem:[#allocation10 + $0x1c] sm:$0xf]
    %v3789 = vld [vmem:[#allocation10 + $0x20] sm:$0xf]
    %v3790 = vld [vmem:[#allocation10 + $0x24] sm:$0xf]
    %v3791 = vld [vmem:[#allocation10 + $0x28] sm:$0xf]
    %v3792 = vld [vmem:[#allocation10 + $0x2c] sm:$0xf]
    %v3793 = vld [vmem:[#allocation10 + $0x30] sm:$0xf]
    %v3794 = vld [vmem:[#allocation10 + $0x34] sm:$0xf]
    %v3795 = vld [vmem:[#allocation10 + $0x38] sm:$0xf]
    %v3796 = vld [vmem:[#allocation10 + $0x3c] sm:$0xf]
    %v3797 = vld [vmem:[#allocation10 + $0x40] sm:$0xf]
    %v3798 = vld [vmem:[#allocation10 + $0x44] sm:$0xf]
    %v3799 = vld [vmem:[#allocation10 + $0x48] sm:$0xf]
    %v3800 = vld [vmem:[#allocation10 + $0x4c] sm:$0xf]
    %v3801 = vld [vmem:[#allocation10 + $0x50] sm:$0xf]
    %v3802 = vld [vmem:[#allocation10 + $0x54] sm:$0xf]
    %v3803 = vld [vmem:[#allocation10 + $0x58] sm:$0xf]
    %v3804 = vld [vmem:[#allocation10 + $0x5c] sm:$0xf]
    %v3805 = vld [vmem:[#allocation10 + $0x60] sm:$0xf]
    %v3806 = vld [vmem:[#allocation10 + $0x64] sm:$0xf]
    %v3807 = vld [vmem:[#allocation10 + $0x68] sm:$0xf]
    %v3808 = vld [vmem:[#allocation10 + $0x6c] sm:$0xf]
    %v3809 = vld [vmem:[#allocation10 + $0x70] sm:$0xf]
    %v3810 = vld [vmem:[#allocation10 + $0x74] sm:$0xf]
    %v3811 = vld [vmem:[#allocation10 + $0x78] sm:$0xf]
    %v3812 = vld [vmem:[#allocation10 + $0x7c] sm:$0xf]
    %v3813 = vld [vmem:[%s6] sm:$0x1]
    %v3815 = vperm.slane %v3813, 0
    %v3849 = vunpack.c.l.b16 %v3781
    %v3850 = vunpack.c.l.b16 %v3782
    %v3851 = vunpack.c.l.b16 %v3783
    %v3852 = vunpack.c.l.b16 %v3784
    %v3853 = vunpack.c.l.b16 %v3785
    %v3854 = vunpack.c.l.b16 %v3786
    %v3855 = vunpack.c.l.b16 %v3787
    %v3856 = vunpack.c.l.b16 %v3788
    %v3857 = vunpack.c.l.b16 %v3789
    %v3858 = vunpack.c.l.b16 %v3790
    %v3859 = vunpack.c.l.b16 %v3791
    %v3860 = vunpack.c.l.b16 %v3792
    %v3861 = vunpack.c.l.b16 %v3793
    %v3862 = vunpack.c.l.b16 %v3794
    %v3863 = vunpack.c.l.b16 %v3795
    %v3864 = vunpack.c.l.b16 %v3796
    %v3865 = vunpack.c.l.b16 %v3797
    %v3866 = vunpack.c.l.b16 %v3798
    %v3867 = vunpack.c.l.b16 %v3799
    %v3868 = vunpack.c.l.b16 %v3800
    %v3869 = vunpack.c.l.b16 %v3801
    %v3870 = vunpack.c.l.b16 %v3802
    %v3871 = vunpack.c.l.b16 %v3803
    %v3872 = vunpack.c.l.b16 %v3804
    %v3873 = vunpack.c.l.b16 %v3805
    %v3874 = vunpack.c.l.b16 %v3806
    %v3875 = vunpack.c.l.b16 %v3807
    %v3876 = vunpack.c.l.b16 %v3808
    %v3877 = vunpack.c.l.b16 %v3809
    %v3878 = vunpack.c.l.b16 %v3810
    %v3879 = vunpack.c.l.b16 %v3811
    %v3880 = vunpack.c.l.b16 %v3812
    %v3881 = vpack.c.b16 %v3850, %v3849
    %v3882 = vpack.c.b16 %v3852, %v3851
    %v3883 = vpack.c.b16 %v3854, %v3853
    %v3884 = vpack.c.b16 %v3856, %v3855
    %v3885 = vpack.c.b16 %v3858, %v3857
    %v3886 = vpack.c.b16 %v3860, %v3859
    %v3887 = vpack.c.b16 %v3862, %v3861
    %v3888 = vpack.c.b16 %v3864, %v3863
    %v3889 = vpack.c.b16 %v3866, %v3865
    %v3890 = vpack.c.b16 %v3868, %v3867
    %v3891 = vpack.c.b16 %v3870, %v3869
    %v3892 = vpack.c.b16 %v3872, %v3871
    %v3893 = vpack.c.b16 %v3874, %v3873
    %v3894 = vpack.c.b16 %v3876, %v3875
    %v3895 = vpack.c.b16 %v3878, %v3877
    %v3896 = vpack.c.b16 %v3880, %v3879
    %3913 = vmatpush.bf16.msra.mxu0 %v3888
    %3914 = vmatpush.bf16.msra.mxu0 %v3887
    %3915 = vmatpush.bf16.msra.mxu0 %v3886
    %3916 = vmatpush.bf16.msra.mxu0 %v3885
    %3917 = vmatpush.bf16.msra.mxu0 %v3884
    %3918 = vmatpush.bf16.msra.mxu0 %v3883
    %3919 = vmatpush.bf16.msra.mxu0 %v3882
    %3920 = vmatpush.bf16.msra.mxu0 %v3881
    %3921 = vmatmul.bf16.gmra.mxu0 %v3765
    %v3922 = vpop.f32.mrf.mxu0
    %v3923 = vadd.f32 %v3815, %v3922
    %v3924 = vpop.f32.mrf.mxu0
    %v3925 = vadd.f32 %v3815, %v3924
    %3926 = vmatmul.bf16.gmra.mxu0 %v3767
    %v3927 = vpop.f32.mrf.mxu0
    %v3928 = vadd.f32 %v3815, %v3927
    %v3929 = vpop.f32.mrf.mxu0
    %v3930 = vadd.f32 %v3815, %v3929
    %3931 = vmatmul.bf16.gmra.mxu0 %v3769
    %v3932 = vpop.f32.mrf.mxu0
    %v3933 = vadd.f32 %v3815, %v3932
    %v3934 = vpop.f32.mrf.mxu0
    %v3935 = vadd.f32 %v3815, %v3934
    %3936 = vmatmul.bf16.gmra.mxu0 %v3771
    %v3937 = vpop.f32.mrf.mxu0
    %v3938 = vadd.f32 %v3815, %v3937
    %v3939 = vpop.f32.mrf.mxu0
    %v3940 = vadd.f32 %v3815, %v3939
    %3941 = vmatmul.bf16.gmra.mxu0 %v3773
    %v3942 = vpop.f32.mrf.mxu0
    %v3943 = vadd.f32 %v3815, %v3942
    %v3944 = vpop.f32.mrf.mxu0
    %v3945 = vadd.f32 %v3815, %v3944
    %3946 = vmatmul.bf16.gmra.mxu0 %v3775
    %v3947 = vpop.f32.mrf.mxu0
    %v3948 = vadd.f32 %v3815, %v3947
    %v3949 = vpop.f32.mrf.mxu0
    %v3950 = vadd.f32 %v3815, %v3949
    %3951 = vmatmul.bf16.gmra.mxu0 %v3777
    %v3952 = vpop.f32.mrf.mxu0
    %v3953 = vadd.f32 %v3815, %v3952
    %v3954 = vpop.f32.mrf.mxu0
    %v3955 = vadd.f32 %v3815, %v3954
    %3956 = vmatmul.bf16.gmra.mxu0 %v3779
    %v3957 = vpop.f32.mrf.mxu0
    %v3958 = vadd.f32 %v3815, %v3957
    %v3959 = vpop.f32.mrf.mxu0
    %v3960 = vadd.f32 %v3815, %v3959
    %3961 = vdwg.mxu0
    %3962 = vmatpush.bf16.msra.mxu0 %v3896
    %3963 = vmatpush.bf16.msra.mxu0 %v3895
    %3964 = vmatpush.bf16.msra.mxu0 %v3894
    %3965 = vmatpush.bf16.msra.mxu0 %v3893
    %3966 = vmatpush.bf16.msra.mxu0 %v3892
    %3967 = vmatpush.bf16.msra.mxu0 %v3891
    %3968 = vmatpush.bf16.msra.mxu0 %v3890
    %3969 = vmatpush.bf16.msra.mxu0 %v3889
    %3970 = vmatmul.bf16.gmra.mxu0 %v3766
    %v3971 = vpop.f32.mrf.mxu0
    %v3972 = vadd.f32 %v3923, %v3971
    %v3973 = vpop.f32.mrf.mxu0
    %v3974 = vadd.f32 %v3925, %v3973
    %3975 = vmatmul.bf16.gmra.mxu0 %v3768
    %v3976 = vpop.f32.mrf.mxu0
    %v3977 = vadd.f32 %v3928, %v3976
    %v3978 = vpop.f32.mrf.mxu0
    %v3979 = vadd.f32 %v3930, %v3978
    %3980 = vmatmul.bf16.gmra.mxu0 %v3770
    %v3981 = vpop.f32.mrf.mxu0
    %v3982 = vadd.f32 %v3933, %v3981
    %v3983 = vpop.f32.mrf.mxu0
    %v3984 = vadd.f32 %v3935, %v3983
    %3985 = vmatmul.bf16.gmra.mxu0 %v3772
    %v3986 = vpop.f32.mrf.mxu0
    %v3987 = vadd.f32 %v3938, %v3986
    %v3988 = vpop.f32.mrf.mxu0
    %v3989 = vadd.f32 %v3940, %v3988
    %3990 = vmatmul.bf16.gmra.mxu0 %v3774
    %v3991 = vpop.f32.mrf.mxu0
    %v3992 = vadd.f32 %v3943, %v3991
    %v3993 = vpop.f32.mrf.mxu0
    %v3994 = vadd.f32 %v3945, %v3993
    %3995 = vmatmul.bf16.gmra.mxu0 %v3776
    %v3996 = vpop.f32.mrf.mxu0
    %v3997 = vadd.f32 %v3948, %v3996
    %v3998 = vpop.f32.mrf.mxu0
    %v3999 = vadd.f32 %v3950, %v3998
    %4000 = vmatmul.bf16.gmra.mxu0 %v3778
    %v4001 = vpop.f32.mrf.mxu0
    %v4002 = vadd.f32 %v3953, %v4001
    %v4003 = vpop.f32.mrf.mxu0
    %v4004 = vadd.f32 %v3955, %v4003
    %4005 = vmatmul.bf16.gmra.mxu0 %v3780
    %v4006 = vpop.f32.mrf.mxu0
    %v4007 = vadd.f32 %v3958, %v4006
    %v4008 = vpop.f32.mrf.mxu0
    %v4009 = vadd.f32 %v3960, %v4008
    %4010 = vdwg.mxu0
    %4011 = vmax.xlane.f32.xlu0 %v3972
    %v4012 = vpop.xlane.xlu0 %4011
    %4013 = vmax.xlane.f32.xlu0 %v3974
    %v4014 = vpop.xlane.xlu0 %4013
    %4015 = vmax.xlane.f32.xlu0 %v3977
    %v4016 = vpop.xlane.xlu0 %4015
    %4017 = vmax.xlane.f32.xlu0 %v3979
    %v4018 = vpop.xlane.xlu0 %4017
    %4019 = vmax.xlane.f32.xlu0 %v3982
    %v4020 = vpop.xlane.xlu0 %4019
    %4021 = vmax.xlane.f32.xlu0 %v3984
    %v4022 = vpop.xlane.xlu0 %4021
    %4023 = vmax.xlane.f32.xlu0 %v3987
    %v4024 = vpop.xlane.xlu0 %4023
    %4025 = vmax.xlane.f32.xlu0 %v3989
    %v4026 = vpop.xlane.xlu0 %4025
    %4027 = vmax.xlane.f32.xlu0 %v3992
    %v4028 = vpop.xlane.xlu0 %4027
    %4029 = vmax.xlane.f32.xlu0 %v3994
    %v4030 = vpop.xlane.xlu0 %4029
    %4031 = vmax.xlane.f32.xlu0 %v3997
    %v4032 = vpop.xlane.xlu0 %4031
    %4033 = vmax.xlane.f32.xlu0 %v3999
    %v4034 = vpop.xlane.xlu0 %4033
    %4035 = vmax.xlane.f32.xlu0 %v4002
    %v4036 = vpop.xlane.xlu0 %4035
    %4037 = vmax.xlane.f32.xlu0 %v4004
    %v4038 = vpop.xlane.xlu0 %4037
    %4039 = vmax.xlane.f32.xlu0 %v4007
    %v4040 = vpop.xlane.xlu0 %4039
    %4041 = vmax.xlane.f32.xlu0 %v4009
    %v4042 = vpop.xlane.xlu0 %4041
    %v4043 = vsub.f32 %v3972, %v4012
    %v4044 = vsub.f32 %v3974, %v4014
    %v4045 = vsub.f32 %v3977, %v4016
    %v4046 = vsub.f32 %v3979, %v4018
    %v4047 = vsub.f32 %v3982, %v4020
    %v4048 = vsub.f32 %v3984, %v4022
    %v4049 = vsub.f32 %v3987, %v4024
    %v4050 = vsub.f32 %v3989, %v4026
    %v4051 = vsub.f32 %v3992, %v4028
    %v4052 = vsub.f32 %v3994, %v4030
    %v4053 = vsub.f32 %v3997, %v4032
    %v4054 = vsub.f32 %v3999, %v4034
    %v4055 = vsub.f32 %v4002, %v4036
    %v4056 = vsub.f32 %v4004, %v4038
    %v4057 = vsub.f32 %v4007, %v4040
    %v4058 = vsub.f32 %v4009, %v4042
    %v4059 = vmul.f32 %v4043, 1.442695
    %v4060 = vpow.pop %v4059
    %v4061 = vmul.f32 %v4044, 1.442695
    %v4062 = vpow.pop %v4061
    %v4063 = vmul.f32 %v4045, 1.442695
    %v4064 = vpow.pop %v4063
    %v4065 = vmul.f32 %v4046, 1.442695
    %v4066 = vpow.pop %v4065
    %v4067 = vmul.f32 %v4047, 1.442695
    %v4068 = vpow.pop %v4067
    %v4069 = vmul.f32 %v4048, 1.442695
    %v4070 = vpow.pop %v4069
    %v4071 = vmul.f32 %v4049, 1.442695
    %v4072 = vpow.pop %v4071
    %v4073 = vmul.f32 %v4050, 1.442695
    %v4074 = vpow.pop %v4073
    %v4075 = vmul.f32 %v4051, 1.442695
    %v4076 = vpow.pop %v4075
    %v4077 = vmul.f32 %v4052, 1.442695
    %v4078 = vpow.pop %v4077
    %v4079 = vmul.f32 %v4053, 1.442695
    %v4080 = vpow.pop %v4079
    %v4081 = vmul.f32 %v4054, 1.442695
    %v4082 = vpow.pop %v4081
    %v4083 = vmul.f32 %v4055, 1.442695
    %v4084 = vpow.pop %v4083
    %v4085 = vmul.f32 %v4056, 1.442695
    %v4086 = vpow.pop %v4085
    %v4087 = vmul.f32 %v4057, 1.442695
    %v4088 = vpow.pop %v4087
    %v4089 = vmul.f32 %v4058, 1.442695
    %v4090 = vpow.pop %v4089
    %4091 = vadd.xlane.f32.xlu0 %v4060
    %v4092 = vpop.xlane.xlu0 %4091
    %4093 = vadd.xlane.f32.xlu0 %v4062
    %v4094 = vpop.xlane.xlu0 %4093
    %4095 = vadd.xlane.f32.xlu0 %v4064
    %v4096 = vpop.xlane.xlu0 %4095
    %4097 = vadd.xlane.f32.xlu0 %v4066
    %v4098 = vpop.xlane.xlu0 %4097
    %4099 = vadd.xlane.f32.xlu0 %v4068
    %v4100 = vpop.xlane.xlu0 %4099
    %4101 = vadd.xlane.f32.xlu0 %v4070
    %v4102 = vpop.xlane.xlu0 %4101
    %4103 = vadd.xlane.f32.xlu0 %v4072
    %v4104 = vpop.xlane.xlu0 %4103
    %4105 = vadd.xlane.f32.xlu0 %v4074
    %v4106 = vpop.xlane.xlu0 %4105
    %4107 = vadd.xlane.f32.xlu0 %v4076
    %v4108 = vpop.xlane.xlu0 %4107
    %4109 = vadd.xlane.f32.xlu0 %v4078
    %v4110 = vpop.xlane.xlu0 %4109
    %4111 = vadd.xlane.f32.xlu0 %v4080
    %v4112 = vpop.xlane.xlu0 %4111
    %4113 = vadd.xlane.f32.xlu0 %v4082
    %v4114 = vpop.xlane.xlu0 %4113
    %4115 = vadd.xlane.f32.xlu0 %v4084
    %v4116 = vpop.xlane.xlu0 %4115
    %4117 = vadd.xlane.f32.xlu0 %v4086
    %v4118 = vpop.xlane.xlu0 %4117
    %4119 = vadd.xlane.f32.xlu0 %v4088
    %v4120 = vpop.xlane.xlu0 %4119
    %4121 = vadd.xlane.f32.xlu0 %v4090
    %v4122 = vpop.xlane.xlu0 %4121
    %v4123 = vlog2.pop %v4092
    %v4124 = vmul.f32 %v4123, 0.6931472
    %v4125 = vlog2.pop %v4094
    %v4126 = vmul.f32 %v4125, 0.6931472
    %v4127 = vlog2.pop %v4096
    %v4128 = vmul.f32 %v4127, 0.6931472
    %v4129 = vlog2.pop %v4098
    %v4130 = vmul.f32 %v4129, 0.6931472
    %v4131 = vlog2.pop %v4100
    %v4132 = vmul.f32 %v4131, 0.6931472
    %v4133 = vlog2.pop %v4102
    %v4134 = vmul.f32 %v4133, 0.6931472
    %v4135 = vlog2.pop %v4104
    %v4136 = vmul.f32 %v4135, 0.6931472
    %v4137 = vlog2.pop %v4106
    %v4138 = vmul.f32 %v4137, 0.6931472
    %v4139 = vlog2.pop %v4108
    %v4140 = vmul.f32 %v4139, 0.6931472
    %v4141 = vlog2.pop %v4110
    %v4142 = vmul.f32 %v4141, 0.6931472
    %v4143 = vlog2.pop %v4112
    %v4144 = vmul.f32 %v4143, 0.6931472
    %v4145 = vlog2.pop %v4114
    %v4146 = vmul.f32 %v4145, 0.6931472
    %v4147 = vlog2.pop %v4116
    %v4148 = vmul.f32 %v4147, 0.6931472
    %v4149 = vlog2.pop %v4118
    %v4150 = vmul.f32 %v4149, 0.6931472
    %v4151 = vlog2.pop %v4120
    %v4152 = vmul.f32 %v4151, 0.6931472
    %v4153 = vlog2.pop %v4122
    %v4154 = vmul.f32 %v4153, 0.6931472
    %v4155 = vsub.f32 %v4043, %v4124
    %v4156 = vsub.f32 %v4044, %v4126
    %v4157 = vsub.f32 %v4045, %v4128
    %v4158 = vsub.f32 %v4046, %v4130
    %v4159 = vsub.f32 %v4047, %v4132
    %v4160 = vsub.f32 %v4048, %v4134
    %v4161 = vsub.f32 %v4049, %v4136
    %v4162 = vsub.f32 %v4050, %v4138
    %v4163 = vsub.f32 %v4051, %v4140
    %v4164 = vsub.f32 %v4052, %v4142
    %v4165 = vsub.f32 %v4053, %v4144
    %v4166 = vsub.f32 %v4054, %v4146
    %v4167 = vsub.f32 %v4055, %v4148
    %v4168 = vsub.f32 %v4056, %v4150
    %v4169 = vsub.f32 %v4057, %v4152
    %v4170 = vsub.f32 %v4058, %v4154
    %4171 = vst [vmem:[#allocation11] sm:$0xff] %v4155
    %4172 = vst [vmem:[#allocation11 + $0x8] sm:$0xff] %v4156
    %4173 = vst [vmem:[#allocation11 + $0x10] sm:$0xff] %v4157
    %4174 = vst [vmem:[#allocation11 + $0x18] sm:$0xff] %v4158
    %4175 = vst [vmem:[#allocation11 + $0x20] sm:$0xff] %v4159
    %4176 = vst [vmem:[#allocation11 + $0x28] sm:$0xff] %v4160
    %4177 = vst [vmem:[#allocation11 + $0x30] sm:$0xff] %v4161
    %4178 = vst [vmem:[#allocation11 + $0x38] sm:$0xff] %v4162
    %4179 = vst [vmem:[#allocation11 + $0x40] sm:$0xff] %v4163
    %4180 = vst [vmem:[#allocation11 + $0x48] sm:$0xff] %v4164
    %4181 = vst [vmem:[#allocation11 + $0x50] sm:$0xff] %v4165
    %4182 = vst [vmem:[#allocation11 + $0x58] sm:$0xff] %v4166
    %4183 = vst [vmem:[#allocation11 + $0x60] sm:$0xff] %v4167
    %4184 = vst [vmem:[#allocation11 + $0x68] sm:$0xff] %v4168
    %4185 = vst [vmem:[#allocation11 + $0x70] sm:$0xff] %v4169
    %4186 = vst [vmem:[#allocation11 + $0x78] sm:$0xff] %v4170
    // Predicated region
    $region50: #{tpu_custom_call.1} parent=1 // pred_check
      _
    $region51: #{tpu_custom_call.1} parent=1 // pred_check_branch
      %4188 = sbr.rel (0) target = $region53
    $region52: #{tpu_custom_call.1} parent=1 // pred_region
      %4190 = vsyncadd [#allocation4], 1920
      %s4191 = sshll.u32 [#allocation11], 4
      %s4192 = int_to_ptr.vmem [resolvable:$true] %s4191
      %s4193 = sshll.u32 %s7, 4
      %s4194 = int_to_ptr.hbm [resolvable:$true] %s4193
      %4199 = dma.vmem_to_hbm [thread:$0]  %s4192, 128, %s4194, [#allocation4], 128, 128, 8
    $region53: #{tpu_custom_call.1} parent=1 // pred_fallthru
      _
    // Predicated region
    $region54: #{tpu_custom_call.1} parent=1 // pred_check
      _
    $region55: #{tpu_custom_call.1} parent=1 // pred_check_branch
      %4201 = sbr.rel (0) target = $region57
    $region56: #{tpu_custom_call.1} parent=1 // pred_region
      %4203 = dma.done [#allocation4], 2048
    $region57: #{tpu_custom_call.1} parent=1 // pred_fallthru
      _
    %4204 = vsyncpa [#allocation3], 1
    %4205 = vsyncpa [#allocation6], 1
    %4206 = vsyncpa [#allocation9], 1
    %4207 = vsyncpa [#allocation4], 1

</llo_original>
